<compile_context>
chip_gen: v5e
topology: v5e:2x2
jax: 0.10.0
libtpu: 0.0.40
codegen_flags: <defaults>
</compile_context>

<pallas_src>
import functools
import math

import jax
import jax.numpy as jnp
from jax.experimental import pallas as pl
from jax.experimental.pallas import tpu as pltpu


# ---------------------------------------------------------------------------
# In-kernel helpers (pure jnp / ref ops, traced inside the Pallas body)
# ---------------------------------------------------------------------------

def _layer_norm(y, g, b, eps):
    """PyTorch LayerNorm: biased variance, gamma/beta, eps inside rsqrt."""
    mu = jnp.mean(y, axis=-1, keepdims=True)
    var = jnp.mean((y - mu) ** 2, axis=-1, keepdims=True)
    return (y - mu) * jax.lax.rsqrt(var + eps) * g + b


def _attention_heads(q_scaled, kv_ref, attn_ref, nhead, dh):
    """Multi-head attention without head transposes.

    q_scaled: (Tq, D) f32, already multiplied by 1/sqrt(dh).
    kv_ref:   (Tk, 2D) bf16 VMEM scratch holding packed [K | V] projections.
    attn_ref: (Tq, D) f32 VMEM scratch; per-head outputs are written into its
              column (lane) slices -> no (T,H,dh)<->(H,T,dh) relayouts.
    """
    D = nhead * dh
    for h in range(nhead):                       # static unrolled head loop
        qh = q_scaled[:, h * dh:(h + 1) * dh].astype(jnp.bfloat16)
        kh = kv_ref[:, h * dh:(h + 1) * dh]                  # (Tk, dh) bf16
        vh = kv_ref[:, D + h * dh:D + (h + 1) * dh]          # (Tk, dh) bf16
        # scores = qh @ kh^T  (contract the head dim of both operands)
        s = jax.lax.dot_general(qh, kh, (((1,), (1,)), ((), ())),
                                preferred_element_type=jnp.float32)
        s = s - jnp.max(s, axis=-1, keepdims=True)
        p = jnp.exp(s)
        # exact reciprocal (approx=True would perturb beyond test tolerance)
        p = p * pl.reciprocal(jnp.sum(p, axis=-1, keepdims=True), approx=False)
        attn_ref[:, h * dh:(h + 1) * dh] = jnp.dot(
            p.astype(jnp.bfloat16), vh, preferred_element_type=jnp.float32)


# ---------------------------------------------------------------------------
# Fused decoder-layer kernel.  grid = (batch, T // tq)
# ---------------------------------------------------------------------------

def _decoder_layer_kernel(
        x_ref, xfull_ref, mem_ref,
        sa_wq_ref, sa_bq_ref, sa_wkv_ref, sa_bkv_ref, sa_wo_ref, sa_bo_ref,
        ca_wq_ref, ca_bq_ref, ca_wkv_ref, ca_bkv_ref, ca_wo_ref, ca_bo_ref,
        ff_w1_ref, ff_b1_ref, ff_w2_ref, ff_b2_ref,
        ln1_g_ref, ln1_b_ref, ln2_g_ref, ln2_b_ref, ln3_g_ref, ln3_b_ref,
        fn_g_ref, fn_b_ref,
        out_ref,
        sa_kv_ref, ca_kv_ref, attn_ref,
        *, nhead, eps, apply_final_norm):
    D = x_ref.shape[-1]
    dh = D // nhead
    scale = 1.0 / math.sqrt(dh)
    t = pl.program_id(1)

    # K/V projections depend only on the batch element, not the q-row tile:
    # compute once per batch (t == 0) into bf16 VMEM scratch and reuse.
    @pl.when(t == 0)
    def _():
        xf = xfull_ref[0].astype(jnp.bfloat16)          # (T, D)
        sa_kv_ref[...] = (jnp.dot(xf, sa_wkv_ref[...],
                                  preferred_element_type=jnp.float32)
                          + sa_bkv_ref[...]).astype(jnp.bfloat16)
        mf = mem_ref[0].astype(jnp.bfloat16)            # (S, D)
        ca_kv_ref[...] = (jnp.dot(mf, ca_wkv_ref[...],
                                  preferred_element_type=jnp.float32)
                          + ca_bkv_ref[...]).astype(jnp.bfloat16)

    x = x_ref[0].astype(jnp.float32)                    # (tq, D)

    # ---- self attention + add & LN1 ----
    q = jnp.dot(x.astype(jnp.bfloat16), sa_wq_ref[...],
                preferred_element_type=jnp.float32) + sa_bq_ref[...]
    _attention_heads(q * scale, sa_kv_ref, attn_ref, nhead, dh)
    sa = jnp.dot(attn_ref[...].astype(jnp.bfloat16), sa_wo_ref[...],
                 preferred_element_type=jnp.float32) + sa_bo_ref[...]
    x = _layer_norm(x + sa, ln1_g_ref[...], ln1_b_ref[...], eps)

    # ---- cross attention + add & LN2 ----
    q = jnp.dot(x.astype(jnp.bfloat16), ca_wq_ref[...],
                preferred_element_type=jnp.float32) + ca_bq_ref[...]
    _attention_heads(q * scale, ca_kv_ref, attn_ref, nhead, dh)
    ca = jnp.dot(attn_ref[...].astype(jnp.bfloat16), ca_wo_ref[...],
                 preferred_element_type=jnp.float32) + ca_bo_ref[...]
    x = _layer_norm(x + ca, ln2_g_ref[...], ln2_b_ref[...], eps)

    # ---- feed forward (relu) + add & LN3 ----
    h = jnp.dot(x.astype(jnp.bfloat16), ff_w1_ref[...],
                preferred_element_type=jnp.float32) + ff_b1_ref[...]
    h = jnp.maximum(h, 0.0)
    ff = jnp.dot(h.astype(jnp.bfloat16), ff_w2_ref[...],
                 preferred_element_type=jnp.float32) + ff_b2_ref[...]
    x = _layer_norm(x + ff, ln3_g_ref[...], ln3_b_ref[...], eps)

    # ---- fused decoder-level final LayerNorm (last layer only) ----
    if apply_final_norm:
        x = _layer_norm(x, fn_g_ref[...], fn_b_ref[...], eps)

    out_ref[0] = x.astype(out_ref.dtype)


def decoder_layer(x_btd, mem_btd, p, nhead, *, final_norm=None, q_block=128,
                  eps=1e-5, vmem_limit_bytes=48 * 1024 * 1024):
    """x_btd: (B, T, D), mem_btd: (B, S, D) -> (B, T, D). One fused kernel."""
    B, T, D = x_btd.shape
    S = mem_btd.shape[1]
    F = p["ff_w1"].shape[1]
    # q-row tile (128 matches v5e MXU height; 256 is fine on v6e/v7x).
    tq = q_block if (q_block <= T and T % q_block == 0) else T
    nt = T // tq

    apply_final_norm = final_norm is not None
    if apply_final_norm:
        fn_g, fn_b = final_norm
    else:
        fn_g = jnp.ones((1, D), jnp.float32)
        fn_b = jnp.zeros((1, D), jnp.float32)

    def const(shape):
        # Grid-invariant weight/bias block: fetched once, single-buffered
        # (no dead double-buffer copy competing for VMEM).
        return pl.BlockSpec(shape, lambda b, t: (0, 0),
                            pipeline_mode=pl.Buffered(1))

    kernel = functools.partial(_decoder_layer_kernel, nhead=nhead, eps=eps,
                               apply_final_norm=apply_final_norm)

    return pl.pallas_call(
        kernel,
        out_shape=jax.ShapeDtypeStruct((B, T, D), x_btd.dtype),
        grid=(B, nt),
        in_specs=[
            pl.BlockSpec((1, tq, D), lambda b, t: (b, t, 0)),   # q-row tile
            pl.BlockSpec((1, T, D), lambda b, t: (b, 0, 0)),    # full tgt (self K/V)
            pl.BlockSpec((1, S, D), lambda b, t: (b, 0, 0)),    # full memory
            const((D, D)), const((1, D)),                       # sa_wq, sa_bq
            const((D, 2 * D)), const((1, 2 * D)),               # sa_wkv, sa_bkv
            const((D, D)), const((1, D)),                       # sa_wo, sa_bo
            const((D, D)), const((1, D)),                       # ca_wq, ca_bq
            const((D, 2 * D)), const((1, 2 * D)),               # ca_wkv, ca_bkv
            const((D, D)), const((1, D)),                       # ca_wo, ca_bo
            const((D, F)), const((1, F)),                       # ff_w1, ff_b1
            const((F, D)), const((1, D)),                       # ff_w2, ff_b2
            const((1, D)), const((1, D)),                       # ln1
            const((1, D)), const((1, D)),                       # ln2
            const((1, D)), const((1, D)),                       # ln3
            const((1, D)), const((1, D)),                       # final norm
        ],
        out_specs=pl.BlockSpec((1, tq, D), lambda b, t: (b, t, 0)),
        scratch_shapes=[
            pltpu.VMEM((T, 2 * D), jnp.bfloat16),   # self-attn packed K/V
            pltpu.VMEM((S, 2 * D), jnp.bfloat16),   # cross-attn packed K/V
            pltpu.VMEM((tq, D), jnp.float32),       # per-head attention output
        ],
        compiler_params=pltpu.CompilerParams(
            dimension_semantics=("parallel", "arbitrary"),
            vmem_limit_bytes=vmem_limit_bytes),
    )(x_btd, x_btd, mem_btd,
      p["sa_wq"], p["sa_bq"], p["sa_wkv"], p["sa_bkv"], p["sa_wo"], p["sa_bo"],
      p["ca_wq"], p["ca_bq"], p["ca_wkv"], p["ca_bkv"], p["ca_wo"], p["ca_bo"],
      p["ff_w1"], p["ff_b1"], p["ff_w2"], p["ff_b2"],
      p["ln1_g"], p["ln1_b"], p["ln2_g"], p["ln2_b"], p["ln3_g"], p["ln3_b"],
      fn_g, fn_b)


# ---------------------------------------------------------------------------
# Full decoder forward (PyTorch seq-first layout at the boundary)
# ---------------------------------------------------------------------------

def transformer_decoder_forward(tgt, memory, layer_params, final_norm, nhead,
                                q_block=128):
    """tgt: (T, B, D), memory: (S, B, D) -> (T, B, D)."""
    x = jnp.transpose(tgt, (1, 0, 2))        # (B, T, D)
    mem = jnp.transpose(memory, (1, 0, 2))   # (B, S, D)
    n = len(layer_params)
    for i, p in enumerate(layer_params):
        fn = final_norm if (i == n - 1) else None   # fused into last layer
        x = decoder_layer(x, mem, p, nhead, final_norm=fn, q_block=q_block)
    return jnp.transpose(x, (1, 0, 2))       # back to (T, B, D)


# ---------------------------------------------------------------------------
# Pure-JAX f32 reference (for correctness check; same bf16-stored weights)
# ---------------------------------------------------------------------------

def _ref_mha(xq, xkv, wq, bq, wkv, bkv, wo, bo, nhead):
    B, Tq, D = xq.shape
    dh = D // nhead
    wq, wkv, wo = (w.astype(jnp.float32) for w in (wq, wkv, wo))
    q = (xq @ wq + bq).reshape(B, Tq, nhead, dh).transpose(0, 2, 1, 3)
    kv = xkv @ wkv + bkv
    k = kv[..., :D].reshape(B, -1, nhead, dh).transpose(0, 2, 1, 3)
    v = kv[..., D:].reshape(B, -1, nhead, dh).transpose(0, 2, 1, 3)
    s = jnp.einsum("bhqd,bhkd->bhqk", q, k) / math.sqrt(dh)
    p = jax.nn.softmax(s, axis=-1)
    o = jnp.einsum("bhqk,bhkd->bhqd", p, v).transpose(0, 2, 1, 3).reshape(B, Tq, D)
    return o @ wo + bo


def _ref_ln(y, g, b, eps=1e-5):
    mu = jnp.mean(y, axis=-1, keepdims=True)
    var = jnp.mean((y - mu) ** 2, axis=-1, keepdims=True)
    return (y - mu) / jnp.sqrt(var + eps) * g + b


def _ref_decoder(tgt, memory, layer_params, final_norm, nhead):
    x = jnp.transpose(tgt, (1, 0, 2))
    mem = jnp.transpose(memory, (1, 0, 2))
    for p in layer_params:
        sa = _ref_mha(x, x, p["sa_wq"], p["sa_bq"], p["sa_wkv"], p["sa_bkv"],
                      p["sa_wo"], p["sa_bo"], nhead)
        x = _ref_ln(x + sa, p["ln1_g"], p["ln1_b"])
        ca = _ref_mha(x, mem, p["ca_wq"], p["ca_bq"], p["ca_wkv"], p["ca_bkv"],
                      p["ca_wo"], p["ca_bo"], nhead)
        x = _ref_ln(x + ca, p["ln2_g"], p["ln2_b"])
        w1 = p["ff_w1"].astype(jnp.float32)
        w2 = p["ff_w2"].astype(jnp.float32)
        ff = jnp.maximum(x @ w1 + p["ff_b1"], 0.0) @ w2 + p["ff_b2"]
        x = _ref_ln(x + ff, p["ln3_g"], p["ln3_b"])
    if final_norm is not None:
        g, b = final_norm
        x = _ref_ln(x, g, b)
    return jnp.transpose(x, (1, 0, 2))


# ---------------------------------------------------------------------------
# Parameter construction (bf16 matmul weights, f32 biases / LN params)
# ---------------------------------------------------------------------------

def make_layer_params(key, d_model, dim_ff):
    ks = jax.random.split(key, 8)
    s = 0.05
    D, F = d_model, dim_ff

    def w(k, shape):                    # bf16 MXU weight
        return (s * jax.random.normal(k, shape, jnp.float32)).astype(jnp.bfloat16)

    def b(k, shape):                    # small f32 bias
        return (s * jax.random.normal(k, shape, jnp.float32))

    return {
        # self-attention: Q separate, packed (D, 2D) K/V
        "sa_wq": w(ks[0], (D, D)), "sa_bq": b(ks[1], (1, D)),
        "sa_wkv": w(ks[2], (D, 2 * D)), "sa_bkv": b(ks[3], (1, 2 * D)),
        "sa_wo": w(ks[4], (D, D)), "sa_bo": jnp.zeros((1, D), jnp.float32),
        # cross-attention: Q separate, packed (D, 2D) K/V
        "ca_wq": w(ks[5], (D, D)), "ca_bq": jnp.zeros((1, D), jnp.float32),
        "ca_wkv": w(ks[6], (D, 2 * D)), "ca_bkv": jnp.zeros((1, 2 * D), jnp.float32),
        "ca_wo": w(ks[7], (D, D)), "ca_bo": jnp.zeros((1, D), jnp.float32),
        # feed-forward
        "ff_w1": w(ks[0], (D, F)), "ff_b1": jnp.zeros((1, F), jnp.float32),
        "ff_w2": w(ks[1], (F, D)), "ff_b2": jnp.zeros((1, D), jnp.float32),
        # layer norms
        "ln1_g": jnp.ones((1, D), jnp.float32), "ln1_b": jnp.zeros((1, D), jnp.float32),
        "ln2_g": jnp.ones((1, D), jnp.float32), "ln2_b": jnp.zeros((1, D), jnp.float32),
        "ln3_g": jnp.ones((1, D), jnp.float32), "ln3_b": jnp.zeros((1, D), jnp.float32),
    }


# ---------------------------------------------------------------------------

if __name__ == "__main__":
    # d_model=128 keeps the output BlockSpec lane-dense (last dim % 128 == 0).
    d_model, nhead, dim_ff = 128, 4, 256
    num_layers = 2
    T, S, B = 16, 8, 2          # tgt seq len, memory seq len, batch
    q_block = 8                 # exercise the T-row tile axis: grid = (B, 2)

    key = jax.random.PRNGKey(0)
    k_tgt, k_mem, k_par = jax.random.split(key, 3)

    tgt = jax.random.normal(k_tgt, (T, B, d_model), jnp.float32)
    memory = jax.random.normal(k_mem, (S, B, d_model), jnp.float32)

    # _get_clones deep-copies one layer -> all N layers share identical
    # initial weights; replicate that by reusing the same param set.
    base_params = make_layer_params(k_par, d_model, dim_ff)
    layer_params = [base_params for _ in range(num_layers)]
    final_norm = (jnp.ones((1, d_model), jnp.float32),
                  jnp.zeros((1, d_model), jnp.float32))

    out = transformer_decoder_forward(tgt, memory, layer_params, final_norm,
                                      nhead, q_block=q_block)
    out = jax.block_until_ready(out)

    ref = _ref_decoder(tgt, memory, layer_params, final_norm, nhead)
    assert out.shape == (T, B, d_model)
    max_err = float(jnp.max(jnp.abs(out - ref)))
    # bf16 MXU operands (kernel) vs f32 reference -> tolerance reflects bf16
    # activation rounding only (weights are bf16 in both paths).
    assert max_err < 5e-2, f"mismatch vs reference: max abs err {max_err}"

    print("KERNEL_OK")
</pallas_src>

<mosaic_0001>
module attributes {stable_mosaic.version = 11 : i64} {
  func.func @_decoder_layer_kernel(%arg0: i32, %arg1: i32, %arg2: memref<1x8x128xf32, #tpu.memory_space<vmem>>, %arg3: memref<1x16x128xf32, #tpu.memory_space<vmem>>, %arg4: memref<1x8x128xf32, #tpu.memory_space<vmem>>, %arg5: memref<128x128xbf16, #tpu.memory_space<vmem>>, %arg6: memref<1x128xf32, #tpu.memory_space<vmem>>, %arg7: memref<128x256xbf16, #tpu.memory_space<vmem>>, %arg8: memref<1x256xf32, #tpu.memory_space<vmem>>, %arg9: memref<128x128xbf16, #tpu.memory_space<vmem>>, %arg10: memref<1x128xf32, #tpu.memory_space<vmem>>, %arg11: memref<128x128xbf16, #tpu.memory_space<vmem>>, %arg12: memref<1x128xf32, #tpu.memory_space<vmem>>, %arg13: memref<128x256xbf16, #tpu.memory_space<vmem>>, %arg14: memref<1x256xf32, #tpu.memory_space<vmem>>, %arg15: memref<128x128xbf16, #tpu.memory_space<vmem>>, %arg16: memref<1x128xf32, #tpu.memory_space<vmem>>, %arg17: memref<128x256xbf16, #tpu.memory_space<vmem>>, %arg18: memref<1x256xf32, #tpu.memory_space<vmem>>, %arg19: memref<256x128xbf16, #tpu.memory_space<vmem>>, %arg20: memref<1x128xf32, #tpu.memory_space<vmem>>, %arg21: memref<1x128xf32, #tpu.memory_space<vmem>>, %arg22: memref<1x128xf32, #tpu.memory_space<vmem>>, %arg23: memref<1x128xf32, #tpu.memory_space<vmem>>, %arg24: memref<1x128xf32, #tpu.memory_space<vmem>>, %arg25: memref<1x128xf32, #tpu.memory_space<vmem>>, %arg26: memref<1x128xf32, #tpu.memory_space<vmem>>, %arg27: memref<1x128xf32, #tpu.memory_space<vmem>>, %arg28: memref<1x128xf32, #tpu.memory_space<vmem>>, %arg29: memref<1x8x128xf32, #tpu.memory_space<vmem>>, %arg30: memref<16x256xbf16, #tpu.memory_space<vmem>>, %arg31: memref<8x256xbf16, #tpu.memory_space<vmem>>, %arg32: memref<8x128xf32, #tpu.memory_space<vmem>>) attributes {dimension_semantics = [#tpu.dimension_semantics<parallel>, #tpu.dimension_semantics<arbitrary>], iteration_bounds = array<i64: 2, 2>, scalar_prefetch = 0 : i64, scratch_operands = 3 : i64, tpu.core_type = #tpu.core_type<tc>, window_params = [{transform_indices = @transform_0, window_bounds = array<i64: 1, 8, 128>}, {transform_indices = @transform_1, window_bounds = array<i64: 1, 16, 128>}, {transform_indices = @transform_2, window_bounds = array<i64: 1, 8, 128>}, {pipeline_mode = #tpu.pipeline_mode<synchronous>, transform_indices = @transform_3, window_bounds = array<i64: 128, 128>}, {pipeline_mode = #tpu.pipeline_mode<synchronous>, transform_indices = @transform_4, window_bounds = array<i64: 1, 128>}, {pipeline_mode = #tpu.pipeline_mode<synchronous>, transform_indices = @transform_5, window_bounds = array<i64: 128, 256>}, {pipeline_mode = #tpu.pipeline_mode<synchronous>, transform_indices = @transform_6, window_bounds = array<i64: 1, 256>}, {pipeline_mode = #tpu.pipeline_mode<synchronous>, transform_indices = @transform_7, window_bounds = array<i64: 128, 128>}, {pipeline_mode = #tpu.pipeline_mode<synchronous>, transform_indices = @transform_8, window_bounds = array<i64: 1, 128>}, {pipeline_mode = #tpu.pipeline_mode<synchronous>, transform_indices = @transform_9, window_bounds = array<i64: 128, 128>}, {pipeline_mode = #tpu.pipeline_mode<synchronous>, transform_indices = @transform_10, window_bounds = array<i64: 1, 128>}, {pipeline_mode = #tpu.pipeline_mode<synchronous>, transform_indices = @transform_11, window_bounds = array<i64: 128, 256>}, {pipeline_mode = #tpu.pipeline_mode<synchronous>, transform_indices = @transform_12, window_bounds = array<i64: 1, 256>}, {pipeline_mode = #tpu.pipeline_mode<synchronous>, transform_indices = @transform_13, window_bounds = array<i64: 128, 128>}, {pipeline_mode = #tpu.pipeline_mode<synchronous>, transform_indices = @transform_14, window_bounds = array<i64: 1, 128>}, {pipeline_mode = #tpu.pipeline_mode<synchronous>, transform_indices = @transform_15, window_bounds = array<i64: 128, 256>}, {pipeline_mode = #tpu.pipeline_mode<synchronous>, transform_indices = @transform_16, window_bounds = array<i64: 1, 256>}, {pipeline_mode = #tpu.pipeline_mode<synchronous>, transform_indices = @transform_17, window_bounds = array<i64: 256, 128>}, {pipeline_mode = #tpu.pipeline_mode<synchronous>, transform_indices = @transform_18, window_bounds = array<i64: 1, 128>}, {pipeline_mode = #tpu.pipeline_mode<synchronous>, transform_indices = @transform_19, window_bounds = array<i64: 1, 128>}, {pipeline_mode = #tpu.pipeline_mode<synchronous>, transform_indices = @transform_20, window_bounds = array<i64: 1, 128>}, {pipeline_mode = #tpu.pipeline_mode<synchronous>, transform_indices = @transform_21, window_bounds = array<i64: 1, 128>}, {pipeline_mode = #tpu.pipeline_mode<synchronous>, transform_indices = @transform_22, window_bounds = array<i64: 1, 128>}, {pipeline_mode = #tpu.pipeline_mode<synchronous>, transform_indices = @transform_23, window_bounds = array<i64: 1, 128>}, {pipeline_mode = #tpu.pipeline_mode<synchronous>, transform_indices = @transform_24, window_bounds = array<i64: 1, 128>}, {pipeline_mode = #tpu.pipeline_mode<synchronous>, transform_indices = @transform_25, window_bounds = array<i64: 1, 128>}, {pipeline_mode = #tpu.pipeline_mode<synchronous>, transform_indices = @transform_26, window_bounds = array<i64: 1, 128>}, {transform_indices = @transform_27, window_bounds = array<i64: 1, 8, 128>}]} {
    %c0_i32 = arith.constant 0 : i32
    %0 = arith.cmpi eq, %arg1, %c0_i32 : i32
    %1 = arith.extui %0 : i1 to i32
    %c0_i32_0 = arith.constant 0 : i32
    %2 = arith.cmpi ne, %1, %c0_i32_0 : i32
    scf.if %2 {
      %c0_142 = arith.constant 0 : index
      %c0_143 = arith.constant 0 : index
      %c0_144 = arith.constant 0 : index
      %271 = vector.load %arg3[%c0_142, %c0_143, %c0_144] : memref<1x16x128xf32, #tpu.memory_space<vmem>>, vector<1x16x128xf32>
      %272 = vector.shape_cast %271 : vector<1x16x128xf32> to vector<16x128xf32>
      %273 = arith.truncf %272 : vector<16x128xf32> to vector<16x128xbf16>
      %c0_145 = arith.constant 0 : index
      %c0_146 = arith.constant 0 : index
      %274 = vector.load %arg7[%c0_145, %c0_146] : memref<128x256xbf16, #tpu.memory_space<vmem>>, vector<128x256xbf16>
      %cst_147 = arith.constant dense<0.000000e+00> : vector<16x256xf32>
      %275 = tpu.matmul %273, %274, %cst_147 {dimension_numbers = #tpu.dot_dimension_numbers<[1], [0], [0], [1], [0, 0, 1, 1], [], []>} : vector<16x128xbf16>, vector<128x256xbf16>, vector<16x256xf32> -> vector<16x256xf32>
      %c0_148 = arith.constant 0 : index
      %c0_149 = arith.constant 0 : index
      %276 = vector.load %arg8[%c0_148, %c0_149] : memref<1x256xf32, #tpu.memory_space<vmem>>, vector<1x256xf32>
      %277 = vector.broadcast %276 : vector<1x256xf32> to vector<16x256xf32>
      %278 = arith.addf %275, %277 : vector<16x256xf32>
      %279 = arith.truncf %278 : vector<16x256xf32> to vector<16x256xbf16>
      %c0_150 = arith.constant 0 : index
      %c0_151 = arith.constant 0 : index
      %280 = vector.load %arg30[%c0_150, %c0_151] : memref<16x256xbf16, #tpu.memory_space<vmem>>, vector<16x256xbf16>
      tpu.vector_store %arg30[%c0_150, %c0_151], %279 {strides = array<i32>} : memref<16x256xbf16, #tpu.memory_space<vmem>>, vector<16x256xbf16>,
      %c0_152 = arith.constant 0 : index
      %c0_153 = arith.constant 0 : index
      %c0_154 = arith.constant 0 : index
      %281 = vector.load %arg4[%c0_152, %c0_153, %c0_154] : memref<1x8x128xf32, #tpu.memory_space<vmem>>, vector<1x8x128xf32>
      %282 = vector.shape_cast %281 : vector<1x8x128xf32> to vector<8x128xf32>
      %283 = arith.truncf %282 : vector<8x128xf32> to vector<8x128xbf16>
      %c0_155 = arith.constant 0 : index
      %c0_156 = arith.constant 0 : index
      %284 = vector.load %arg13[%c0_155, %c0_156] : memref<128x256xbf16, #tpu.memory_space<vmem>>, vector<128x256xbf16>
      %cst_157 = arith.constant dense<0.000000e+00> : vector<8x256xf32>
      %285 = tpu.matmul %283, %284, %cst_157 {dimension_numbers = #tpu.dot_dimension_numbers<[1], [0], [0], [1], [0, 0, 1, 1], [], []>} : vector<8x128xbf16>, vector<128x256xbf16>, vector<8x256xf32> -> vector<8x256xf32>
      %c0_158 = arith.constant 0 : index
      %c0_159 = arith.constant 0 : index
      %286 = vector.load %arg14[%c0_158, %c0_159] : memref<1x256xf32, #tpu.memory_space<vmem>>, vector<1x256xf32>
      %287 = vector.broadcast %286 : vector<1x256xf32> to vector<8x256xf32>
      %288 = arith.addf %285, %287 : vector<8x256xf32>
      %289 = arith.truncf %288 : vector<8x256xf32> to vector<8x256xbf16>
      %c0_160 = arith.constant 0 : index
      %c0_161 = arith.constant 0 : index
      %290 = vector.load %arg31[%c0_160, %c0_161] : memref<8x256xbf16, #tpu.memory_space<vmem>>, vector<8x256xbf16>
      tpu.vector_store %arg31[%c0_160, %c0_161], %289 {strides = array<i32>} : memref<8x256xbf16, #tpu.memory_space<vmem>>, vector<8x256xbf16>,
    } else {
    }
    %c0 = arith.constant 0 : index
    %c0_1 = arith.constant 0 : index
    %c0_2 = arith.constant 0 : index
    %3 = vector.load %arg2[%c0, %c0_1, %c0_2] : memref<1x8x128xf32, #tpu.memory_space<vmem>>, vector<1x8x128xf32>
    %4 = vector.shape_cast %3 : vector<1x8x128xf32> to vector<8x128xf32>
    %5 = arith.truncf %4 : vector<8x128xf32> to vector<8x128xbf16>
    %c0_3 = arith.constant 0 : index
    %c0_4 = arith.constant 0 : index
    %6 = vector.load %arg5[%c0_3, %c0_4] : memref<128x128xbf16, #tpu.memory_space<vmem>>, vector<128x128xbf16>
    %cst = arith.constant dense<0.000000e+00> : vector<8x128xf32>
    %7 = tpu.matmul %5, %6, %cst {dimension_numbers = #tpu.dot_dimension_numbers<[1], [0], [0], [1], [0, 0, 1, 1], [], []>} : vector<8x128xbf16>, vector<128x128xbf16>, vector<8x128xf32> -> vector<8x128xf32>
    %c0_5 = arith.constant 0 : index
    %c0_6 = arith.constant 0 : index
    %8 = vector.load %arg6[%c0_5, %c0_6] : memref<1x128xf32, #tpu.memory_space<vmem>>, vector<1x128xf32>
    %9 = vector.broadcast %8 : vector<1x128xf32> to vector<8x128xf32>
    %10 = arith.addf %7, %9 : vector<8x128xf32>
    %cst_7 = arith.constant 0.176776692 : f32
    %11 = vector.broadcast %cst_7 : f32 to vector<8x128xf32>
    %12 = arith.mulf %10, %11 : vector<8x128xf32>
    %13 = vector.extract_strided_slice %12 {offsets = [0, 0], sizes = [8, 32], strides = [1, 1]} : vector<8x128xf32> to vector<8x32xf32>
    %14 = arith.truncf %13 : vector<8x32xf32> to vector<8x32xbf16>
    %c0_8 = arith.constant 0 : index
    %c0_9 = arith.constant 0 : index
    %15 = vector.load %arg30[%c0_8, %c0_9] : memref<16x256xbf16, #tpu.memory_space<vmem>>, vector<16x32xbf16>
    %c0_10 = arith.constant 0 : index
    %c128 = arith.constant 128 : index
    %16 = vector.load %arg30[%c0_10, %c128] : memref<16x256xbf16, #tpu.memory_space<vmem>>, vector<16x32xbf16>
    %cst_11 = arith.constant dense<0.000000e+00> : vector<8x16xf32>
    %17 = tpu.matmul %14, %15, %cst_11 {dimension_numbers = #tpu.dot_dimension_numbers<[1], [1], [0], [0], [0, 0, 1, 0], [], []>} : vector<8x32xbf16>, vector<16x32xbf16>, vector<8x16xf32> -> vector<8x16xf32>
    %cst_12 = arith.constant dense<0xFF800000> : vector<8xf32>
    %18 = vector.multi_reduction <maximumf>, %17, %cst_12 [1] : vector<8x16xf32> to vector<8xf32>
    %19 = vector.shape_cast %18 : vector<8xf32> to vector<8x1xf32>
    %20 = vector.broadcast %19 : vector<8x1xf32> to vector<8x16xf32>
    %21 = arith.subf %17, %20 : vector<8x16xf32>
    %22 = math.exp %21 : vector<8x16xf32>
    %cst_13 = arith.constant dense<0.000000e+00> : vector<8xf32>
    %23 = vector.multi_reduction <add>, %22, %cst_13 [1] : vector<8x16xf32> to vector<8xf32>
    %24 = vector.shape_cast %23 : vector<8xf32> to vector<8x1xf32>
    %25 = tpu.reciprocal %24 : vector<8x1xf32> -> vector<8x1xf32>
    %26 = vector.broadcast %25 : vector<8x1xf32> to vector<8x16xf32>
    %27 = arith.mulf %22, %26 : vector<8x16xf32>
    %28 = arith.truncf %27 : vector<8x16xf32> to vector<8x16xbf16>
    %cst_14 = arith.constant dense<0.000000e+00> : vector<8x32xf32>
    %29 = tpu.matmul %28, %16, %cst_14 {dimension_numbers = #tpu.dot_dimension_numbers<[1], [0], [0], [1], [0, 0, 1, 1], [], []>} : vector<8x16xbf16>, vector<16x32xbf16>, vector<8x32xf32> -> vector<8x32xf32>
    %c0_15 = arith.constant 0 : index
    %c0_16 = arith.constant 0 : index
    %30 = vector.load %arg32[%c0_15, %c0_16] : memref<8x128xf32, #tpu.memory_space<vmem>>, vector<8x32xf32>
    tpu.vector_store %arg32[%c0_15, %c0_16], %29 {strides = array<i32>} : memref<8x128xf32, #tpu.memory_space<vmem>>, vector<8x32xf32>,
    %31 = vector.extract_strided_slice %12 {offsets = [0, 32], sizes = [8, 32], strides = [1, 1]} : vector<8x128xf32> to vector<8x32xf32>
    %32 = arith.truncf %31 : vector<8x32xf32> to vector<8x32xbf16>
    %c0_17 = arith.constant 0 : index
    %c32 = arith.constant 32 : index
    %33 = vector.load %arg30[%c0_17, %c32] : memref<16x256xbf16, #tpu.memory_space<vmem>>, vector<16x32xbf16>
    %c0_18 = arith.constant 0 : index
    %c160 = arith.constant 160 : index
    %34 = vector.load %arg30[%c0_18, %c160] : memref<16x256xbf16, #tpu.memory_space<vmem>>, vector<16x32xbf16>
    %cst_19 = arith.constant dense<0.000000e+00> : vector<8x16xf32>
    %35 = tpu.matmul %32, %33, %cst_19 {dimension_numbers = #tpu.dot_dimension_numbers<[1], [1], [0], [0], [0, 0, 1, 0], [], []>} : vector<8x32xbf16>, vector<16x32xbf16>, vector<8x16xf32> -> vector<8x16xf32>
    %cst_20 = arith.constant dense<0xFF800000> : vector<8xf32>
    %36 = vector.multi_reduction <maximumf>, %35, %cst_20 [1] : vector<8x16xf32> to vector<8xf32>
    %37 = vector.shape_cast %36 : vector<8xf32> to vector<8x1xf32>
    %38 = vector.broadcast %37 : vector<8x1xf32> to vector<8x16xf32>
    %39 = arith.subf %35, %38 : vector<8x16xf32>
    %40 = math.exp %39 : vector<8x16xf32>
    %cst_21 = arith.constant dense<0.000000e+00> : vector<8xf32>
    %41 = vector.multi_reduction <add>, %40, %cst_21 [1] : vector<8x16xf32> to vector<8xf32>
    %42 = vector.shape_cast %41 : vector<8xf32> to vector<8x1xf32>
    %43 = tpu.reciprocal %42 : vector<8x1xf32> -> vector<8x1xf32>
    %44 = vector.broadcast %43 : vector<8x1xf32> to vector<8x16xf32>
    %45 = arith.mulf %40, %44 : vector<8x16xf32>
    %46 = arith.truncf %45 : vector<8x16xf32> to vector<8x16xbf16>
    %cst_22 = arith.constant dense<0.000000e+00> : vector<8x32xf32>
    %47 = tpu.matmul %46, %34, %cst_22 {dimension_numbers = #tpu.dot_dimension_numbers<[1], [0], [0], [1], [0, 0, 1, 1], [], []>} : vector<8x16xbf16>, vector<16x32xbf16>, vector<8x32xf32> -> vector<8x32xf32>
    %c0_23 = arith.constant 0 : index
    %c32_24 = arith.constant 32 : index
    %48 = vector.load %arg32[%c0_23, %c32_24] : memref<8x128xf32, #tpu.memory_space<vmem>>, vector<8x32xf32>
    tpu.vector_store %arg32[%c0_23, %c32_24], %47 {strides = array<i32>} : memref<8x128xf32, #tpu.memory_space<vmem>>, vector<8x32xf32>,
    %49 = vector.extract_strided_slice %12 {offsets = [0, 64], sizes = [8, 32], strides = [1, 1]} : vector<8x128xf32> to vector<8x32xf32>
    %50 = arith.truncf %49 : vector<8x32xf32> to vector<8x32xbf16>
    %c0_25 = arith.constant 0 : index
    %c64 = arith.constant 64 : index
    %51 = vector.load %arg30[%c0_25, %c64] : memref<16x256xbf16, #tpu.memory_space<vmem>>, vector<16x32xbf16>
    %c0_26 = arith.constant 0 : index
    %c192 = arith.constant 192 : index
    %52 = vector.load %arg30[%c0_26, %c192] : memref<16x256xbf16, #tpu.memory_space<vmem>>, vector<16x32xbf16>
    %cst_27 = arith.constant dense<0.000000e+00> : vector<8x16xf32>
    %53 = tpu.matmul %50, %51, %cst_27 {dimension_numbers = #tpu.dot_dimension_numbers<[1], [1], [0], [0], [0, 0, 1, 0], [], []>} : vector<8x32xbf16>, vector<16x32xbf16>, vector<8x16xf32> -> vector<8x16xf32>
    %cst_28 = arith.constant dense<0xFF800000> : vector<8xf32>
    %54 = vector.multi_reduction <maximumf>, %53, %cst_28 [1] : vector<8x16xf32> to vector<8xf32>
    %55 = vector.shape_cast %54 : vector<8xf32> to vector<8x1xf32>
    %56 = vector.broadcast %55 : vector<8x1xf32> to vector<8x16xf32>
    %57 = arith.subf %53, %56 : vector<8x16xf32>
    %58 = math.exp %57 : vector<8x16xf32>
    %cst_29 = arith.constant dense<0.000000e+00> : vector<8xf32>
    %59 = vector.multi_reduction <add>, %58, %cst_29 [1] : vector<8x16xf32> to vector<8xf32>
    %60 = vector.shape_cast %59 : vector<8xf32> to vector<8x1xf32>
    %61 = tpu.reciprocal %60 : vector<8x1xf32> -> vector<8x1xf32>
    %62 = vector.broadcast %61 : vector<8x1xf32> to vector<8x16xf32>
    %63 = arith.mulf %58, %62 : vector<8x16xf32>
    %64 = arith.truncf %63 : vector<8x16xf32> to vector<8x16xbf16>
    %cst_30 = arith.constant dense<0.000000e+00> : vector<8x32xf32>
    %65 = tpu.matmul %64, %52, %cst_30 {dimension_numbers = #tpu.dot_dimension_numbers<[1], [0], [0], [1], [0, 0, 1, 1], [], []>} : vector<8x16xbf16>, vector<16x32xbf16>, vector<8x32xf32> -> vector<8x32xf32>
    %c0_31 = arith.constant 0 : index
    %c64_32 = arith.constant 64 : index
    %66 = vector.load %arg32[%c0_31, %c64_32] : memref<8x128xf32, #tpu.memory_space<vmem>>, vector<8x32xf32>
    tpu.vector_store %arg32[%c0_31, %c64_32], %65 {strides = array<i32>} : memref<8x128xf32, #tpu.memory_space<vmem>>, vector<8x32xf32>,
    %67 = vector.extract_strided_slice %12 {offsets = [0, 96], sizes = [8, 32], strides = [1, 1]} : vector<8x128xf32> to vector<8x32xf32>
    %68 = arith.truncf %67 : vector<8x32xf32> to vector<8x32xbf16>
    %c0_33 = arith.constant 0 : index
    %c96 = arith.constant 96 : index
    %69 = vector.load %arg30[%c0_33, %c96] : memref<16x256xbf16, #tpu.memory_space<vmem>>, vector<16x32xbf16>
    %c0_34 = arith.constant 0 : index
    %c224 = arith.constant 224 : index
    %70 = vector.load %arg30[%c0_34, %c224] : memref<16x256xbf16, #tpu.memory_space<vmem>>, vector<16x32xbf16>
    %cst_35 = arith.constant dense<0.000000e+00> : vector<8x16xf32>
    %71 = tpu.matmul %68, %69, %cst_35 {dimension_numbers = #tpu.dot_dimension_numbers<[1], [1], [0], [0], [0, 0, 1, 0], [], []>} : vector<8x32xbf16>, vector<16x32xbf16>, vector<8x16xf32> -> vector<8x16xf32>
    %cst_36 = arith.constant dense<0xFF800000> : vector<8xf32>
    %72 = vector.multi_reduction <maximumf>, %71, %cst_36 [1] : vector<8x16xf32> to vector<8xf32>
    %73 = vector.shape_cast %72 : vector<8xf32> to vector<8x1xf32>
    %74 = vector.broadcast %73 : vector<8x1xf32> to vector<8x16xf32>
    %75 = arith.subf %71, %74 : vector<8x16xf32>
    %76 = math.exp %75 : vector<8x16xf32>
    %cst_37 = arith.constant dense<0.000000e+00> : vector<8xf32>
    %77 = vector.multi_reduction <add>, %76, %cst_37 [1] : vector<8x16xf32> to vector<8xf32>
    %78 = vector.shape_cast %77 : vector<8xf32> to vector<8x1xf32>
    %79 = tpu.reciprocal %78 : vector<8x1xf32> -> vector<8x1xf32>
    %80 = vector.broadcast %79 : vector<8x1xf32> to vector<8x16xf32>
    %81 = arith.mulf %76, %80 : vector<8x16xf32>
    %82 = arith.truncf %81 : vector<8x16xf32> to vector<8x16xbf16>
    %cst_38 = arith.constant dense<0.000000e+00> : vector<8x32xf32>
    %83 = tpu.matmul %82, %70, %cst_38 {dimension_numbers = #tpu.dot_dimension_numbers<[1], [0], [0], [1], [0, 0, 1, 1], [], []>} : vector<8x16xbf16>, vector<16x32xbf16>, vector<8x32xf32> -> vector<8x32xf32>
    %c0_39 = arith.constant 0 : index
    %c96_40 = arith.constant 96 : index
    %84 = vector.load %arg32[%c0_39, %c96_40] : memref<8x128xf32, #tpu.memory_space<vmem>>, vector<8x32xf32>
    tpu.vector_store %arg32[%c0_39, %c96_40], %83 {strides = array<i32>} : memref<8x128xf32, #tpu.memory_space<vmem>>, vector<8x32xf32>,
    %c0_41 = arith.constant 0 : index
    %c0_42 = arith.constant 0 : index
    %85 = vector.load %arg32[%c0_41, %c0_42] : memref<8x128xf32, #tpu.memory_space<vmem>>, vector<8x128xf32>
    %86 = arith.truncf %85 : vector<8x128xf32> to vector<8x128xbf16>
    %c0_43 = arith.constant 0 : index
    %c0_44 = arith.constant 0 : index
    %87 = vector.load %arg9[%c0_43, %c0_44] : memref<128x128xbf16, #tpu.memory_space<vmem>>, vector<128x128xbf16>
    %cst_45 = arith.constant dense<0.000000e+00> : vector<8x128xf32>
    %88 = tpu.matmul %86, %87, %cst_45 {dimension_numbers = #tpu.dot_dimension_numbers<[1], [0], [0], [1], [0, 0, 1, 1], [], []>} : vector<8x128xbf16>, vector<128x128xbf16>, vector<8x128xf32> -> vector<8x128xf32>
    %c0_46 = arith.constant 0 : index
    %c0_47 = arith.constant 0 : index
    %89 = vector.load %arg10[%c0_46, %c0_47] : memref<1x128xf32, #tpu.memory_space<vmem>>, vector<1x128xf32>
    %90 = vector.broadcast %89 : vector<1x128xf32> to vector<8x128xf32>
    %91 = arith.addf %88, %90 : vector<8x128xf32>
    %92 = arith.addf %4, %91 : vector<8x128xf32>
    %c0_48 = arith.constant 0 : index
    %c0_49 = arith.constant 0 : index
    %93 = vector.load %arg21[%c0_48, %c0_49] : memref<1x128xf32, #tpu.memory_space<vmem>>, vector<1x128xf32>
    %c0_50 = arith.constant 0 : index
    %c0_51 = arith.constant 0 : index
    %94 = vector.load %arg22[%c0_50, %c0_51] : memref<1x128xf32, #tpu.memory_space<vmem>>, vector<1x128xf32>
    %cst_52 = arith.constant dense<0.000000e+00> : vector<8xf32>
    %95 = vector.multi_reduction <add>, %92, %cst_52 [1] : vector<8x128xf32> to vector<8xf32>
    %96 = vector.shape_cast %95 : vector<8xf32> to vector<8x1xf32>
    %cst_53 = arith.constant 1.280000e+02 : f32
    %97 = vector.broadcast %cst_53 : f32 to vector<8x1xf32>
    %98 = arith.divf %96, %97 : vector<8x1xf32>
    %99 = vector.broadcast %98 : vector<8x1xf32> to vector<8x128xf32>
    %100 = arith.subf %92, %99 : vector<8x128xf32>
    %101 = arith.mulf %100, %100 : vector<8x128xf32>
    %cst_54 = arith.constant dense<0.000000e+00> : vector<8xf32>
    %102 = vector.multi_reduction <add>, %101, %cst_54 [1] : vector<8x128xf32> to vector<8xf32>
    %103 = vector.shape_cast %102 : vector<8xf32> to vector<8x1xf32>
    %cst_55 = arith.constant 1.280000e+02 : f32
    %104 = vector.broadcast %cst_55 : f32 to vector<8x1xf32>
    %105 = arith.divf %103, %104 : vector<8x1xf32>
    %106 = vector.broadcast %98 : vector<8x1xf32> to vector<8x128xf32>
    %107 = arith.subf %92, %106 : vector<8x128xf32>
    %cst_56 = arith.constant 9.99999974E-6 : f32
    %108 = vector.broadcast %cst_56 : f32 to vector<8x1xf32>
    %109 = arith.addf %105, %108 : vector<8x1xf32>
    %110 = math.rsqrt %109 : vector<8x1xf32>
    %111 = vector.broadcast %110 : vector<8x1xf32> to vector<8x128xf32>
    %112 = arith.mulf %107, %111 : vector<8x128xf32>
    %113 = vector.broadcast %93 : vector<1x128xf32> to vector<8x128xf32>
    %114 = arith.mulf %112, %113 : vector<8x128xf32>
    %115 = vector.broadcast %94 : vector<1x128xf32> to vector<8x128xf32>
    %116 = arith.addf %114, %115 : vector<8x128xf32>
    %117 = arith.truncf %116 : vector<8x128xf32> to vector<8x128xbf16>
    %c0_57 = arith.constant 0 : index
    %c0_58 = arith.constant 0 : index
    %118 = vector.load %arg11[%c0_57, %c0_58] : memref<128x128xbf16, #tpu.memory_space<vmem>>, vector<128x128xbf16>
    %cst_59 = arith.constant dense<0.000000e+00> : vector<8x128xf32>
    %119 = tpu.matmul %117, %118, %cst_59 {dimension_numbers = #tpu.dot_dimension_numbers<[1], [0], [0], [1], [0, 0, 1, 1], [], []>} : vector<8x128xbf16>, vector<128x128xbf16>, vector<8x128xf32> -> vector<8x128xf32>
    %c0_60 = arith.constant 0 : index
    %c0_61 = arith.constant 0 : index
    %120 = vector.load %arg12[%c0_60, %c0_61] : memref<1x128xf32, #tpu.memory_space<vmem>>, vector<1x128xf32>
    %121 = vector.broadcast %120 : vector<1x128xf32> to vector<8x128xf32>
    %122 = arith.addf %119, %121 : vector<8x128xf32>
    %cst_62 = arith.constant 0.176776692 : f32
    %123 = vector.broadcast %cst_62 : f32 to vector<8x128xf32>
    %124 = arith.mulf %122, %123 : vector<8x128xf32>
    %125 = vector.extract_strided_slice %124 {offsets = [0, 0], sizes = [8, 32], strides = [1, 1]} : vector<8x128xf32> to vector<8x32xf32>
    %126 = arith.truncf %125 : vector<8x32xf32> to vector<8x32xbf16>
    %c0_63 = arith.constant 0 : index
    %c0_64 = arith.constant 0 : index
    %127 = vector.load %arg31[%c0_63, %c0_64] : memref<8x256xbf16, #tpu.memory_space<vmem>>, vector<8x32xbf16>
    %c0_65 = arith.constant 0 : index
    %c128_66 = arith.constant 128 : index
    %128 = vector.load %arg31[%c0_65, %c128_66] : memref<8x256xbf16, #tpu.memory_space<vmem>>, vector<8x32xbf16>
    %cst_67 = arith.constant dense<0.000000e+00> : vector<8x8xf32>
    %129 = tpu.matmul %126, %127, %cst_67 {dimension_numbers = #tpu.dot_dimension_numbers<[1], [1], [0], [0], [0, 0, 1, 0], [], []>} : vector<8x32xbf16>, vector<8x32xbf16>, vector<8x8xf32> -> vector<8x8xf32>
    %cst_68 = arith.constant dense<0xFF800000> : vector<8xf32>
    %130 = vector.multi_reduction <maximumf>, %129, %cst_68 [1] : vector<8x8xf32> to vector<8xf32>
    %131 = vector.shape_cast %130 : vector<8xf32> to vector<8x1xf32>
    %132 = vector.broadcast %131 : vector<8x1xf32> to vector<8x8xf32>
    %133 = arith.subf %129, %132 : vector<8x8xf32>
    %134 = math.exp %133 : vector<8x8xf32>
    %cst_69 = arith.constant dense<0.000000e+00> : vector<8xf32>
    %135 = vector.multi_reduction <add>, %134, %cst_69 [1] : vector<8x8xf32> to vector<8xf32>
    %136 = vector.shape_cast %135 : vector<8xf32> to vector<8x1xf32>
    %137 = tpu.reciprocal %136 : vector<8x1xf32> -> vector<8x1xf32>
    %138 = vector.broadcast %137 : vector<8x1xf32> to vector<8x8xf32>
    %139 = arith.mulf %134, %138 : vector<8x8xf32>
    %140 = arith.truncf %139 : vector<8x8xf32> to vector<8x8xbf16>
    %cst_70 = arith.constant dense<0.000000e+00> : vector<8x32xf32>
    %141 = tpu.matmul %140, %128, %cst_70 {dimension_numbers = #tpu.dot_dimension_numbers<[1], [0], [0], [1], [0, 0, 1, 1], [], []>} : vector<8x8xbf16>, vector<8x32xbf16>, vector<8x32xf32> -> vector<8x32xf32>
    %c0_71 = arith.constant 0 : index
    %c0_72 = arith.constant 0 : index
    %142 = vector.load %arg32[%c0_71, %c0_72] : memref<8x128xf32, #tpu.memory_space<vmem>>, vector<8x32xf32>
    tpu.vector_store %arg32[%c0_71, %c0_72], %141 {strides = array<i32>} : memref<8x128xf32, #tpu.memory_space<vmem>>, vector<8x32xf32>,
    %143 = vector.extract_strided_slice %124 {offsets = [0, 32], sizes = [8, 32], strides = [1, 1]} : vector<8x128xf32> to vector<8x32xf32>
    %144 = arith.truncf %143 : vector<8x32xf32> to vector<8x32xbf16>
    %c0_73 = arith.constant 0 : index
    %c32_74 = arith.constant 32 : index
    %145 = vector.load %arg31[%c0_73, %c32_74] : memref<8x256xbf16, #tpu.memory_space<vmem>>, vector<8x32xbf16>
    %c0_75 = arith.constant 0 : index
    %c160_76 = arith.constant 160 : index
    %146 = vector.load %arg31[%c0_75, %c160_76] : memref<8x256xbf16, #tpu.memory_space<vmem>>, vector<8x32xbf16>
    %cst_77 = arith.constant dense<0.000000e+00> : vector<8x8xf32>
    %147 = tpu.matmul %144, %145, %cst_77 {dimension_numbers = #tpu.dot_dimension_numbers<[1], [1], [0], [0], [0, 0, 1, 0], [], []>} : vector<8x32xbf16>, vector<8x32xbf16>, vector<8x8xf32> -> vector<8x8xf32>
    %cst_78 = arith.constant dense<0xFF800000> : vector<8xf32>
    %148 = vector.multi_reduction <maximumf>, %147, %cst_78 [1] : vector<8x8xf32> to vector<8xf32>
    %149 = vector.shape_cast %148 : vector<8xf32> to vector<8x1xf32>
    %150 = vector.broadcast %149 : vector<8x1xf32> to vector<8x8xf32>
    %151 = arith.subf %147, %150 : vector<8x8xf32>
    %152 = math.exp %151 : vector<8x8xf32>
    %cst_79 = arith.constant dense<0.000000e+00> : vector<8xf32>
    %153 = vector.multi_reduction <add>, %152, %cst_79 [1] : vector<8x8xf32> to vector<8xf32>
    %154 = vector.shape_cast %153 : vector<8xf32> to vector<8x1xf32>
    %155 = tpu.reciprocal %154 : vector<8x1xf32> -> vector<8x1xf32>
    %156 = vector.broadcast %155 : vector<8x1xf32> to vector<8x8xf32>
    %157 = arith.mulf %152, %156 : vector<8x8xf32>
    %158 = arith.truncf %157 : vector<8x8xf32> to vector<8x8xbf16>
    %cst_80 = arith.constant dense<0.000000e+00> : vector<8x32xf32>
    %159 = tpu.matmul %158, %146, %cst_80 {dimension_numbers = #tpu.dot_dimension_numbers<[1], [0], [0], [1], [0, 0, 1, 1], [], []>} : vector<8x8xbf16>, vector<8x32xbf16>, vector<8x32xf32> -> vector<8x32xf32>
    %c0_81 = arith.constant 0 : index
    %c32_82 = arith.constant 32 : index
    %160 = vector.load %arg32[%c0_81, %c32_82] : memref<8x128xf32, #tpu.memory_space<vmem>>, vector<8x32xf32>
    tpu.vector_store %arg32[%c0_81, %c32_82], %159 {strides = array<i32>} : memref<8x128xf32, #tpu.memory_space<vmem>>, vector<8x32xf32>,
    %161 = vector.extract_strided_slice %124 {offsets = [0, 64], sizes = [8, 32], strides = [1, 1]} : vector<8x128xf32> to vector<8x32xf32>
    %162 = arith.truncf %161 : vector<8x32xf32> to vector<8x32xbf16>
    %c0_83 = arith.constant 0 : index
    %c64_84 = arith.constant 64 : index
    %163 = vector.load %arg31[%c0_83, %c64_84] : memref<8x256xbf16, #tpu.memory_space<vmem>>, vector<8x32xbf16>
    %c0_85 = arith.constant 0 : index
    %c192_86 = arith.constant 192 : index
    %164 = vector.load %arg31[%c0_85, %c192_86] : memref<8x256xbf16, #tpu.memory_space<vmem>>, vector<8x32xbf16>
    %cst_87 = arith.constant dense<0.000000e+00> : vector<8x8xf32>
    %165 = tpu.matmul %162, %163, %cst_87 {dimension_numbers = #tpu.dot_dimension_numbers<[1], [1], [0], [0], [0, 0, 1, 0], [], []>} : vector<8x32xbf16>, vector<8x32xbf16>, vector<8x8xf32> -> vector<8x8xf32>
    %cst_88 = arith.constant dense<0xFF800000> : vector<8xf32>
    %166 = vector.multi_reduction <maximumf>, %165, %cst_88 [1] : vector<8x8xf32> to vector<8xf32>
    %167 = vector.shape_cast %166 : vector<8xf32> to vector<8x1xf32>
    %168 = vector.broadcast %167 : vector<8x1xf32> to vector<8x8xf32>
    %169 = arith.subf %165, %168 : vector<8x8xf32>
    %170 = math.exp %169 : vector<8x8xf32>
    %cst_89 = arith.constant dense<0.000000e+00> : vector<8xf32>
    %171 = vector.multi_reduction <add>, %170, %cst_89 [1] : vector<8x8xf32> to vector<8xf32>
    %172 = vector.shape_cast %171 : vector<8xf32> to vector<8x1xf32>
    %173 = tpu.reciprocal %172 : vector<8x1xf32> -> vector<8x1xf32>
    %174 = vector.broadcast %173 : vector<8x1xf32> to vector<8x8xf32>
    %175 = arith.mulf %170, %174 : vector<8x8xf32>
    %176 = arith.truncf %175 : vector<8x8xf32> to vector<8x8xbf16>
    %cst_90 = arith.constant dense<0.000000e+00> : vector<8x32xf32>
    %177 = tpu.matmul %176, %164, %cst_90 {dimension_numbers = #tpu.dot_dimension_numbers<[1], [0], [0], [1], [0, 0, 1, 1], [], []>} : vector<8x8xbf16>, vector<8x32xbf16>, vector<8x32xf32> -> vector<8x32xf32>
    %c0_91 = arith.constant 0 : index
    %c64_92 = arith.constant 64 : index
    %178 = vector.load %arg32[%c0_91, %c64_92] : memref<8x128xf32, #tpu.memory_space<vmem>>, vector<8x32xf32>
    tpu.vector_store %arg32[%c0_91, %c64_92], %177 {strides = array<i32>} : memref<8x128xf32, #tpu.memory_space<vmem>>, vector<8x32xf32>,
    %179 = vector.extract_strided_slice %124 {offsets = [0, 96], sizes = [8, 32], strides = [1, 1]} : vector<8x128xf32> to vector<8x32xf32>
    %180 = arith.truncf %179 : vector<8x32xf32> to vector<8x32xbf16>
    %c0_93 = arith.constant 0 : index
    %c96_94 = arith.constant 96 : index
    %181 = vector.load %arg31[%c0_93, %c96_94] : memref<8x256xbf16, #tpu.memory_space<vmem>>, vector<8x32xbf16>
    %c0_95 = arith.constant 0 : index
    %c224_96 = arith.constant 224 : index
    %182 = vector.load %arg31[%c0_95, %c224_96] : memref<8x256xbf16, #tpu.memory_space<vmem>>, vector<8x32xbf16>
    %cst_97 = arith.constant dense<0.000000e+00> : vector<8x8xf32>
    %183 = tpu.matmul %180, %181, %cst_97 {dimension_numbers = #tpu.dot_dimension_numbers<[1], [1], [0], [0], [0, 0, 1, 0], [], []>} : vector<8x32xbf16>, vector<8x32xbf16>, vector<8x8xf32> -> vector<8x8xf32>
    %cst_98 = arith.constant dense<0xFF800000> : vector<8xf32>
    %184 = vector.multi_reduction <maximumf>, %183, %cst_98 [1] : vector<8x8xf32> to vector<8xf32>
    %185 = vector.shape_cast %184 : vector<8xf32> to vector<8x1xf32>
    %186 = vector.broadcast %185 : vector<8x1xf32> to vector<8x8xf32>
    %187 = arith.subf %183, %186 : vector<8x8xf32>
    %188 = math.exp %187 : vector<8x8xf32>
    %cst_99 = arith.constant dense<0.000000e+00> : vector<8xf32>
    %189 = vector.multi_reduction <add>, %188, %cst_99 [1] : vector<8x8xf32> to vector<8xf32>
    %190 = vector.shape_cast %189 : vector<8xf32> to vector<8x1xf32>
    %191 = tpu.reciprocal %190 : vector<8x1xf32> -> vector<8x1xf32>
    %192 = vector.broadcast %191 : vector<8x1xf32> to vector<8x8xf32>
    %193 = arith.mulf %188, %192 : vector<8x8xf32>
    %194 = arith.truncf %193 : vector<8x8xf32> to vector<8x8xbf16>
    %cst_100 = arith.constant dense<0.000000e+00> : vector<8x32xf32>
    %195 = tpu.matmul %194, %182, %cst_100 {dimension_numbers = #tpu.dot_dimension_numbers<[1], [0], [0], [1], [0, 0, 1, 1], [], []>} : vector<8x8xbf16>, vector<8x32xbf16>, vector<8x32xf32> -> vector<8x32xf32>
    %c0_101 = arith.constant 0 : index
    %c96_102 = arith.constant 96 : index
    %196 = vector.load %arg32[%c0_101, %c96_102] : memref<8x128xf32, #tpu.memory_space<vmem>>, vector<8x32xf32>
    tpu.vector_store %arg32[%c0_101, %c96_102], %195 {strides = array<i32>} : memref<8x128xf32, #tpu.memory_space<vmem>>, vector<8x32xf32>,
    %c0_103 = arith.constant 0 : index
    %c0_104 = arith.constant 0 : index
    %197 = vector.load %arg32[%c0_103, %c0_104] : memref<8x128xf32, #tpu.memory_space<vmem>>, vector<8x128xf32>
    %198 = arith.truncf %197 : vector<8x128xf32> to vector<8x128xbf16>
    %c0_105 = arith.constant 0 : index
    %c0_106 = arith.constant 0 : index
    %199 = vector.load %arg15[%c0_105, %c0_106] : memref<128x128xbf16, #tpu.memory_space<vmem>>, vector<128x128xbf16>
    %cst_107 = arith.constant dense<0.000000e+00> : vector<8x128xf32>
    %200 = tpu.matmul %198, %199, %cst_107 {dimension_numbers = #tpu.dot_dimension_numbers<[1], [0], [0], [1], [0, 0, 1, 1], [], []>} : vector<8x128xbf16>, vector<128x128xbf16>, vector<8x128xf32> -> vector<8x128xf32>
    %c0_108 = arith.constant 0 : index
    %c0_109 = arith.constant 0 : index
    %201 = vector.load %arg16[%c0_108, %c0_109] : memref<1x128xf32, #tpu.memory_space<vmem>>, vector<1x128xf32>
    %202 = vector.broadcast %201 : vector<1x128xf32> to vector<8x128xf32>
    %203 = arith.addf %200, %202 : vector<8x128xf32>
    %204 = arith.addf %116, %203 : vector<8x128xf32>
    %c0_110 = arith.constant 0 : index
    %c0_111 = arith.constant 0 : index
    %205 = vector.load %arg23[%c0_110, %c0_111] : memref<1x128xf32, #tpu.memory_space<vmem>>, vector<1x128xf32>
    %c0_112 = arith.constant 0 : index
    %c0_113 = arith.constant 0 : index
    %206 = vector.load %arg24[%c0_112, %c0_113] : memref<1x128xf32, #tpu.memory_space<vmem>>, vector<1x128xf32>
    %cst_114 = arith.constant dense<0.000000e+00> : vector<8xf32>
    %207 = vector.multi_reduction <add>, %204, %cst_114 [1] : vector<8x128xf32> to vector<8xf32>
    %208 = vector.shape_cast %207 : vector<8xf32> to vector<8x1xf32>
    %cst_115 = arith.constant 1.280000e+02 : f32
    %209 = vector.broadcast %cst_115 : f32 to vector<8x1xf32>
    %210 = arith.divf %208, %209 : vector<8x1xf32>
    %211 = vector.broadcast %210 : vector<8x1xf32> to vector<8x128xf32>
    %212 = arith.subf %204, %211 : vector<8x128xf32>
    %213 = arith.mulf %212, %212 : vector<8x128xf32>
    %cst_116 = arith.constant dense<0.000000e+00> : vector<8xf32>
    %214 = vector.multi_reduction <add>, %213, %cst_116 [1] : vector<8x128xf32> to vector<8xf32>
    %215 = vector.shape_cast %214 : vector<8xf32> to vector<8x1xf32>
    %cst_117 = arith.constant 1.280000e+02 : f32
    %216 = vector.broadcast %cst_117 : f32 to vector<8x1xf32>
    %217 = arith.divf %215, %216 : vector<8x1xf32>
    %218 = vector.broadcast %210 : vector<8x1xf32> to vector<8x128xf32>
    %219 = arith.subf %204, %218 : vector<8x128xf32>
    %cst_118 = arith.constant 9.99999974E-6 : f32
    %220 = vector.broadcast %cst_118 : f32 to vector<8x1xf32>
    %221 = arith.addf %217, %220 : vector<8x1xf32>
    %222 = math.rsqrt %221 : vector<8x1xf32>
    %223 = vector.broadcast %222 : vector<8x1xf32> to vector<8x128xf32>
    %224 = arith.mulf %219, %223 : vector<8x128xf32>
    %225 = vector.broadcast %205 : vector<1x128xf32> to vector<8x128xf32>
    %226 = arith.mulf %224, %225 : vector<8x128xf32>
    %227 = vector.broadcast %206 : vector<1x128xf32> to vector<8x128xf32>
    %228 = arith.addf %226, %227 : vector<8x128xf32>
    %229 = arith.truncf %228 : vector<8x128xf32> to vector<8x128xbf16>
    %c0_119 = arith.constant 0 : index
    %c0_120 = arith.constant 0 : index
    %230 = vector.load %arg17[%c0_119, %c0_120] : memref<128x256xbf16, #tpu.memory_space<vmem>>, vector<128x256xbf16>
    %cst_121 = arith.constant dense<0.000000e+00> : vector<8x256xf32>
    %231 = tpu.matmul %229, %230, %cst_121 {dimension_numbers = #tpu.dot_dimension_numbers<[1], [0], [0], [1], [0, 0, 1, 1], [], []>} : vector<8x128xbf16>, vector<128x256xbf16>, vector<8x256xf32> -> vector<8x256xf32>
    %c0_122 = arith.constant 0 : index
    %c0_123 = arith.constant 0 : index
    %232 = vector.load %arg18[%c0_122, %c0_123] : memref<1x256xf32, #tpu.memory_space<vmem>>, vector<1x256xf32>
    %233 = vector.broadcast %232 : vector<1x256xf32> to vector<8x256xf32>
    %234 = arith.addf %231, %233 : vector<8x256xf32>
    %cst_124 = arith.constant 0.000000e+00 : f32
    %235 = vector.broadcast %cst_124 : f32 to vector<8x256xf32>
    %236 = arith.maximumf %234, %235 : vector<8x256xf32>
    %237 = arith.truncf %236 : vector<8x256xf32> to vector<8x256xbf16>
    %c0_125 = arith.constant 0 : index
    %c0_126 = arith.constant 0 : index
    %238 = vector.load %arg19[%c0_125, %c0_126] : memref<256x128xbf16, #tpu.memory_space<vmem>>, vector<256x128xbf16>
    %cst_127 = arith.constant dense<0.000000e+00> : vector<8x128xf32>
    %239 = tpu.matmul %237, %238, %cst_127 {dimension_numbers = #tpu.dot_dimension_numbers<[1], [0], [0], [1], [0, 0, 1, 1], [], []>} : vector<8x256xbf16>, vector<256x128xbf16>, vector<8x128xf32> -> vector<8x128xf32>
    %c0_128 = arith.constant 0 : index
    %c0_129 = arith.constant 0 : index
    %240 = vector.load %arg20[%c0_128, %c0_129] : memref<1x128xf32, #tpu.memory_space<vmem>>, vector<1x128xf32>
    %241 = vector.broadcast %240 : vector<1x128xf32> to vector<8x128xf32>
    %242 = arith.addf %239, %241 : vector<8x128xf32>
    %243 = arith.addf %228, %242 : vector<8x128xf32>
    %c0_130 = arith.constant 0 : index
    %c0_131 = arith.constant 0 : index
    %244 = vector.load %arg25[%c0_130, %c0_131] : memref<1x128xf32, #tpu.memory_space<vmem>>, vector<1x128xf32>
    %c0_132 = arith.constant 0 : index
    %c0_133 = arith.constant 0 : index
    %245 = vector.load %arg26[%c0_132, %c0_133] : memref<1x128xf32, #tpu.memory_space<vmem>>, vector<1x128xf32>
    %cst_134 = arith.constant dense<0.000000e+00> : vector<8xf32>
    %246 = vector.multi_reduction <add>, %243, %cst_134 [1] : vector<8x128xf32> to vector<8xf32>
    %247 = vector.shape_cast %246 : vector<8xf32> to vector<8x1xf32>
    %cst_135 = arith.constant 1.280000e+02 : f32
    %248 = vector.broadcast %cst_135 : f32 to vector<8x1xf32>
    %249 = arith.divf %247, %248 : vector<8x1xf32>
    %250 = vector.broadcast %249 : vector<8x1xf32> to vector<8x128xf32>
    %251 = arith.subf %243, %250 : vector<8x128xf32>
    %252 = arith.mulf %251, %251 : vector<8x128xf32>
    %cst_136 = arith.constant dense<0.000000e+00> : vector<8xf32>
    %253 = vector.multi_reduction <add>, %252, %cst_136 [1] : vector<8x128xf32> to vector<8xf32>
    %254 = vector.shape_cast %253 : vector<8xf32> to vector<8x1xf32>
    %cst_137 = arith.constant 1.280000e+02 : f32
    %255 = vector.broadcast %cst_137 : f32 to vector<8x1xf32>
    %256 = arith.divf %254, %255 : vector<8x1xf32>
    %257 = vector.broadcast %249 : vector<8x1xf32> to vector<8x128xf32>
    %258 = arith.subf %243, %257 : vector<8x128xf32>
    %cst_138 = arith.constant 9.99999974E-6 : f32
    %259 = vector.broadcast %cst_138 : f32 to vector<8x1xf32>
    %260 = arith.addf %256, %259 : vector<8x1xf32>
    %261 = math.rsqrt %260 : vector<8x1xf32>
    %262 = vector.broadcast %261 : vector<8x1xf32> to vector<8x128xf32>
    %263 = arith.mulf %258, %262 : vector<8x128xf32>
    %264 = vector.broadcast %244 : vector<1x128xf32> to vector<8x128xf32>
    %265 = arith.mulf %263, %264 : vector<8x128xf32>
    %266 = vector.broadcast %245 : vector<1x128xf32> to vector<8x128xf32>
    %267 = arith.addf %265, %266 : vector<8x128xf32>
    %c0_139 = arith.constant 0 : index
    %c0_140 = arith.constant 0 : index
    %c0_141 = arith.constant 0 : index
    %268 = vector.load %arg29[%c0_139, %c0_140, %c0_141] : memref<1x8x128xf32, #tpu.memory_space<vmem>>, vector<1x8x128xf32>
    %269 = vector.shape_cast %268 : vector<1x8x128xf32> to vector<8x128xf32>
    %270 = vector.shape_cast %267 : vector<8x128xf32> to vector<1x8x128xf32>
    tpu.vector_store %arg29[%c0_139, %c0_140, %c0_141], %270 {strides = array<i32>} : memref<1x8x128xf32, #tpu.memory_space<vmem>>, vector<1x8x128xf32>,
    return
  }
  func.func @transform_0(%arg0: i32, %arg1: i32) -> (i32, i32, i32) {
    %c0_i32 = arith.constant 0 : i32
    %c0_i32_0 = arith.constant 0 : i32
    return %arg0, %arg1, %c0_i32 : i32, i32, i32
  }
  func.func @transform_1(%arg0: i32, %arg1: i32) -> (i32, i32, i32) {
    %c0_i32 = arith.constant 0 : i32
    %c0_i32_0 = arith.constant 0 : i32
    %c0_i32_1 = arith.constant 0 : i32
    return %arg0, %c0_i32, %c0_i32_0 : i32, i32, i32
  }
  func.func @transform_2(%arg0: i32, %arg1: i32) -> (i32, i32, i32) {
    %c0_i32 = arith.constant 0 : i32
    %c0_i32_0 = arith.constant 0 : i32
    %c0_i32_1 = arith.constant 0 : i32
    return %arg0, %c0_i32, %c0_i32_0 : i32, i32, i32
  }
  func.func @transform_3(%arg0: i32, %arg1: i32) -> (i32, i32) {
    %c0_i32 = arith.constant 0 : i32
    %c0_i32_0 = arith.constant 0 : i32
    %c0_i32_1 = arith.constant 0 : i32
    return %c0_i32, %c0_i32_0 : i32, i32
  }
  func.func @transform_4(%arg0: i32, %arg1: i32) -> (i32, i32) {
    %c0_i32 = arith.constant 0 : i32
    %c0_i32_0 = arith.constant 0 : i32
    %c0_i32_1 = arith.constant 0 : i32
    return %c0_i32, %c0_i32_0 : i32, i32
  }
  func.func @transform_5(%arg0: i32, %arg1: i32) -> (i32, i32) {
    %c0_i32 = arith.constant 0 : i32
    %c0_i32_0 = arith.constant 0 : i32
    %c0_i32_1 = arith.constant 0 : i32
    return %c0_i32, %c0_i32_0 : i32, i32
  }
  func.func @transform_6(%arg0: i32, %arg1: i32) -> (i32, i32) {
    %c0_i32 = arith.constant 0 : i32
    %c0_i32_0 = arith.constant 0 : i32
    %c0_i32_1 = arith.constant 0 : i32
    return %c0_i32, %c0_i32_0 : i32, i32
  }
  func.func @transform_7(%arg0: i32, %arg1: i32) -> (i32, i32) {
    %c0_i32 = arith.constant 0 : i32
    %c0_i32_0 = arith.constant 0 : i32
    %c0_i32_1 = arith.constant 0 : i32
    return %c0_i32, %c0_i32_0 : i32, i32
  }
  func.func @transform_8(%arg0: i32, %arg1: i32) -> (i32, i32) {
    %c0_i32 = arith.constant 0 : i32
    %c0_i32_0 = arith.constant 0 : i32
    %c0_i32_1 = arith.constant 0 : i32
    return %c0_i32, %c0_i32_0 : i32, i32
  }
  func.func @transform_9(%arg0: i32, %arg1: i32) -> (i32, i32) {
    %c0_i32 = arith.constant 0 : i32
    %c0_i32_0 = arith.constant 0 : i32
    %c0_i32_1 = arith.constant 0 : i32
    return %c0_i32, %c0_i32_0 : i32, i32
  }
  func.func @transform_10(%arg0: i32, %arg1: i32) -> (i32, i32) {
    %c0_i32 = arith.constant 0 : i32
    %c0_i32_0 = arith.constant 0 : i32
    %c0_i32_1 = arith.constant 0 : i32
    return %c0_i32, %c0_i32_0 : i32, i32
  }
  func.func @transform_11(%arg0: i32, %arg1: i32) -> (i32, i32) {
    %c0_i32 = arith.constant 0 : i32
    %c0_i32_0 = arith.constant 0 : i32
    %c0_i32_1 = arith.constant 0 : i32
    return %c0_i32, %c0_i32_0 : i32, i32
  }
  func.func @transform_12(%arg0: i32, %arg1: i32) -> (i32, i32) {
    %c0_i32 = arith.constant 0 : i32
    %c0_i32_0 = arith.constant 0 : i32
    %c0_i32_1 = arith.constant 0 : i32
    return %c0_i32, %c0_i32_0 : i32, i32
  }
  func.func @transform_13(%arg0: i32, %arg1: i32) -> (i32, i32) {
    %c0_i32 = arith.constant 0 : i32
    %c0_i32_0 = arith.constant 0 : i32
    %c0_i32_1 = arith.constant 0 : i32
    return %c0_i32, %c0_i32_0 : i32, i32
  }
  func.func @transform_14(%arg0: i32, %arg1: i32) -> (i32, i32) {
    %c0_i32 = arith.constant 0 : i32
    %c0_i32_0 = arith.constant 0 : i32
    %c0_i32_1 = arith.constant 0 : i32
    return %c0_i32, %c0_i32_0 : i32, i32
  }
  func.func @transform_15(%arg0: i32, %arg1: i32) -> (i32, i32) {
    %c0_i32 = arith.constant 0 : i32
    %c0_i32_0 = arith.constant 0 : i32
    %c0_i32_1 = arith.constant 0 : i32
    return %c0_i32, %c0_i32_0 : i32, i32
  }
  func.func @transform_16(%arg0: i32, %arg1: i32) -> (i32, i32) {
    %c0_i32 = arith.constant 0 : i32
    %c0_i32_0 = arith.constant 0 : i32
    %c0_i32_1 = arith.constant 0 : i32
    return %c0_i32, %c0_i32_0 : i32, i32
  }
  func.func @transform_17(%arg0: i32, %arg1: i32) -> (i32, i32) {
    %c0_i32 = arith.constant 0 : i32
    %c0_i32_0 = arith.constant 0 : i32
    %c0_i32_1 = arith.constant 0 : i32
    return %c0_i32, %c0_i32_0 : i32, i32
  }
  func.func @transform_18(%arg0: i32, %arg1: i32) -> (i32, i32) {
    %c0_i32 = arith.constant 0 : i32
    %c0_i32_0 = arith.constant 0 : i32
    %c0_i32_1 = arith.constant 0 : i32
    return %c0_i32, %c0_i32_0 : i32, i32
  }
  func.func @transform_19(%arg0: i32, %arg1: i32) -> (i32, i32) {
    %c0_i32 = arith.constant 0 : i32
    %c0_i32_0 = arith.constant 0 : i32
    %c0_i32_1 = arith.constant 0 : i32
    return %c0_i32, %c0_i32_0 : i32, i32
  }
  func.func @transform_20(%arg0: i32, %arg1: i32) -> (i32, i32) {
    %c0_i32 = arith.constant 0 : i32
    %c0_i32_0 = arith.constant 0 : i32
    %c0_i32_1 = arith.constant 0 : i32
    return %c0_i32, %c0_i32_0 : i32, i32
  }
  func.func @transform_21(%arg0: i32, %arg1: i32) -> (i32, i32) {
    %c0_i32 = arith.constant 0 : i32
    %c0_i32_0 = arith.constant 0 : i32
    %c0_i32_1 = arith.constant 0 : i32
    return %c0_i32, %c0_i32_0 : i32, i32
  }
  func.func @transform_22(%arg0: i32, %arg1: i32) -> (i32, i32) {
    %c0_i32 = arith.constant 0 : i32
    %c0_i32_0 = arith.constant 0 : i32
    %c0_i32_1 = arith.constant 0 : i32
    return %c0_i32, %c0_i32_0 : i32, i32
  }
  func.func @transform_23(%arg0: i32, %arg1: i32) -> (i32, i32) {
    %c0_i32 = arith.constant 0 : i32
    %c0_i32_0 = arith.constant 0 : i32
    %c0_i32_1 = arith.constant 0 : i32
    return %c0_i32, %c0_i32_0 : i32, i32
  }
  func.func @transform_24(%arg0: i32, %arg1: i32) -> (i32, i32) {
    %c0_i32 = arith.constant 0 : i32
    %c0_i32_0 = arith.constant 0 : i32
    %c0_i32_1 = arith.constant 0 : i32
    return %c0_i32, %c0_i32_0 : i32, i32
  }
  func.func @transform_25(%arg0: i32, %arg1: i32) -> (i32, i32) {
    %c0_i32 = arith.constant 0 : i32
    %c0_i32_0 = arith.constant 0 : i32
    %c0_i32_1 = arith.constant 0 : i32
    return %c0_i32, %c0_i32_0 : i32, i32
  }
  func.func @transform_26(%arg0: i32, %arg1: i32) -> (i32, i32) {
    %c0_i32 = arith.constant 0 : i32
    %c0_i32_0 = arith.constant 0 : i32
    %c0_i32_1 = arith.constant 0 : i32
    return %c0_i32, %c0_i32_0 : i32, i32
  }
  func.func @transform_27(%arg0: i32, %arg1: i32) -> (i32, i32, i32) {
    %c0_i32 = arith.constant 0 : i32
    %c0_i32_0 = arith.constant 0 : i32
    return %arg0, %arg1, %c0_i32 : i32, i32, i32
  }
}

</mosaic_0001>

<llo_original>
// kernel: tpu_custom_call.1
$region0: #{tpu_custom_call.1}
  #allocation0 [shape = 'u32[]', space=smem, size = 0x4, offset = 0x4, fixed_abs, tag = 'smem constant byte address 0x4 - core index']
  #allocation1 [shape = 'u32[72,128]{1,0:T(1,128)}', space=vmem, size = 0x9000, scoped, tag = 'internal scratch']
  #allocation2 [shape = 'bf16[16,256]{1,0:T(8,128)(2,1)}', space=vmem, size = 0x2000, scoped, tag = 'scratch operand']
  #allocation3 [shape = 'bf16[8,256]{1,0:T(8,128)(2,1)}', space=vmem, size = 0x1000, scoped, tag = 'scratch operand']
  #allocation4 [shape = 'f32[8,128]{1,0:T(8,128)}', space=vmem, size = 0x1000, scoped, tag = 'scratch operand']
  %s0 = inlined_call_operand.hbm [shape: f32[2,16,128], index: 0, kind: input, shape index: {}]
  %s1 = inlined_call_operand.hbm [shape: f32[2,16,128], index: 1, kind: input, shape index: {}]
  %s2 = inlined_call_operand.hbm [shape: f32[2,8,128], index: 2, kind: input, shape index: {}]
  %s3 = inlined_call_operand.hbm [shape: bf16[128,128], index: 3, kind: input, shape index: {}]
  %s4 = inlined_call_operand.hbm [shape: f32[1,128], index: 4, kind: input, shape index: {}]
  %s5 = inlined_call_operand.hbm [shape: bf16[128,256], index: 5, kind: input, shape index: {}]
  %s6 = inlined_call_operand.vmem [shape: f32[1,256], index: 6, kind: input, shape index: {}]
  %s7 = inlined_call_operand.hbm [shape: bf16[128,128], index: 7, kind: input, shape index: {}]
  %s8 = inlined_call_operand.vmem [shape: f32[1,128], index: 8, kind: input, shape index: {}]
  %s9 = inlined_call_operand.hbm [shape: bf16[128,128], index: 9, kind: input, shape index: {}]
  %s10 = inlined_call_operand.vmem [shape: f32[1,128], index: 10, kind: input, shape index: {}]
  %s11 = inlined_call_operand.hbm [shape: bf16[128,256], index: 11, kind: input, shape index: {}]
  %s12 = inlined_call_operand.vmem [shape: f32[1,256], index: 12, kind: input, shape index: {}]
  %s13 = inlined_call_operand.hbm [shape: bf16[128,128], index: 13, kind: input, shape index: {}]
  %s14 = inlined_call_operand.vmem [shape: f32[1,128], index: 14, kind: input, shape index: {}]
  %s15 = inlined_call_operand.hbm [shape: bf16[128,256], index: 15, kind: input, shape index: {}]
  %s16 = inlined_call_operand.vmem [shape: f32[1,256], index: 16, kind: input, shape index: {}]
  %s17 = inlined_call_operand.hbm [shape: bf16[256,128], index: 17, kind: input, shape index: {}]
  %s18 = inlined_call_operand.vmem [shape: f32[1,128], index: 18, kind: input, shape index: {}]
  %s19 = inlined_call_operand.vmem [shape: f32[1,128], index: 19, kind: input, shape index: {}]
  %s20 = inlined_call_operand.vmem [shape: f32[1,128], index: 20, kind: input, shape index: {}]
  %s21 = inlined_call_operand.vmem [shape: f32[1,128], index: 21, kind: input, shape index: {}]
  %s22 = inlined_call_operand.vmem [shape: f32[1,128], index: 22, kind: input, shape index: {}]
  %s23 = inlined_call_operand.vmem [shape: f32[1,128], index: 23, kind: input, shape index: {}]
  %s24 = inlined_call_operand.vmem [shape: f32[1,128], index: 24, kind: input, shape index: {}]
  %s25 = inlined_call_operand.vmem [shape: f32[1,128], index: 25, kind: input, shape index: {}]
  %s26 = inlined_call_operand.vmem [shape: f32[1,128], index: 26, kind: input, shape index: {}]
  %s27 = inlined_call_operand.hbm [shape: f32[2,16,128], index: 27, kind: output, shape index: {}]
  %s28 = sld [smem:[#allocation0]]
  $region193: #{tpu_custom_call.1} parent=0
    _
  %s30 = ssub.s32 1, %s28
  %s31 = scalar_select 0, %s30, %s28
  $region1: #{tpu_custom_call.1} parent=0
    #allocation5 [shape = 'u8[8192]{0}', space=vmem, size = 0x2000, scoped, tag = 'input window, operand 0']
    #allocation6 [shape = 's32[2]{0}', space=sflag, size = 0x8, scoped, tag = 'scoped memory for tpu_custom_call.1']
    #allocation7 [shape = 's32[2]{0}', space=sflag, size = 0x8, scoped, tag = 'scoped memory for tpu_custom_call.1']
    #allocation8 [shape = 'u8[16384]{0}', space=vmem, size = 0x4000, scoped, tag = 'input window, operand 1']
    #allocation9 [shape = 's32[2]{0}', space=sflag, size = 0x8, scoped, tag = 'scoped memory for tpu_custom_call.1']
    #allocation10 [shape = 'u8[8192]{0}', space=vmem, size = 0x2000, scoped, tag = 'input window, operand 2']
    #allocation11 [shape = 'u8[32768]{0}', space=vmem, size = 0x8000, scoped, tag = 'input window, operand 3, single buffered']
    #allocation12 [shape = 's32[1]{0}', space=sflag, size = 0x4, scoped, tag = 'scoped memory for tpu_custom_call.1']
    #allocation13 [shape = 'u8[512]{0}', space=vmem, size = 0x400, scoped, tag = 'input window, operand 4, single buffered']
    #allocation14 [shape = 'u8[65536]{0}', space=vmem, size = 0x10000, scoped, tag = 'input window, operand 5, single buffered']
    #allocation15 [shape = 's32[1]{0}', space=sflag, size = 0x4, scoped, tag = 'scoped memory for tpu_custom_call.1']
    #allocation16 [shape = 'u8[32768]{0}', space=vmem, size = 0x8000, scoped, tag = 'input window, operand 7, single buffered']
    #allocation17 [shape = 'u8[32768]{0}', space=vmem, size = 0x8000, scoped, tag = 'input window, operand 9, single buffered']
    #allocation18 [shape = 's32[1]{0}', space=sflag, size = 0x4, scoped, tag = 'scoped memory for tpu_custom_call.1']
    #allocation19 [shape = 'u8[65536]{0}', space=vmem, size = 0x10000, scoped, tag = 'input window, operand 11, single buffered']
    #allocation20 [shape = 'u8[32768]{0}', space=vmem, size = 0x8000, scoped, tag = 'input window, operand 13, single buffered']
    #allocation21 [shape = 's32[1]{0}', space=sflag, size = 0x4, scoped, tag = 'scoped memory for tpu_custom_call.1']
    #allocation22 [shape = 'u8[65536]{0}', space=vmem, size = 0x10000, scoped, tag = 'input window, operand 15, single buffered']
    #allocation23 [shape = 'u8[65536]{0}', space=vmem, size = 0x10000, scoped, tag = 'input window, operand 17, single buffered']
    #allocation24 [shape = 's32[1]{0}', space=sflag, size = 0x4, scoped, tag = 'scoped memory for tpu_custom_call.1']
    #allocation25 [shape = 'u8[8192]{0}', space=vmem, size = 0x2000, scoped, tag = 'output window, operand 0']
    %32 = vsyncpa [#allocation6], 0
    %s33 = scalar_lea.sflag [#allocation6], 1
    %34 = vsyncpa %s33, 0
    %35 = vsyncpa [#allocation9], 0
    %s36 = scalar_lea.sflag [#allocation9], 1
    %37 = vsyncpa %s36, 0
    %38 = vsyncpa [#allocation12], 0
    %39 = vsyncpa [#allocation15], 0
    %40 = vsyncpa [#allocation18], 0
    %41 = vsyncpa [#allocation21], 0
    %42 = vsyncpa [#allocation24], 0
    %43 = vsyncpa [#allocation7], 0
    %s44 = scalar_lea.sflag [#allocation7], 1
    %45 = vsyncpa %s44, 0
    loop: start=0, step=1, limit=6
    $region2: #{tpu_custom_call.1} parent=1 // loop_pre_header
      _
    $region3: #{tpu_custom_call.1} parent=1 // loop_header
      %s47 = sphi 0, %s51
      %p48 = scmp.ge.s32.totalorder %s47, 6
      %s54 = sphi 0, %s66
      %s55 = sphi 0, %s62
      %s56 = sphi 0, %s54
      %s57 = sphi 0, %s55
      %s58 = sphi 0, %s56
      %s59 = sphi 0, %s57
      %s71 = sphi 0, %s73
      %s74 = sphi 0, %s71
      %s75 = sphi 0, %s74
      %s91 = sphi 0, %s75
      %s97 = sphi 0, %s99
      %s100 = sphi 0, %s97
      %s101 = sphi 0, %s100
      %s117 = sphi 0, %s101
      %s123 = sphi 0, %s125
      %s126 = sphi 0, %s123
      %s127 = sphi 0, %s126
      %s143 = sphi 0, %s127
      %s147 = sphi 0, %s147
      %s149 = sphi 0, %s147
      %s150 = sphi 0, %s149
      %s164 = sphi 0, %s150
      %s168 = sphi 0, %s168
      %s170 = sphi 0, %s168
      %s171 = sphi 0, %s170
      %s185 = sphi 0, %s171
      %s189 = sphi 0, %s189
      %s191 = sphi 0, %s189
      %s192 = sphi 0, %s191
      %s206 = sphi 0, %s192
      %s210 = sphi 0, %s210
      %s212 = sphi 0, %s210
      %s213 = sphi 0, %s212
      %s227 = sphi 0, %s213
      %s231 = sphi 0, %s231
      %s233 = sphi 0, %s231
      %s234 = sphi 0, %s233
      %s248 = sphi 0, %s234
      %s252 = sphi 0, %s252
      %s254 = sphi 0, %s252
      %s255 = sphi 0, %s254
      %s269 = sphi 0, %s255
      %s273 = sphi 0, %s273
      %s275 = sphi 0, %s273
      %s276 = sphi 0, %s275
      %s290 = sphi 0, %s276
      %s294 = sphi 0, %s294
      %s296 = sphi 0, %s294
      %s297 = sphi 0, %s296
      %s311 = sphi 0, %s297
      %s315 = sphi 0, %s315
      %s317 = sphi 0, %s315
      %s318 = sphi 0, %s317
      %s332 = sphi 0, %s318
      %s336 = sphi 0, %s336
      %s338 = sphi 0, %s336
      %s339 = sphi 0, %s338
      %s353 = sphi 0, %s339
      %s357 = sphi 0, %s357
      %s359 = sphi 0, %s357
      %s360 = sphi 0, %s359
      %s374 = sphi 0, %s360
      %s378 = sphi 0, %s378
      %s380 = sphi 0, %s378
      %s381 = sphi 0, %s380
      %s395 = sphi 0, %s381
      %s399 = sphi 0, %s399
      %s401 = sphi 0, %s399
      %s402 = sphi 0, %s401
      %s416 = sphi 0, %s402
      %s420 = sphi 0, %s420
      %s422 = sphi 0, %s420
      %s423 = sphi 0, %s422
      %s437 = sphi 0, %s423
      %s441 = sphi 0, %s441
      %s443 = sphi 0, %s441
      %s444 = sphi 0, %s443
      %s458 = sphi 0, %s444
      %s462 = sphi 0, %s462
      %s464 = sphi 0, %s462
      %s465 = sphi 0, %s464
      %s479 = sphi 0, %s465
      %s483 = sphi 0, %s483
      %s485 = sphi 0, %s483
      %s486 = sphi 0, %s485
      %s500 = sphi 0, %s486
      %s504 = sphi 0, %s504
      %s506 = sphi 0, %s504
      %s507 = sphi 0, %s506
      %s521 = sphi 0, %s507
      %s525 = sphi 0, %s525
      %s527 = sphi 0, %s525
      %s528 = sphi 0, %s527
      %s542 = sphi 0, %s528
      %s546 = sphi 0, %s546
      %s548 = sphi 0, %s546
      %s549 = sphi 0, %s548
      %s563 = sphi 0, %s549
      %s567 = sphi 0, %s567
      %s569 = sphi 0, %s567
      %s570 = sphi 0, %s569
      %s584 = sphi 0, %s570
      %s588 = sphi 0, %s588
      %s590 = sphi 0, %s588
      %s591 = sphi 0, %s590
      %s605 = sphi 0, %s591
      %s609 = sphi 0, %s609
      %s611 = sphi 0, %s609
      %s612 = sphi 0, %s611
      %s626 = sphi 0, %s612
      %s630 = sphi 0, %s630
      %s632 = sphi 0, %s630
      %s633 = sphi 0, %s632
      %s647 = sphi 0, %s633
      %s655 = sphi 0, %s657
      %s658 = sphi 0, %s655
      %s659 = sphi 0, %s658
      %s675 = sphi 0, %s659
    $region4: #{tpu_custom_call.1} parent=1 // loop_header_branch
      %50 = sbr.rel (%p48) target = $region8
    $region5: #{tpu_custom_call.1} parent=1 // loop_body
      %s52 = ssub.s32 %s47, 1
      %s53 = ssub.s32 %s47, 2
      %s60 = sadd.s32 1, %s55
      %p61 = scmp.ge.s32.totalorder %s60, 2
      %s62 = scalar_select %p61, 0, %s60
      %s63 = sadd.s32 1, %s54
      %s64 = scalar_select %p61, %s63, %s54
      %p65 = scmp.ge.s32.totalorder %s64, 2
      %s66 = scalar_select %p65, 0, %s64
      %s67 = ssub.s32 %s54, %s66
      %s68 = ssub.s32 %s55, %s62
      %s69 = sor.u32 %s67, %s68
      %p70 = scmp.eq.s32.totalorder %s69, 0
      %s72 = sadd.s32 %s71, 1
      %s73 = scalar_select %p70, %s71, %s72
      %p76 = pneg %p70
      %p77 = scmp.eq.s32.totalorder %s47, 3
      %p78 = por %p76, %p77
      %p79 = scmp.ne.s32.totalorder %s71, %s74
      %p80 = scmp.eq.s32.totalorder %s47, 0
      %p81 = por %p79, %p80
      %p82 = scmp.ne.s32.totalorder %s71, %s74
      %p83 = scmp.eq.s32.totalorder %s52, 3
      %p84 = por %p82, %p83
      %p85 = scmp.ne.s32.totalorder %s74, %s75
      %p86 = scmp.eq.s32.totalorder %s52, 0
      %p87 = por %p85, %p86
      %p88 = scmp.ne.s32.totalorder %s74, %s75
      %p89 = scmp.eq.s32.totalorder %s53, 3
      %p90 = por %p88, %p89
      %p92 = scmp.ne.s32.totalorder %s75, %s91
      %p93 = scmp.eq.s32.totalorder %s53, 0
      %p94 = por %p92, %p93
      %s95 = ssub.s32 %s54, %s66
      %p96 = scmp.eq.s32.totalorder %s95, 0
      %s98 = sadd.s32 %s97, 1
      %s99 = scalar_select %p96, %s97, %s98
      %p102 = pneg %p96
      %p103 = scmp.eq.s32.totalorder %s47, 3
      %p104 = por %p102, %p103
      %p105 = scmp.ne.s32.totalorder %s97, %s100
      %p106 = scmp.eq.s32.totalorder %s47, 0
      %p107 = por %p105, %p106
      %p108 = scmp.ne.s32.totalorder %s97, %s100
      %p109 = scmp.eq.s32.totalorder %s52, 3
      %p110 = por %p108, %p109
      %p111 = scmp.ne.s32.totalorder %s100, %s101
      %p112 = scmp.eq.s32.totalorder %s52, 0
      %p113 = por %p111, %p112
      %p114 = scmp.ne.s32.totalorder %s100, %s101
      %p115 = scmp.eq.s32.totalorder %s53, 3
      %p116 = por %p114, %p115
      %p118 = scmp.ne.s32.totalorder %s101, %s117
      %p119 = scmp.eq.s32.totalorder %s53, 0
      %p120 = por %p118, %p119
      %s121 = ssub.s32 %s54, %s66
      %p122 = scmp.eq.s32.totalorder %s121, 0
      %s124 = sadd.s32 %s123, 1
      %s125 = scalar_select %p122, %s123, %s124
      %p128 = pneg %p122
      %p129 = scmp.eq.s32.totalorder %s47, 3
      %p130 = por %p128, %p129
      %p131 = scmp.ne.s32.totalorder %s123, %s126
      %p132 = scmp.eq.s32.totalorder %s47, 0
      %p133 = por %p131, %p132
      %p134 = scmp.ne.s32.totalorder %s123, %s126
      %p135 = scmp.eq.s32.totalorder %s52, 3
      %p136 = por %p134, %p135
      %p137 = scmp.ne.s32.totalorder %s126, %s127
      %p138 = scmp.eq.s32.totalorder %s52, 0
      %p139 = por %p137, %p138
      %p140 = scmp.ne.s32.totalorder %s126, %s127
      %p141 = scmp.eq.s32.totalorder %s53, 3
      %p142 = por %p140, %p141
      %p144 = scmp.ne.s32.totalorder %s127, %s143
      %p145 = scmp.eq.s32.totalorder %s53, 0
      %p146 = por %p144, %p145
      %s148 = sadd.s32 %s147, 1
      %p151 = scmp.eq.s32.totalorder %s47, 3
      %p152 = scmp.ne.s32.totalorder %s147, %s149
      %p153 = scmp.eq.s32.totalorder %s47, 0
      %p154 = por %p152, %p153
      %p155 = scmp.ne.s32.totalorder %s147, %s149
      %p156 = scmp.eq.s32.totalorder %s52, 3
      %p157 = por %p155, %p156
      %p158 = scmp.ne.s32.totalorder %s149, %s150
      %p159 = scmp.eq.s32.totalorder %s52, 0
      %p160 = por %p158, %p159
      %p161 = scmp.ne.s32.totalorder %s149, %s150
      %p162 = scmp.eq.s32.totalorder %s53, 3
      %p163 = por %p161, %p162
      %p165 = scmp.ne.s32.totalorder %s150, %s164
      %p166 = scmp.eq.s32.totalorder %s53, 0
      %p167 = por %p165, %p166
      %s169 = sadd.s32 %s168, 1
      %p172 = scmp.eq.s32.totalorder %s47, 3
      %p173 = scmp.ne.s32.totalorder %s168, %s170
      %p174 = scmp.eq.s32.totalorder %s47, 0
      %p175 = por %p173, %p174
      %p176 = scmp.ne.s32.totalorder %s168, %s170
      %p177 = scmp.eq.s32.totalorder %s52, 3
      %p178 = por %p176, %p177
      %p179 = scmp.ne.s32.totalorder %s170, %s171
      %p180 = scmp.eq.s32.totalorder %s52, 0
      %p181 = por %p179, %p180
      %p182 = scmp.ne.s32.totalorder %s170, %s171
      %p183 = scmp.eq.s32.totalorder %s53, 3
      %p184 = por %p182, %p183
      %p186 = scmp.ne.s32.totalorder %s171, %s185
      %p187 = scmp.eq.s32.totalorder %s53, 0
      %p188 = por %p186, %p187
      %s190 = sadd.s32 %s189, 1
      %p193 = scmp.eq.s32.totalorder %s47, 3
      %p194 = scmp.ne.s32.totalorder %s189, %s191
      %p195 = scmp.eq.s32.totalorder %s47, 0
      %p196 = por %p194, %p195
      %p197 = scmp.ne.s32.totalorder %s189, %s191
      %p198 = scmp.eq.s32.totalorder %s52, 3
      %p199 = por %p197, %p198
      %p200 = scmp.ne.s32.totalorder %s191, %s192
      %p201 = scmp.eq.s32.totalorder %s52, 0
      %p202 = por %p200, %p201
      %p203 = scmp.ne.s32.totalorder %s191, %s192
      %p204 = scmp.eq.s32.totalorder %s53, 3
      %p205 = por %p203, %p204
      %p207 = scmp.ne.s32.totalorder %s192, %s206
      %p208 = scmp.eq.s32.totalorder %s53, 0
      %p209 = por %p207, %p208
      %s211 = sadd.s32 %s210, 1
      %p214 = scmp.eq.s32.totalorder %s47, 3
      %p215 = scmp.ne.s32.totalorder %s210, %s212
      %p216 = scmp.eq.s32.totalorder %s47, 0
      %p217 = por %p215, %p216
      %p218 = scmp.ne.s32.totalorder %s210, %s212
      %p219 = scmp.eq.s32.totalorder %s52, 3
      %p220 = por %p218, %p219
      %p221 = scmp.ne.s32.totalorder %s212, %s213
      %p222 = scmp.eq.s32.totalorder %s52, 0
      %p223 = por %p221, %p222
      %p224 = scmp.ne.s32.totalorder %s212, %s213
      %p225 = scmp.eq.s32.totalorder %s53, 3
      %p226 = por %p224, %p225
      %p228 = scmp.ne.s32.totalorder %s213, %s227
      %p229 = scmp.eq.s32.totalorder %s53, 0
      %p230 = por %p228, %p229
      %s232 = sadd.s32 %s231, 1
      %p235 = scmp.eq.s32.totalorder %s47, 3
      %p236 = scmp.ne.s32.totalorder %s231, %s233
      %p237 = scmp.eq.s32.totalorder %s47, 0
      %p238 = por %p236, %p237
      %p239 = scmp.ne.s32.totalorder %s231, %s233
      %p240 = scmp.eq.s32.totalorder %s52, 3
      %p241 = por %p239, %p240
      %p242 = scmp.ne.s32.totalorder %s233, %s234
      %p243 = scmp.eq.s32.totalorder %s52, 0
      %p244 = por %p242, %p243
      %p245 = scmp.ne.s32.totalorder %s233, %s234
      %p246 = scmp.eq.s32.totalorder %s53, 3
      %p247 = por %p245, %p246
      %p249 = scmp.ne.s32.totalorder %s234, %s248
      %p250 = scmp.eq.s32.totalorder %s53, 0
      %p251 = por %p249, %p250
      %s253 = sadd.s32 %s252, 1
      %p256 = scmp.eq.s32.totalorder %s47, 3
      %p257 = scmp.ne.s32.totalorder %s252, %s254
      %p258 = scmp.eq.s32.totalorder %s47, 0
      %p259 = por %p257, %p258
      %p260 = scmp.ne.s32.totalorder %s252, %s254
      %p261 = scmp.eq.s32.totalorder %s52, 3
      %p262 = por %p260, %p261
      %p263 = scmp.ne.s32.totalorder %s254, %s255
      %p264 = scmp.eq.s32.totalorder %s52, 0
      %p265 = por %p263, %p264
      %p266 = scmp.ne.s32.totalorder %s254, %s255
      %p267 = scmp.eq.s32.totalorder %s53, 3
      %p268 = por %p266, %p267
      %p270 = scmp.ne.s32.totalorder %s255, %s269
      %p271 = scmp.eq.s32.totalorder %s53, 0
      %p272 = por %p270, %p271
      %s274 = sadd.s32 %s273, 1
      %p277 = scmp.eq.s32.totalorder %s47, 3
      %p278 = scmp.ne.s32.totalorder %s273, %s275
      %p279 = scmp.eq.s32.totalorder %s47, 0
      %p280 = por %p278, %p279
      %p281 = scmp.ne.s32.totalorder %s273, %s275
      %p282 = scmp.eq.s32.totalorder %s52, 3
      %p283 = por %p281, %p282
      %p284 = scmp.ne.s32.totalorder %s275, %s276
      %p285 = scmp.eq.s32.totalorder %s52, 0
      %p286 = por %p284, %p285
      %p287 = scmp.ne.s32.totalorder %s275, %s276
      %p288 = scmp.eq.s32.totalorder %s53, 3
      %p289 = por %p287, %p288
      %p291 = scmp.ne.s32.totalorder %s276, %s290
      %p292 = scmp.eq.s32.totalorder %s53, 0
      %p293 = por %p291, %p292
      %s295 = sadd.s32 %s294, 1
      %p298 = scmp.eq.s32.totalorder %s47, 3
      %p299 = scmp.ne.s32.totalorder %s294, %s296
      %p300 = scmp.eq.s32.totalorder %s47, 0
      %p301 = por %p299, %p300
      %p302 = scmp.ne.s32.totalorder %s294, %s296
      %p303 = scmp.eq.s32.totalorder %s52, 3
      %p304 = por %p302, %p303
      %p305 = scmp.ne.s32.totalorder %s296, %s297
      %p306 = scmp.eq.s32.totalorder %s52, 0
      %p307 = por %p305, %p306
      %p308 = scmp.ne.s32.totalorder %s296, %s297
      %p309 = scmp.eq.s32.totalorder %s53, 3
      %p310 = por %p308, %p309
      %p312 = scmp.ne.s32.totalorder %s297, %s311
      %p313 = scmp.eq.s32.totalorder %s53, 0
      %p314 = por %p312, %p313
      %s316 = sadd.s32 %s315, 1
      %p319 = scmp.eq.s32.totalorder %s47, 3
      %p320 = scmp.ne.s32.totalorder %s315, %s317
      %p321 = scmp.eq.s32.totalorder %s47, 0
      %p322 = por %p320, %p321
      %p323 = scmp.ne.s32.totalorder %s315, %s317
      %p324 = scmp.eq.s32.totalorder %s52, 3
      %p325 = por %p323, %p324
      %p326 = scmp.ne.s32.totalorder %s317, %s318
      %p327 = scmp.eq.s32.totalorder %s52, 0
      %p328 = por %p326, %p327
      %p329 = scmp.ne.s32.totalorder %s317, %s318
      %p330 = scmp.eq.s32.totalorder %s53, 3
      %p331 = por %p329, %p330
      %p333 = scmp.ne.s32.totalorder %s318, %s332
      %p334 = scmp.eq.s32.totalorder %s53, 0
      %p335 = por %p333, %p334
      %s337 = sadd.s32 %s336, 1
      %p340 = scmp.eq.s32.totalorder %s47, 3
      %p341 = scmp.ne.s32.totalorder %s336, %s338
      %p342 = scmp.eq.s32.totalorder %s47, 0
      %p343 = por %p341, %p342
      %p344 = scmp.ne.s32.totalorder %s336, %s338
      %p345 = scmp.eq.s32.totalorder %s52, 3
      %p346 = por %p344, %p345
      %p347 = scmp.ne.s32.totalorder %s338, %s339
      %p348 = scmp.eq.s32.totalorder %s52, 0
      %p349 = por %p347, %p348
      %p350 = scmp.ne.s32.totalorder %s338, %s339
      %p351 = scmp.eq.s32.totalorder %s53, 3
      %p352 = por %p350, %p351
      %p354 = scmp.ne.s32.totalorder %s339, %s353
      %p355 = scmp.eq.s32.totalorder %s53, 0
      %p356 = por %p354, %p355
      %s358 = sadd.s32 %s357, 1
      %p361 = scmp.eq.s32.totalorder %s47, 3
      %p362 = scmp.ne.s32.totalorder %s357, %s359
      %p363 = scmp.eq.s32.totalorder %s47, 0
      %p364 = por %p362, %p363
      %p365 = scmp.ne.s32.totalorder %s357, %s359
      %p366 = scmp.eq.s32.totalorder %s52, 3
      %p367 = por %p365, %p366
      %p368 = scmp.ne.s32.totalorder %s359, %s360
      %p369 = scmp.eq.s32.totalorder %s52, 0
      %p370 = por %p368, %p369
      %p371 = scmp.ne.s32.totalorder %s359, %s360
      %p372 = scmp.eq.s32.totalorder %s53, 3
      %p373 = por %p371, %p372
      %p375 = scmp.ne.s32.totalorder %s360, %s374
      %p376 = scmp.eq.s32.totalorder %s53, 0
      %p377 = por %p375, %p376
      %s379 = sadd.s32 %s378, 1
      %p382 = scmp.eq.s32.totalorder %s47, 3
      %p383 = scmp.ne.s32.totalorder %s378, %s380
      %p384 = scmp.eq.s32.totalorder %s47, 0
      %p385 = por %p383, %p384
      %p386 = scmp.ne.s32.totalorder %s378, %s380
      %p387 = scmp.eq.s32.totalorder %s52, 3
      %p388 = por %p386, %p387
      %p389 = scmp.ne.s32.totalorder %s380, %s381
      %p390 = scmp.eq.s32.totalorder %s52, 0
      %p391 = por %p389, %p390
      %p392 = scmp.ne.s32.totalorder %s380, %s381
      %p393 = scmp.eq.s32.totalorder %s53, 3
      %p394 = por %p392, %p393
      %p396 = scmp.ne.s32.totalorder %s381, %s395
      %p397 = scmp.eq.s32.totalorder %s53, 0
      %p398 = por %p396, %p397
      %s400 = sadd.s32 %s399, 1
      %p403 = scmp.eq.s32.totalorder %s47, 3
      %p404 = scmp.ne.s32.totalorder %s399, %s401
      %p405 = scmp.eq.s32.totalorder %s47, 0
      %p406 = por %p404, %p405
      %p407 = scmp.ne.s32.totalorder %s399, %s401
      %p408 = scmp.eq.s32.totalorder %s52, 3
      %p409 = por %p407, %p408
      %p410 = scmp.ne.s32.totalorder %s401, %s402
      %p411 = scmp.eq.s32.totalorder %s52, 0
      %p412 = por %p410, %p411
      %p413 = scmp.ne.s32.totalorder %s401, %s402
      %p414 = scmp.eq.s32.totalorder %s53, 3
      %p415 = por %p413, %p414
      %p417 = scmp.ne.s32.totalorder %s402, %s416
      %p418 = scmp.eq.s32.totalorder %s53, 0
      %p419 = por %p417, %p418
      %s421 = sadd.s32 %s420, 1
      %p424 = scmp.eq.s32.totalorder %s47, 3
      %p425 = scmp.ne.s32.totalorder %s420, %s422
      %p426 = scmp.eq.s32.totalorder %s47, 0
      %p427 = por %p425, %p426
      %p428 = scmp.ne.s32.totalorder %s420, %s422
      %p429 = scmp.eq.s32.totalorder %s52, 3
      %p430 = por %p428, %p429
      %p431 = scmp.ne.s32.totalorder %s422, %s423
      %p432 = scmp.eq.s32.totalorder %s52, 0
      %p433 = por %p431, %p432
      %p434 = scmp.ne.s32.totalorder %s422, %s423
      %p435 = scmp.eq.s32.totalorder %s53, 3
      %p436 = por %p434, %p435
      %p438 = scmp.ne.s32.totalorder %s423, %s437
      %p439 = scmp.eq.s32.totalorder %s53, 0
      %p440 = por %p438, %p439
      %s442 = sadd.s32 %s441, 1
      %p445 = scmp.eq.s32.totalorder %s47, 3
      %p446 = scmp.ne.s32.totalorder %s441, %s443
      %p447 = scmp.eq.s32.totalorder %s47, 0
      %p448 = por %p446, %p447
      %p449 = scmp.ne.s32.totalorder %s441, %s443
      %p450 = scmp.eq.s32.totalorder %s52, 3
      %p451 = por %p449, %p450
      %p452 = scmp.ne.s32.totalorder %s443, %s444
      %p453 = scmp.eq.s32.totalorder %s52, 0
      %p454 = por %p452, %p453
      %p455 = scmp.ne.s32.totalorder %s443, %s444
      %p456 = scmp.eq.s32.totalorder %s53, 3
      %p457 = por %p455, %p456
      %p459 = scmp.ne.s32.totalorder %s444, %s458
      %p460 = scmp.eq.s32.totalorder %s53, 0
      %p461 = por %p459, %p460
      %s463 = sadd.s32 %s462, 1
      %p466 = scmp.eq.s32.totalorder %s47, 3
      %p467 = scmp.ne.s32.totalorder %s462, %s464
      %p468 = scmp.eq.s32.totalorder %s47, 0
      %p469 = por %p467, %p468
      %p470 = scmp.ne.s32.totalorder %s462, %s464
      %p471 = scmp.eq.s32.totalorder %s52, 3
      %p472 = por %p470, %p471
      %p473 = scmp.ne.s32.totalorder %s464, %s465
      %p474 = scmp.eq.s32.totalorder %s52, 0
      %p475 = por %p473, %p474
      %p476 = scmp.ne.s32.totalorder %s464, %s465
      %p477 = scmp.eq.s32.totalorder %s53, 3
      %p478 = por %p476, %p477
      %p480 = scmp.ne.s32.totalorder %s465, %s479
      %p481 = scmp.eq.s32.totalorder %s53, 0
      %p482 = por %p480, %p481
      %s484 = sadd.s32 %s483, 1
      %p487 = scmp.eq.s32.totalorder %s47, 3
      %p488 = scmp.ne.s32.totalorder %s483, %s485
      %p489 = scmp.eq.s32.totalorder %s47, 0
      %p490 = por %p488, %p489
      %p491 = scmp.ne.s32.totalorder %s483, %s485
      %p492 = scmp.eq.s32.totalorder %s52, 3
      %p493 = por %p491, %p492
      %p494 = scmp.ne.s32.totalorder %s485, %s486
      %p495 = scmp.eq.s32.totalorder %s52, 0
      %p496 = por %p494, %p495
      %p497 = scmp.ne.s32.totalorder %s485, %s486
      %p498 = scmp.eq.s32.totalorder %s53, 3
      %p499 = por %p497, %p498
      %p501 = scmp.ne.s32.totalorder %s486, %s500
      %p502 = scmp.eq.s32.totalorder %s53, 0
      %p503 = por %p501, %p502
      %s505 = sadd.s32 %s504, 1
      %p508 = scmp.eq.s32.totalorder %s47, 3
      %p509 = scmp.ne.s32.totalorder %s504, %s506
      %p510 = scmp.eq.s32.totalorder %s47, 0
      %p511 = por %p509, %p510
      %p512 = scmp.ne.s32.totalorder %s504, %s506
      %p513 = scmp.eq.s32.totalorder %s52, 3
      %p514 = por %p512, %p513
      %p515 = scmp.ne.s32.totalorder %s506, %s507
      %p516 = scmp.eq.s32.totalorder %s52, 0
      %p517 = por %p515, %p516
      %p518 = scmp.ne.s32.totalorder %s506, %s507
      %p519 = scmp.eq.s32.totalorder %s53, 3
      %p520 = por %p518, %p519
      %p522 = scmp.ne.s32.totalorder %s507, %s521
      %p523 = scmp.eq.s32.totalorder %s53, 0
      %p524 = por %p522, %p523
      %s526 = sadd.s32 %s525, 1
      %p529 = scmp.eq.s32.totalorder %s47, 3
      %p530 = scmp.ne.s32.totalorder %s525, %s527
      %p531 = scmp.eq.s32.totalorder %s47, 0
      %p532 = por %p530, %p531
      %p533 = scmp.ne.s32.totalorder %s525, %s527
      %p534 = scmp.eq.s32.totalorder %s52, 3
      %p535 = por %p533, %p534
      %p536 = scmp.ne.s32.totalorder %s527, %s528
      %p537 = scmp.eq.s32.totalorder %s52, 0
      %p538 = por %p536, %p537
      %p539 = scmp.ne.s32.totalorder %s527, %s528
      %p540 = scmp.eq.s32.totalorder %s53, 3
      %p541 = por %p539, %p540
      %p543 = scmp.ne.s32.totalorder %s528, %s542
      %p544 = scmp.eq.s32.totalorder %s53, 0
      %p545 = por %p543, %p544
      %s547 = sadd.s32 %s546, 1
      %p550 = scmp.eq.s32.totalorder %s47, 3
      %p551 = scmp.ne.s32.totalorder %s546, %s548
      %p552 = scmp.eq.s32.totalorder %s47, 0
      %p553 = por %p551, %p552
      %p554 = scmp.ne.s32.totalorder %s546, %s548
      %p555 = scmp.eq.s32.totalorder %s52, 3
      %p556 = por %p554, %p555
      %p557 = scmp.ne.s32.totalorder %s548, %s549
      %p558 = scmp.eq.s32.totalorder %s52, 0
      %p559 = por %p557, %p558
      %p560 = scmp.ne.s32.totalorder %s548, %s549
      %p561 = scmp.eq.s32.totalorder %s53, 3
      %p562 = por %p560, %p561
      %p564 = scmp.ne.s32.totalorder %s549, %s563
      %p565 = scmp.eq.s32.totalorder %s53, 0
      %p566 = por %p564, %p565
      %s568 = sadd.s32 %s567, 1
      %p571 = scmp.eq.s32.totalorder %s47, 3
      %p572 = scmp.ne.s32.totalorder %s567, %s569
      %p573 = scmp.eq.s32.totalorder %s47, 0
      %p574 = por %p572, %p573
      %p575 = scmp.ne.s32.totalorder %s567, %s569
      %p576 = scmp.eq.s32.totalorder %s52, 3
      %p577 = por %p575, %p576
      %p578 = scmp.ne.s32.totalorder %s569, %s570
      %p579 = scmp.eq.s32.totalorder %s52, 0
      %p580 = por %p578, %p579
      %p581 = scmp.ne.s32.totalorder %s569, %s570
      %p582 = scmp.eq.s32.totalorder %s53, 3
      %p583 = por %p581, %p582
      %p585 = scmp.ne.s32.totalorder %s570, %s584
      %p586 = scmp.eq.s32.totalorder %s53, 0
      %p587 = por %p585, %p586
      %s589 = sadd.s32 %s588, 1
      %p592 = scmp.eq.s32.totalorder %s47, 3
      %p593 = scmp.ne.s32.totalorder %s588, %s590
      %p594 = scmp.eq.s32.totalorder %s47, 0
      %p595 = por %p593, %p594
      %p596 = scmp.ne.s32.totalorder %s588, %s590
      %p597 = scmp.eq.s32.totalorder %s52, 3
      %p598 = por %p596, %p597
      %p599 = scmp.ne.s32.totalorder %s590, %s591
      %p600 = scmp.eq.s32.totalorder %s52, 0
      %p601 = por %p599, %p600
      %p602 = scmp.ne.s32.totalorder %s590, %s591
      %p603 = scmp.eq.s32.totalorder %s53, 3
      %p604 = por %p602, %p603
      %p606 = scmp.ne.s32.totalorder %s591, %s605
      %p607 = scmp.eq.s32.totalorder %s53, 0
      %p608 = por %p606, %p607
      %s610 = sadd.s32 %s609, 1
      %p613 = scmp.eq.s32.totalorder %s47, 3
      %p614 = scmp.ne.s32.totalorder %s609, %s611
      %p615 = scmp.eq.s32.totalorder %s47, 0
      %p616 = por %p614, %p615
      %p617 = scmp.ne.s32.totalorder %s609, %s611
      %p618 = scmp.eq.s32.totalorder %s52, 3
      %p619 = por %p617, %p618
      %p620 = scmp.ne.s32.totalorder %s611, %s612
      %p621 = scmp.eq.s32.totalorder %s52, 0
      %p622 = por %p620, %p621
      %p623 = scmp.ne.s32.totalorder %s611, %s612
      %p624 = scmp.eq.s32.totalorder %s53, 3
      %p625 = por %p623, %p624
      %p627 = scmp.ne.s32.totalorder %s612, %s626
      %p628 = scmp.eq.s32.totalorder %s53, 0
      %p629 = por %p627, %p628
      %s631 = sadd.s32 %s630, 1
      %p634 = scmp.eq.s32.totalorder %s47, 3
      %p635 = scmp.ne.s32.totalorder %s630, %s632
      %p636 = scmp.eq.s32.totalorder %s47, 0
      %p637 = por %p635, %p636
      %p638 = scmp.ne.s32.totalorder %s630, %s632
      %p639 = scmp.eq.s32.totalorder %s52, 3
      %p640 = por %p638, %p639
      %p641 = scmp.ne.s32.totalorder %s632, %s633
      %p642 = scmp.eq.s32.totalorder %s52, 0
      %p643 = por %p641, %p642
      %p644 = scmp.ne.s32.totalorder %s632, %s633
      %p645 = scmp.eq.s32.totalorder %s53, 3
      %p646 = por %p644, %p645
      %p648 = scmp.ne.s32.totalorder %s633, %s647
      %p649 = scmp.eq.s32.totalorder %s53, 0
      %p650 = por %p648, %p649
      %s651 = ssub.s32 %s54, %s66
      %s652 = ssub.s32 %s55, %s62
      %s653 = sor.u32 %s651, %s652
      %p654 = scmp.eq.s32.totalorder %s653, 0
      %s656 = sadd.s32 %s655, 1
      %s657 = scalar_select %p654, %s655, %s656
      %p660 = pneg %p654
      %p661 = scmp.eq.s32.totalorder %s47, 3
      %p662 = por %p660, %p661
      %p663 = scmp.ne.s32.totalorder %s655, %s658
      %p664 = scmp.eq.s32.totalorder %s47, 0
      %p665 = por %p663, %p664
      %p666 = scmp.ne.s32.totalorder %s655, %s658
      %p667 = scmp.eq.s32.totalorder %s52, 3
      %p668 = por %p666, %p667
      %p669 = scmp.ne.s32.totalorder %s658, %s659
      %p670 = scmp.eq.s32.totalorder %s52, 0
      %p671 = por %p669, %p670
      %p672 = scmp.ne.s32.totalorder %s658, %s659
      %p673 = scmp.eq.s32.totalorder %s53, 3
      %p674 = por %p672, %p673
      %p676 = scmp.ne.s32.totalorder %s659, %s675
      %p677 = scmp.eq.s32.totalorder %s53, 0
      %p678 = por %p676, %p677
      %p679 = scmp.le.s32.totalorder 1, %s47
      %p680 = scmp.lt.s32.totalorder %s47, 5
      %p681 = pnand %p679, %p680
      %p682 = pneg %p681
      // Predicated region
      $region9: #{tpu_custom_call.1} parent=5 // pred_check
        _
      $region10: #{tpu_custom_call.1} parent=5 // pred_check_branch
        %684 = sbr.rel (%p681) target = $region12
      $region11: #{tpu_custom_call.1} parent=5 // pred_region
        %s685 = ssub.s32 %s47, 1
        // Predicated region
        $region13: #{tpu_custom_call.1} parent=11 // pred_check
          %p686 = pneg %p160
        $region14: #{tpu_custom_call.1} parent=11 // pred_check_branch
          %688 = sbr.rel (%p686) target = $region16
        $region15: #{tpu_custom_call.1} parent=11 // pred_region
          %690 = vsyncadd [#allocation12], 0
          %s691 = sshll.u32 %s3, 4
          %s692 = int_to_ptr.hbm [resolvable:$true] %s691
          %s693 = sshll.u32 [#allocation11], 4
          %s694 = int_to_ptr.vmem [resolvable:$true] %s693
          %699 = dma.hbm_to_vmem [thread:$0]  %s692, 1024, %s694, [#allocation12], 64, 64, 4
        $region16: #{tpu_custom_call.1} parent=11 // pred_fallthru
          _
        // Predicated region
        $region17: #{tpu_custom_call.1} parent=11 // pred_check
          %p700 = pneg %p181
        $region18: #{tpu_custom_call.1} parent=11 // pred_check_branch
          %702 = sbr.rel (%p700) target = $region20
        $region19: #{tpu_custom_call.1} parent=11 // pred_region
          %704 = vsyncadd [#allocation12], 0
          %s706 = sshll.u32 %s4, 4
          %s707 = int_to_ptr.hbm [resolvable:$true] %s706
          %s708 = sshll.u32 [#allocation13], 4
          %s709 = int_to_ptr.vmem [resolvable:$true] %s708
          %711 = dma.hbm_to_vmem [thread:$0]  %s707, 16, %s709, [#allocation12]
        $region20: #{tpu_custom_call.1} parent=11 // pred_fallthru
          _
        // Predicated region
        $region21: #{tpu_custom_call.1} parent=11 // pred_check
          %p712 = pneg %p202
        $region22: #{tpu_custom_call.1} parent=11 // pred_check_branch
          %714 = sbr.rel (%p712) target = $region24
        $region23: #{tpu_custom_call.1} parent=11 // pred_region
          %716 = vsyncadd [#allocation15], 0
          %s717 = sshll.u32 %s5, 4
          %s718 = int_to_ptr.hbm [resolvable:$true] %s717
          %s719 = sshll.u32 [#allocation14], 4
          %s720 = int_to_ptr.vmem [resolvable:$true] %s719
          %725 = dma.hbm_to_vmem [thread:$0]  %s718, 2048, %s720, [#allocation15], 128, 128, 8
        $region24: #{tpu_custom_call.1} parent=11 // pred_fallthru
          _
        // Predicated region
        $region25: #{tpu_custom_call.1} parent=11 // pred_check
          %p726 = pneg %p223
        $region26: #{tpu_custom_call.1} parent=11 // pred_check_branch
          %728 = sbr.rel (%p726) target = $region28
        $region27: #{tpu_custom_call.1} parent=11 // pred_region
          _
        $region28: #{tpu_custom_call.1} parent=11 // pred_fallthru
          _
        // Predicated region
        $region29: #{tpu_custom_call.1} parent=11 // pred_check
          %p729 = pneg %p244
        $region30: #{tpu_custom_call.1} parent=11 // pred_check_branch
          %731 = sbr.rel (%p729) target = $region32
        $region31: #{tpu_custom_call.1} parent=11 // pred_region
          %733 = vsyncadd [#allocation15], 0
          %s734 = sshll.u32 %s7, 4
          %s735 = int_to_ptr.hbm [resolvable:$true] %s734
          %s736 = sshll.u32 [#allocation16], 4
          %s737 = int_to_ptr.vmem [resolvable:$true] %s736
          %742 = dma.hbm_to_vmem [thread:$0]  %s735, 1024, %s737, [#allocation15], 64, 64, 4
        $region32: #{tpu_custom_call.1} parent=11 // pred_fallthru
          _
        // Predicated region
        $region33: #{tpu_custom_call.1} parent=11 // pred_check
          %p743 = pneg %p265
        $region34: #{tpu_custom_call.1} parent=11 // pred_check_branch
          %745 = sbr.rel (%p743) target = $region36
        $region35: #{tpu_custom_call.1} parent=11 // pred_region
          _
        $region36: #{tpu_custom_call.1} parent=11 // pred_fallthru
          _
        // Predicated region
        $region37: #{tpu_custom_call.1} parent=11 // pred_check
          %p746 = pneg %p286
        $region38: #{tpu_custom_call.1} parent=11 // pred_check_branch
          %748 = sbr.rel (%p746) target = $region40
        $region39: #{tpu_custom_call.1} parent=11 // pred_region
          %750 = vsyncadd [#allocation18], 0
          %s751 = sshll.u32 %s9, 4
          %s752 = int_to_ptr.hbm [resolvable:$true] %s751
          %s753 = sshll.u32 [#allocation17], 4
          %s754 = int_to_ptr.vmem [resolvable:$true] %s753
          %759 = dma.hbm_to_vmem [thread:$0]  %s752, 1024, %s754, [#allocation18], 64, 64, 4
        $region40: #{tpu_custom_call.1} parent=11 // pred_fallthru
          _
        // Predicated region
        $region41: #{tpu_custom_call.1} parent=11 // pred_check
          %p760 = pneg %p307
        $region42: #{tpu_custom_call.1} parent=11 // pred_check_branch
          %762 = sbr.rel (%p760) target = $region44
        $region43: #{tpu_custom_call.1} parent=11 // pred_region
          _
        $region44: #{tpu_custom_call.1} parent=11 // pred_fallthru
          _
        // Predicated region
        $region45: #{tpu_custom_call.1} parent=11 // pred_check
          %p763 = pneg %p328
        $region46: #{tpu_custom_call.1} parent=11 // pred_check_branch
          %765 = sbr.rel (%p763) target = $region48
        $region47: #{tpu_custom_call.1} parent=11 // pred_region
          %767 = vsyncadd [#allocation18], 0
          %s768 = sshll.u32 %s11, 4
          %s769 = int_to_ptr.hbm [resolvable:$true] %s768
          %s770 = sshll.u32 [#allocation19], 4
          %s771 = int_to_ptr.vmem [resolvable:$true] %s770
          %776 = dma.hbm_to_vmem [thread:$0]  %s769, 2048, %s771, [#allocation18], 128, 128, 8
        $region48: #{tpu_custom_call.1} parent=11 // pred_fallthru
          _
        // Predicated region
        $region49: #{tpu_custom_call.1} parent=11 // pred_check
          %p777 = pneg %p349
        $region50: #{tpu_custom_call.1} parent=11 // pred_check_branch
          %779 = sbr.rel (%p777) target = $region52
        $region51: #{tpu_custom_call.1} parent=11 // pred_region
          _
        $region52: #{tpu_custom_call.1} parent=11 // pred_fallthru
          _
        // Predicated region
        $region53: #{tpu_custom_call.1} parent=11 // pred_check
          %p780 = pneg %p370
        $region54: #{tpu_custom_call.1} parent=11 // pred_check_branch
          %782 = sbr.rel (%p780) target = $region56
        $region55: #{tpu_custom_call.1} parent=11 // pred_region
          %784 = vsyncadd [#allocation21], 0
          %s785 = sshll.u32 %s13, 4
          %s786 = int_to_ptr.hbm [resolvable:$true] %s785
          %s787 = sshll.u32 [#allocation20], 4
          %s788 = int_to_ptr.vmem [resolvable:$true] %s787
          %793 = dma.hbm_to_vmem [thread:$0]  %s786, 1024, %s788, [#allocation21], 64, 64, 4
        $region56: #{tpu_custom_call.1} parent=11 // pred_fallthru
          _
        // Predicated region
        $region57: #{tpu_custom_call.1} parent=11 // pred_check
          %p794 = pneg %p391
        $region58: #{tpu_custom_call.1} parent=11 // pred_check_branch
          %796 = sbr.rel (%p794) target = $region60
        $region59: #{tpu_custom_call.1} parent=11 // pred_region
          _
        $region60: #{tpu_custom_call.1} parent=11 // pred_fallthru
          _
        // Predicated region
        $region61: #{tpu_custom_call.1} parent=11 // pred_check
          %p797 = pneg %p412
        $region62: #{tpu_custom_call.1} parent=11 // pred_check_branch
          %799 = sbr.rel (%p797) target = $region64
        $region63: #{tpu_custom_call.1} parent=11 // pred_region
          %801 = vsyncadd [#allocation21], 0
          %s802 = sshll.u32 %s15, 4
          %s803 = int_to_ptr.hbm [resolvable:$true] %s802
          %s804 = sshll.u32 [#allocation22], 4
          %s805 = int_to_ptr.vmem [resolvable:$true] %s804
          %810 = dma.hbm_to_vmem [thread:$0]  %s803, 2048, %s805, [#allocation21], 128, 128, 8
        $region64: #{tpu_custom_call.1} parent=11 // pred_fallthru
          _
        // Predicated region
        $region65: #{tpu_custom_call.1} parent=11 // pred_check
          %p811 = pneg %p433
        $region66: #{tpu_custom_call.1} parent=11 // pred_check_branch
          %813 = sbr.rel (%p811) target = $region68
        $region67: #{tpu_custom_call.1} parent=11 // pred_region
          _
        $region68: #{tpu_custom_call.1} parent=11 // pred_fallthru
          _
        // Predicated region
        $region69: #{tpu_custom_call.1} parent=11 // pred_check
          %p814 = pneg %p454
        $region70: #{tpu_custom_call.1} parent=11 // pred_check_branch
          %816 = sbr.rel (%p814) target = $region72
        $region71: #{tpu_custom_call.1} parent=11 // pred_region
          %818 = vsyncadd [#allocation24], 0
          %s819 = sshll.u32 %s17, 4
          %s820 = int_to_ptr.hbm [resolvable:$true] %s819
          %s821 = sshll.u32 [#allocation23], 4
          %s822 = int_to_ptr.vmem [resolvable:$true] %s821
          %827 = dma.hbm_to_vmem [thread:$0]  %s820, 2048, %s822, [#allocation24], 64, 64, 4
        $region72: #{tpu_custom_call.1} parent=11 // pred_fallthru
          _
        // Predicated region
        $region73: #{tpu_custom_call.1} parent=11 // pred_check
          %p828 = pneg %p475
        $region74: #{tpu_custom_call.1} parent=11 // pred_check_branch
          %830 = sbr.rel (%p828) target = $region76
        $region75: #{tpu_custom_call.1} parent=11 // pred_region
          _
        $region76: #{tpu_custom_call.1} parent=11 // pred_fallthru
          _
        // Predicated region
        $region77: #{tpu_custom_call.1} parent=11 // pred_check
          %p831 = pneg %p496
        $region78: #{tpu_custom_call.1} parent=11 // pred_check_branch
          %833 = sbr.rel (%p831) target = $region80
        $region79: #{tpu_custom_call.1} parent=11 // pred_region
          _
        $region80: #{tpu_custom_call.1} parent=11 // pred_fallthru
          _
        // Predicated region
        $region81: #{tpu_custom_call.1} parent=11 // pred_check
          %p834 = pneg %p517
        $region82: #{tpu_custom_call.1} parent=11 // pred_check_branch
          %836 = sbr.rel (%p834) target = $region84
        $region83: #{tpu_custom_call.1} parent=11 // pred_region
          _
        $region84: #{tpu_custom_call.1} parent=11 // pred_fallthru
          _
        // Predicated region
        $region85: #{tpu_custom_call.1} parent=11 // pred_check
          %p837 = pneg %p538
        $region86: #{tpu_custom_call.1} parent=11 // pred_check_branch
          %839 = sbr.rel (%p837) target = $region88
        $region87: #{tpu_custom_call.1} parent=11 // pred_region
          _
        $region88: #{tpu_custom_call.1} parent=11 // pred_fallthru
          _
        // Predicated region
        $region89: #{tpu_custom_call.1} parent=11 // pred_check
          %p840 = pneg %p559
        $region90: #{tpu_custom_call.1} parent=11 // pred_check_branch
          %842 = sbr.rel (%p840) target = $region92
        $region91: #{tpu_custom_call.1} parent=11 // pred_region
          _
        $region92: #{tpu_custom_call.1} parent=11 // pred_fallthru
          _
        // Predicated region
        $region93: #{tpu_custom_call.1} parent=11 // pred_check
          %p843 = pneg %p580
        $region94: #{tpu_custom_call.1} parent=11 // pred_check_branch
          %845 = sbr.rel (%p843) target = $region96
        $region95: #{tpu_custom_call.1} parent=11 // pred_region
          _
        $region96: #{tpu_custom_call.1} parent=11 // pred_fallthru
          _
        // Predicated region
        $region97: #{tpu_custom_call.1} parent=11 // pred_check
          %p846 = pneg %p601
        $region98: #{tpu_custom_call.1} parent=11 // pred_check_branch
          %848 = sbr.rel (%p846) target = $region100
        $region99: #{tpu_custom_call.1} parent=11 // pred_region
          _
        $region100: #{tpu_custom_call.1} parent=11 // pred_fallthru
          _
        // Predicated region
        $region101: #{tpu_custom_call.1} parent=11 // pred_check
          %p849 = pneg %p622
        $region102: #{tpu_custom_call.1} parent=11 // pred_check_branch
          %851 = sbr.rel (%p849) target = $region104
        $region103: #{tpu_custom_call.1} parent=11 // pred_region
          _
        $region104: #{tpu_custom_call.1} parent=11 // pred_fallthru
          _
        // Predicated region
        $region105: #{tpu_custom_call.1} parent=11 // pred_check
          %p852 = pneg %p643
        $region106: #{tpu_custom_call.1} parent=11 // pred_check_branch
          %854 = sbr.rel (%p852) target = $region108
        $region107: #{tpu_custom_call.1} parent=11 // pred_region
          _
        $region108: #{tpu_custom_call.1} parent=11 // pred_fallthru
          _
      $region12: #{tpu_custom_call.1} parent=5 // pred_fallthru
        _
      %p855 = scmp.lt.s32.totalorder %s47, 4
      // Predicated region
      $region109: #{tpu_custom_call.1} parent=5 // pred_check
        %p856 = pneg %p855
      $region110: #{tpu_custom_call.1} parent=5 // pred_check_branch
        %858 = sbr.rel (%p856) target = $region112
      $region111: #{tpu_custom_call.1} parent=5 // pred_region
        // Predicated region
        $region113: #{tpu_custom_call.1} parent=111 // pred_check
          %p859 = pneg %p81
        $region114: #{tpu_custom_call.1} parent=111 // pred_check_branch
          %861 = sbr.rel (%p859) target = $region116
        $region115: #{tpu_custom_call.1} parent=111 // pred_region
          %s862 = sand.u32 %s71, 1
          %s863 = scalar_lea.sflag [#allocation6], %s862
          %s864 = sand.u32 %s71, 1
          %s865 = smul.addr %s864, 8
          %s866 = scalar_lea.vmem [#allocation5], %s865
          %868 = vsyncadd %s863, 0
          %s869 = smul.addr %s54, 2
          %s870 = sadd.s32 %s55, %s869
          %s871 = smul.addr %s870, 8
          %s872 = scalar_lea.hbm %s0, %s871
          %s874 = sshll.u32 %s872, 4
          %s875 = int_to_ptr.hbm [resolvable:$true] %s874
          %s876 = sshll.u32 %s866, 4
          %s877 = int_to_ptr.vmem [resolvable:$true] %s876
          %879 = dma.hbm_to_vmem [thread:$0]  %s875, 128, %s877, %s863
        $region116: #{tpu_custom_call.1} parent=111 // pred_fallthru
          _
        // Predicated region
        $region117: #{tpu_custom_call.1} parent=111 // pred_check
          %p880 = pneg %p107
        $region118: #{tpu_custom_call.1} parent=111 // pred_check_branch
          %882 = sbr.rel (%p880) target = $region120
        $region119: #{tpu_custom_call.1} parent=111 // pred_region
          %s883 = sand.u32 %s47, 1
          %s884 = scalar_lea.sflag [#allocation9], %s883
          %s885 = sand.u32 %s97, 1
          %s886 = smul.addr %s885, 16
          %s887 = scalar_lea.vmem [#allocation8], %s886
          %889 = vsyncadd %s884, 0
          %s890 = smul.addr %s54, 2
          %s891 = smul.addr %s890, 8
          %s892 = scalar_lea.hbm %s1, %s891
          %s893 = sshll.u32 %s892, 4
          %s894 = int_to_ptr.hbm [resolvable:$true] %s893
          %s895 = sshll.u32 %s887, 4
          %s896 = int_to_ptr.vmem [resolvable:$true] %s895
          %901 = dma.hbm_to_vmem [thread:$0]  %s894, 256, %s896, %s884, 128, 128, 8
        $region120: #{tpu_custom_call.1} parent=111 // pred_fallthru
          _
        // Predicated region
        $region121: #{tpu_custom_call.1} parent=111 // pred_check
          %p902 = pneg %p133
        $region122: #{tpu_custom_call.1} parent=111 // pred_check_branch
          %904 = sbr.rel (%p902) target = $region124
        $region123: #{tpu_custom_call.1} parent=111 // pred_region
          %s905 = sand.u32 %s47, 1
          %s906 = scalar_lea.sflag [#allocation9], %s905
          %s907 = sand.u32 %s123, 1
          %s908 = smul.addr %s907, 8
          %s909 = scalar_lea.vmem [#allocation10], %s908
          %911 = vsyncadd %s906, 0
          %s912 = smul.addr %s54, 8
          %s913 = scalar_lea.hbm %s2, %s912
          %s915 = sshll.u32 %s913, 4
          %s916 = int_to_ptr.hbm [resolvable:$true] %s915
          %s917 = sshll.u32 %s909, 4
          %s918 = int_to_ptr.vmem [resolvable:$true] %s917
          %920 = dma.hbm_to_vmem [thread:$0]  %s916, 128, %s918, %s906
        $region124: #{tpu_custom_call.1} parent=111 // pred_fallthru
          _
      $region112: #{tpu_custom_call.1} parent=5 // pred_fallthru
        _
      %p921 = scmp.le.s32.totalorder 1, %s47
      %p922 = scmp.lt.s32.totalorder %s47, 5
      %p923 = pnand %p921, %p922
      %p924 = pneg %p923
      // Predicated region
      $region125: #{tpu_custom_call.1} parent=5 // pred_check
        _
      $region126: #{tpu_custom_call.1} parent=5 // pred_check_branch
        %926 = sbr.rel (%p923) target = $region128
      $region127: #{tpu_custom_call.1} parent=5 // pred_region
        %s927 = ssub.s32 %s47, 1
        %s928 = sand.u32 %s74, 1
        %s929 = scalar_lea.sflag [#allocation6], %s928
        %s930 = sand.u32 %s74, 1
        %s931 = smul.addr %s930, 8
        %s932 = scalar_lea.vmem [#allocation5], %s931
        // Predicated region
        $region129: #{tpu_custom_call.1} parent=127 // pred_check
          %p933 = pneg %p87
        $region130: #{tpu_custom_call.1} parent=127 // pred_check_branch
          %935 = sbr.rel (%p933) target = $region132
        $region131: #{tpu_custom_call.1} parent=127 // pred_region
          %937 = dma.done %s929, 128
        $region132: #{tpu_custom_call.1} parent=127 // pred_fallthru
          _
        %s938 = sand.u32 %s52, 1
        %s939 = scalar_lea.sflag [#allocation9], %s938
        %s940 = sand.u32 %s100, 1
        %s941 = smul.addr %s940, 16
        %s942 = scalar_lea.vmem [#allocation8], %s941
        // Predicated region
        $region133: #{tpu_custom_call.1} parent=127 // pred_check
          %p943 = pneg %p113
        $region134: #{tpu_custom_call.1} parent=127 // pred_check_branch
          %945 = sbr.rel (%p943) target = $region136
        $region135: #{tpu_custom_call.1} parent=127 // pred_region
          %947 = dma.done %s939, 256
        $region136: #{tpu_custom_call.1} parent=127 // pred_fallthru
          _
        %s948 = sand.u32 %s52, 1
        %s949 = scalar_lea.sflag [#allocation9], %s948
        %s950 = sand.u32 %s126, 1
        %s951 = smul.addr %s950, 8
        %s952 = scalar_lea.vmem [#allocation10], %s951
        // Predicated region
        $region137: #{tpu_custom_call.1} parent=127 // pred_check
          %p953 = pneg %p139
        $region138: #{tpu_custom_call.1} parent=127 // pred_check_branch
          %955 = sbr.rel (%p953) target = $region140
        $region139: #{tpu_custom_call.1} parent=127 // pred_region
          %957 = dma.done %s949, 128
        $region140: #{tpu_custom_call.1} parent=127 // pred_fallthru
          _
        // Predicated region
        $region141: #{tpu_custom_call.1} parent=127 // pred_check
          %p958 = pneg %p160
        $region142: #{tpu_custom_call.1} parent=127 // pred_check_branch
          %960 = sbr.rel (%p958) target = $region144
        $region143: #{tpu_custom_call.1} parent=127 // pred_region
          %962 = dma.done [#allocation12], 1024
        $region144: #{tpu_custom_call.1} parent=127 // pred_fallthru
          _
        // Predicated region
        $region145: #{tpu_custom_call.1} parent=127 // pred_check
          %p963 = pneg %p181
        $region146: #{tpu_custom_call.1} parent=127 // pred_check_branch
          %965 = sbr.rel (%p963) target = $region148
        $region147: #{tpu_custom_call.1} parent=127 // pred_region
          %967 = dma.done [#allocation12], 16
        $region148: #{tpu_custom_call.1} parent=127 // pred_fallthru
          _
        // Predicated region
        $region149: #{tpu_custom_call.1} parent=127 // pred_check
          %p968 = pneg %p202
        $region150: #{tpu_custom_call.1} parent=127 // pred_check_branch
          %970 = sbr.rel (%p968) target = $region152
        $region151: #{tpu_custom_call.1} parent=127 // pred_region
          %972 = dma.done [#allocation15], 2048
        $region152: #{tpu_custom_call.1} parent=127 // pred_fallthru
          _
        // Predicated region
        $region153: #{tpu_custom_call.1} parent=127 // pred_check
          %p973 = pneg %p244
        $region154: #{tpu_custom_call.1} parent=127 // pred_check_branch
          %975 = sbr.rel (%p973) target = $region156
        $region155: #{tpu_custom_call.1} parent=127 // pred_region
          %977 = dma.done [#allocation15], 1024
        $region156: #{tpu_custom_call.1} parent=127 // pred_fallthru
          _
        // Predicated region
        $region157: #{tpu_custom_call.1} parent=127 // pred_check
          %p978 = pneg %p286
        $region158: #{tpu_custom_call.1} parent=127 // pred_check_branch
          %980 = sbr.rel (%p978) target = $region160
        $region159: #{tpu_custom_call.1} parent=127 // pred_region
          %982 = dma.done [#allocation18], 1024
        $region160: #{tpu_custom_call.1} parent=127 // pred_fallthru
          _
        // Predicated region
        $region161: #{tpu_custom_call.1} parent=127 // pred_check
          %p983 = pneg %p328
        $region162: #{tpu_custom_call.1} parent=127 // pred_check_branch
          %985 = sbr.rel (%p983) target = $region164
        $region163: #{tpu_custom_call.1} parent=127 // pred_region
          %987 = dma.done [#allocation18], 2048
        $region164: #{tpu_custom_call.1} parent=127 // pred_fallthru
          _
        // Predicated region
        $region165: #{tpu_custom_call.1} parent=127 // pred_check
          %p988 = pneg %p370
        $region166: #{tpu_custom_call.1} parent=127 // pred_check_branch
          %990 = sbr.rel (%p988) target = $region168
        $region167: #{tpu_custom_call.1} parent=127 // pred_region
          %992 = dma.done [#allocation21], 1024
        $region168: #{tpu_custom_call.1} parent=127 // pred_fallthru
          _
        // Predicated region
        $region169: #{tpu_custom_call.1} parent=127 // pred_check
          %p993 = pneg %p412
        $region170: #{tpu_custom_call.1} parent=127 // pred_check_branch
          %995 = sbr.rel (%p993) target = $region172
        $region171: #{tpu_custom_call.1} parent=127 // pred_region
          %997 = dma.done [#allocation21], 2048
        $region172: #{tpu_custom_call.1} parent=127 // pred_fallthru
          _
        // Predicated region
        $region173: #{tpu_custom_call.1} parent=127 // pred_check
          %p998 = pneg %p454
        $region174: #{tpu_custom_call.1} parent=127 // pred_check_branch
          %1000 = sbr.rel (%p998) target = $region176
        $region175: #{tpu_custom_call.1} parent=127 // pred_region
          %1002 = dma.done [#allocation24], 2048
        $region176: #{tpu_custom_call.1} parent=127 // pred_fallthru
          _
        %s1003 = sand.u32 %s74, 1
        %s1004 = scalar_lea.sflag [#allocation6], %s1003
        %s1005 = sand.u32 %s74, 1
        %s1006 = smul.addr %s1005, 8
        %s1007 = scalar_lea.vmem [#allocation5], %s1006
        %p1008 = pneg %p87
        %p1009 = pneg %p84
        %s1010 = sand.u32 %s52, 1
        %s1011 = scalar_lea.sflag [#allocation9], %s1010
        %s1012 = sand.u32 %s100, 1
        %s1013 = smul.addr %s1012, 16
        %s1014 = scalar_lea.vmem [#allocation8], %s1013
        %p1015 = pneg %p113
        %p1016 = pneg %p110
        %s1017 = sand.u32 %s52, 1
        %s1018 = scalar_lea.sflag [#allocation9], %s1017
        %s1019 = sand.u32 %s126, 1
        %s1020 = smul.addr %s1019, 8
        %s1021 = scalar_lea.vmem [#allocation10], %s1020
        %p1022 = pneg %p139
        %p1023 = pneg %p136
        %p1024 = pneg %p160
        %p1025 = pneg %p157
        %p1026 = pneg %p181
        %p1027 = pneg %p178
        %p1028 = pneg %p202
        %p1029 = pneg %p199
        %p1030 = pneg %p223
        %p1031 = pneg %p220
        %p1032 = pneg %p244
        %p1033 = pneg %p241
        %p1034 = pneg %p265
        %p1035 = pneg %p262
        %p1036 = pneg %p286
        %p1037 = pneg %p283
        %p1038 = pneg %p307
        %p1039 = pneg %p304
        %p1040 = pneg %p328
        %p1041 = pneg %p325
        %p1042 = pneg %p349
        %p1043 = pneg %p346
        %p1044 = pneg %p370
        %p1045 = pneg %p367
        %p1046 = pneg %p391
        %p1047 = pneg %p388
        %p1048 = pneg %p412
        %p1049 = pneg %p409
        %p1050 = pneg %p433
        %p1051 = pneg %p430
        %p1052 = pneg %p454
        %p1053 = pneg %p451
        %p1054 = pneg %p475
        %p1055 = pneg %p472
        %p1056 = pneg %p496
        %p1057 = pneg %p493
        %p1058 = pneg %p517
        %p1059 = pneg %p514
        %p1060 = pneg %p538
        %p1061 = pneg %p535
        %p1062 = pneg %p559
        %p1063 = pneg %p556
        %p1064 = pneg %p580
        %p1065 = pneg %p577
        %p1066 = pneg %p601
        %p1067 = pneg %p598
        %p1068 = pneg %p622
        %p1069 = pneg %p619
        %p1070 = pneg %p643
        %p1071 = pneg %p640
        %p1072 = pneg %p671
        %p1073 = pneg %p668
        %s1074 = sand.u32 %s658, 1
        %s1075 = scalar_lea.sflag [#allocation7], %s1074
        %s1076 = sand.u32 %s658, 1
        %s1077 = smul.addr %s1076, 8
        %s1078 = scalar_lea.vmem [#allocation25], %s1077
        %p1080 = scmp.eq.s32.totalorder %s57, 0
        // Predicated region
        $region177: #{tpu_custom_call.1} parent=127 // pred_check
          %p1081 = pneg %p1080
        $region178: #{tpu_custom_call.1} parent=127 // pred_check_branch
          %1083 = sbr.rel (%p1081) target = $region180
        $region179: #{tpu_custom_call.1} parent=127 // pred_region
          %v1084 = vld [vmem:[%s942] sm:$0xff]
          %v1085 = vld [vmem:[%s942 + $0x8] sm:$0xff]
          %v1086 = vpack.c.bf16 %v1085, %v1084
          %v1087 = vld [vmem:[#allocation14] sm:$0xff]
          %v1088 = vld [vmem:[#allocation14 + $0x8] sm:$0xff]
          %v1089 = vld [vmem:[#allocation14 + $0x10] sm:$0xff]
          %v1090 = vld [vmem:[#allocation14 + $0x18] sm:$0xff]
          %v1091 = vld [vmem:[#allocation14 + $0x20] sm:$0xff]
          %v1092 = vld [vmem:[#allocation14 + $0x28] sm:$0xff]
          %v1093 = vld [vmem:[#allocation14 + $0x30] sm:$0xff]
          %v1094 = vld [vmem:[#allocation14 + $0x38] sm:$0xff]
          %v1095 = vld [vmem:[#allocation14 + $0x40] sm:$0xff]
          %v1096 = vld [vmem:[#allocation14 + $0x48] sm:$0xff]
          %v1097 = vld [vmem:[#allocation14 + $0x50] sm:$0xff]
          %v1098 = vld [vmem:[#allocation14 + $0x58] sm:$0xff]
          %v1099 = vld [vmem:[#allocation14 + $0x60] sm:$0xff]
          %v1100 = vld [vmem:[#allocation14 + $0x68] sm:$0xff]
          %v1101 = vld [vmem:[#allocation14 + $0x70] sm:$0xff]
          %v1102 = vld [vmem:[#allocation14 + $0x78] sm:$0xff]
          %v1103 = vld [vmem:[%s6] sm:$0x3]
          %v1105 = vperm.slane %v1103, 0
          %v1106 = vperm.slane %v1103, 1
          %v1125 = vunpack.c.l.b16 %v1087
          %v1126 = vunpack.c.h.b16 %v1087
          %v1127 = vunpack.c.l.b16 %v1088
          %v1128 = vunpack.c.h.b16 %v1088
          %v1129 = vunpack.c.l.b16 %v1089
          %v1130 = vunpack.c.h.b16 %v1089
          %v1131 = vunpack.c.l.b16 %v1090
          %v1132 = vunpack.c.h.b16 %v1090
          %v1133 = vunpack.c.l.b16 %v1091
          %v1134 = vunpack.c.h.b16 %v1091
          %v1135 = vunpack.c.l.b16 %v1092
          %v1136 = vunpack.c.h.b16 %v1092
          %v1137 = vunpack.c.l.b16 %v1093
          %v1138 = vunpack.c.h.b16 %v1093
          %v1139 = vunpack.c.l.b16 %v1094
          %v1140 = vunpack.c.h.b16 %v1094
          %v1141 = vunpack.c.l.b16 %v1095
          %v1142 = vunpack.c.h.b16 %v1095
          %v1143 = vunpack.c.l.b16 %v1096
          %v1144 = vunpack.c.h.b16 %v1096
          %v1145 = vunpack.c.l.b16 %v1097
          %v1146 = vunpack.c.h.b16 %v1097
          %v1147 = vunpack.c.l.b16 %v1098
          %v1148 = vunpack.c.h.b16 %v1098
          %v1149 = vunpack.c.l.b16 %v1099
          %v1150 = vunpack.c.h.b16 %v1099
          %v1151 = vunpack.c.l.b16 %v1100
          %v1152 = vunpack.c.h.b16 %v1100
          %v1153 = vunpack.c.l.b16 %v1101
          %v1154 = vunpack.c.h.b16 %v1101
          %v1155 = vunpack.c.l.b16 %v1102
          %v1156 = vunpack.c.h.b16 %v1102
          %v1157 = vpack.c.b16 %v1127, %v1125
          %v1158 = vpack.c.b16 %v1128, %v1126
          %v1159 = vpack.c.b16 %v1131, %v1129
          %v1160 = vpack.c.b16 %v1132, %v1130
          %v1161 = vpack.c.b16 %v1135, %v1133
          %v1162 = vpack.c.b16 %v1136, %v1134
          %v1163 = vpack.c.b16 %v1139, %v1137
          %v1164 = vpack.c.b16 %v1140, %v1138
          %v1165 = vpack.c.b16 %v1143, %v1141
          %v1166 = vpack.c.b16 %v1144, %v1142
          %v1167 = vpack.c.b16 %v1147, %v1145
          %v1168 = vpack.c.b16 %v1148, %v1146
          %v1169 = vpack.c.b16 %v1151, %v1149
          %v1170 = vpack.c.b16 %v1152, %v1150
          %v1171 = vpack.c.b16 %v1155, %v1153
          %v1172 = vpack.c.b16 %v1156, %v1154
          %1189 = vmatpush.bf16.msra.mxu0 %v1171
          %1190 = vmatpush.bf16.msra.mxu0 %v1169
          %1191 = vmatpush.bf16.msra.mxu0 %v1167
          %1192 = vmatpush.bf16.msra.mxu0 %v1165
          %1193 = vmatpush.bf16.msra.mxu0 %v1163
          %1194 = vmatpush.bf16.msra.mxu0 %v1161
          %1195 = vmatpush.bf16.msra.mxu0 %v1159
          %1196 = vmatpush.bf16.msra.mxu0 %v1157
          %1197 = vmatmul.bf16.gmra.mxu0 %v1086
          %v1198 = vpop.f32.mrf.mxu0
          %v1199 = vadd.f32 %v1105, %v1198
          %v1200 = vpop.f32.mrf.mxu0
          %v1201 = vadd.f32 %v1105, %v1200
          %1202 = vdwg.mxu0
          %1203 = vmatpush.bf16.msra.mxu0 %v1172
          %1204 = vmatpush.bf16.msra.mxu0 %v1170
          %1205 = vmatpush.bf16.msra.mxu0 %v1168
          %1206 = vmatpush.bf16.msra.mxu0 %v1166
          %1207 = vmatpush.bf16.msra.mxu0 %v1164
          %1208 = vmatpush.bf16.msra.mxu0 %v1162
          %1209 = vmatpush.bf16.msra.mxu0 %v1160
          %1210 = vmatpush.bf16.msra.mxu0 %v1158
          %1211 = vmatmul.bf16.gmra.mxu0 %v1086
          %v1212 = vpop.f32.mrf.mxu0
          %v1213 = vadd.f32 %v1106, %v1212
          %v1214 = vpop.f32.mrf.mxu0
          %v1215 = vadd.f32 %v1106, %v1214
          %1216 = vdwg.mxu0
          %v1217 = vpack.c.bf16 %v1213, %v1199
          %v1218 = vpack.c.bf16 %v1215, %v1201
          %1219 = vst [vmem:[#allocation2] sm:$0xff] %v1217
          %1220 = vst [vmem:[#allocation2 + $0x8] sm:$0xff] %v1218
          %v1221 = vld [vmem:[%s952] sm:$0xff]
          %v1222 = vpack.c.bf16 %v1221, %v1221
          %v1223 = vld [vmem:[#allocation19] sm:$0xff]
          %v1224 = vld [vmem:[#allocation19 + $0x8] sm:$0xff]
          %v1225 = vld [vmem:[#allocation19 + $0x10] sm:$0xff]
          %v1226 = vld [vmem:[#allocation19 + $0x18] sm:$0xff]
          %v1227 = vld [vmem:[#allocation19 + $0x20] sm:$0xff]
          %v1228 = vld [vmem:[#allocation19 + $0x28] sm:$0xff]
          %v1229 = vld [vmem:[#allocation19 + $0x30] sm:$0xff]
          %v1230 = vld [vmem:[#allocation19 + $0x38] sm:$0xff]
          %v1231 = vld [vmem:[#allocation19 + $0x40] sm:$0xff]
          %v1232 = vld [vmem:[#allocation19 + $0x48] sm:$0xff]
          %v1233 = vld [vmem:[#allocation19 + $0x50] sm:$0xff]
          %v1234 = vld [vmem:[#allocation19 + $0x58] sm:$0xff]
          %v1235 = vld [vmem:[#allocation19 + $0x60] sm:$0xff]
          %v1236 = vld [vmem:[#allocation19 + $0x68] sm:$0xff]
          %v1237 = vld [vmem:[#allocation19 + $0x70] sm:$0xff]
          %v1238 = vld [vmem:[#allocation19 + $0x78] sm:$0xff]
          %v1239 = vld [vmem:[%s12] sm:$0x3]
          %v1241 = vperm.slane %v1239, 0
          %v1242 = vperm.slane %v1239, 1
          %v1261 = vunpack.c.l.b16 %v1223
          %v1262 = vunpack.c.h.b16 %v1223
          %v1263 = vunpack.c.l.b16 %v1224
          %v1264 = vunpack.c.h.b16 %v1224
          %v1265 = vunpack.c.l.b16 %v1225
          %v1266 = vunpack.c.h.b16 %v1225
          %v1267 = vunpack.c.l.b16 %v1226
          %v1268 = vunpack.c.h.b16 %v1226
          %v1269 = vunpack.c.l.b16 %v1227
          %v1270 = vunpack.c.h.b16 %v1227
          %v1271 = vunpack.c.l.b16 %v1228
          %v1272 = vunpack.c.h.b16 %v1228
          %v1273 = vunpack.c.l.b16 %v1229
          %v1274 = vunpack.c.h.b16 %v1229
          %v1275 = vunpack.c.l.b16 %v1230
          %v1276 = vunpack.c.h.b16 %v1230
          %v1277 = vunpack.c.l.b16 %v1231
          %v1278 = vunpack.c.h.b16 %v1231
          %v1279 = vunpack.c.l.b16 %v1232
          %v1280 = vunpack.c.h.b16 %v1232
          %v1281 = vunpack.c.l.b16 %v1233
          %v1282 = vunpack.c.h.b16 %v1233
          %v1283 = vunpack.c.l.b16 %v1234
          %v1284 = vunpack.c.h.b16 %v1234
          %v1285 = vunpack.c.l.b16 %v1235
          %v1286 = vunpack.c.h.b16 %v1235
          %v1287 = vunpack.c.l.b16 %v1236
          %v1288 = vunpack.c.h.b16 %v1236
          %v1289 = vunpack.c.l.b16 %v1237
          %v1290 = vunpack.c.h.b16 %v1237
          %v1291 = vunpack.c.l.b16 %v1238
          %v1292 = vunpack.c.h.b16 %v1238
          %v1293 = vpack.c.b16 %v1263, %v1261
          %v1294 = vpack.c.b16 %v1264, %v1262
          %v1295 = vpack.c.b16 %v1267, %v1265
          %v1296 = vpack.c.b16 %v1268, %v1266
          %v1297 = vpack.c.b16 %v1271, %v1269
          %v1298 = vpack.c.b16 %v1272, %v1270
          %v1299 = vpack.c.b16 %v1275, %v1273
          %v1300 = vpack.c.b16 %v1276, %v1274
          %v1301 = vpack.c.b16 %v1279, %v1277
          %v1302 = vpack.c.b16 %v1280, %v1278
          %v1303 = vpack.c.b16 %v1283, %v1281
          %v1304 = vpack.c.b16 %v1284, %v1282
          %v1305 = vpack.c.b16 %v1287, %v1285
          %v1306 = vpack.c.b16 %v1288, %v1286
          %v1307 = vpack.c.b16 %v1291, %v1289
          %v1308 = vpack.c.b16 %v1292, %v1290
          %1325 = vmatpush.bf16.msra.mxu0 %v1307
          %1326 = vmatpush.bf16.msra.mxu0 %v1305
          %1327 = vmatpush.bf16.msra.mxu0 %v1303
          %1328 = vmatpush.bf16.msra.mxu0 %v1301
          %1329 = vmatpush.bf16.msra.mxu0 %v1299
          %1330 = vmatpush.bf16.msra.mxu0 %v1297
          %1331 = vmatpush.bf16.msra.mxu0 %v1295
          %1332 = vmatpush.bf16.msra.mxu0 %v1293
          %1333 = vmatmul.bf16.gmra.mxu0 %v1222
          %v1334 = vpop.f32.mrf.mxu0
          %v1335 = vadd.f32 %v1241, %v1334
          %v1336 = vpop.f32.mrf.mxu0
          %1337 = vdwg.mxu0
          %1338 = vmatpush.bf16.msra.mxu0 %v1308
          %1339 = vmatpush.bf16.msra.mxu0 %v1306
          %1340 = vmatpush.bf16.msra.mxu0 %v1304
          %1341 = vmatpush.bf16.msra.mxu0 %v1302
          %1342 = vmatpush.bf16.msra.mxu0 %v1300
          %1343 = vmatpush.bf16.msra.mxu0 %v1298
          %1344 = vmatpush.bf16.msra.mxu0 %v1296
          %1345 = vmatpush.bf16.msra.mxu0 %v1294
          %1346 = vmatmul.bf16.gmra.mxu0 %v1222
          %v1347 = vpop.f32.mrf.mxu0
          %v1348 = vadd.f32 %v1242, %v1347
          %v1349 = vpop.f32.mrf.mxu0
          %1350 = vdwg.mxu0
          %v1351 = vpack.c.bf16 %v1348, %v1335
          %1352 = vst [vmem:[#allocation3] sm:$0xff] %v1351
        $region180: #{tpu_custom_call.1} parent=127 // pred_fallthru
          _
        %v1353 = vld [vmem:[%s932] sm:$0xff]
        %v1354 = vpack.c.bf16 %v1353, %v1353
        %v1355 = vld [vmem:[#allocation11] sm:$0xf]
        %v1356 = vld [vmem:[#allocation11 + $0x4] sm:$0xf]
        %v1357 = vld [vmem:[#allocation11 + $0x8] sm:$0xf]
        %v1358 = vld [vmem:[#allocation11 + $0xc] sm:$0xf]
        %v1359 = vld [vmem:[#allocation11 + $0x10] sm:$0xf]
        %v1360 = vld [vmem:[#allocation11 + $0x14] sm:$0xf]
        %v1361 = vld [vmem:[#allocation11 + $0x18] sm:$0xf]
        %v1362 = vld [vmem:[#allocation11 + $0x1c] sm:$0xf]
        %v1363 = vld [vmem:[#allocation11 + $0x20] sm:$0xf]
        %v1364 = vld [vmem:[#allocation11 + $0x24] sm:$0xf]
        %v1365 = vld [vmem:[#allocation11 + $0x28] sm:$0xf]
        %v1366 = vld [vmem:[#allocation11 + $0x2c] sm:$0xf]
        %v1367 = vld [vmem:[#allocation11 + $0x30] sm:$0xf]
        %v1368 = vld [vmem:[#allocation11 + $0x34] sm:$0xf]
        %v1369 = vld [vmem:[#allocation11 + $0x38] sm:$0xf]
        %v1370 = vld [vmem:[#allocation11 + $0x3c] sm:$0xf]
        %v1371 = vld [vmem:[#allocation13] sm:$0x1]
        %v1373 = vperm.slane %v1371, 0
        %v1391 = vunpack.c.l.b16 %v1355
        %v1392 = vunpack.c.l.b16 %v1356
        %v1393 = vunpack.c.l.b16 %v1357
        %v1394 = vunpack.c.l.b16 %v1358
        %v1395 = vunpack.c.l.b16 %v1359
        %v1396 = vunpack.c.l.b16 %v1360
        %v1397 = vunpack.c.l.b16 %v1361
        %v1398 = vunpack.c.l.b16 %v1362
        %v1399 = vunpack.c.l.b16 %v1363
        %v1400 = vunpack.c.l.b16 %v1364
        %v1401 = vunpack.c.l.b16 %v1365
        %v1402 = vunpack.c.l.b16 %v1366
        %v1403 = vunpack.c.l.b16 %v1367
        %v1404 = vunpack.c.l.b16 %v1368
        %v1405 = vunpack.c.l.b16 %v1369
        %v1406 = vunpack.c.l.b16 %v1370
        %v1407 = vpack.c.b16 %v1392, %v1391
        %v1408 = vpack.c.b16 %v1394, %v1393
        %v1409 = vpack.c.b16 %v1396, %v1395
        %v1410 = vpack.c.b16 %v1398, %v1397
        %v1411 = vpack.c.b16 %v1400, %v1399
        %v1412 = vpack.c.b16 %v1402, %v1401
        %v1413 = vpack.c.b16 %v1404, %v1403
        %v1414 = vpack.c.b16 %v1406, %v1405
        %1423 = vmatpush.bf16.msra.mxu0 %v1414
        %1424 = vmatpush.bf16.msra.mxu0 %v1413
        %1425 = vmatpush.bf16.msra.mxu0 %v1412
        %1426 = vmatpush.bf16.msra.mxu0 %v1411
        %1427 = vmatpush.bf16.msra.mxu0 %v1410
        %1428 = vmatpush.bf16.msra.mxu0 %v1409
        %1429 = vmatpush.bf16.msra.mxu0 %v1408
        %1430 = vmatpush.bf16.msra.mxu0 %v1407
        %1431 = vmatmul.bf16.gmra.mxu0 %v1354
        %v1432 = vpop.f32.mrf.mxu0
        %v1433 = vadd.f32 %v1373, %v1432
        %v1434 = vpop.f32.mrf.mxu0
        %1435 = vdwg.mxu0
        %v1436 = vmul.f32 %v1433, 0.17677669
        %v1437 = vpack.c.bf16 %v1436, %v1436
        %v1438 = vld [vmem:[#allocation2] sm:$0xf]
        %v1439 = vld [vmem:[#allocation2 + $0x8] sm:$0xf]
        %v1440 = vld [vmem:[#allocation2 + $0x4] sm:$0xf]
        %v1441 = vld [vmem:[#allocation2 + $0xc] sm:$0xf]
        %v1444 = vunpack.c.l.b16 %v1438
        %v1445 = vunpack.c.l.b16 %v1439
        %v1446 = vpack.c.b16 %v1445, %v1444
        %vm1447 = vcmask 261120
        %v1449 = vsel %vm1447, %v1437, 0
        %v1452 = vsel %vm1447, %v1446, 0
        %1454 = vmatpush.bf16.xpose.msra.mxu0 0
        %1455 = vmatpush.bf16.xpose.msra.mxu0 0
        %1456 = vmatpush.bf16.xpose.msra.mxu0 0
        %1457 = vmatpush.bf16.xpose.msra.mxu0 0
        %1458 = vmatpush.bf16.xpose.msra.mxu0 0
        %1459 = vmatpush.bf16.xpose.msra.mxu0 0
        %1460 = vmatpush.bf16.xpose.msra.mxu0 0
        %1461 = vmatpush.bf16.xpose.msra.mxu0 %v1452
        %1462 = vmatmul.bf16.gmra.mxu0 %v1449
        %v1463 = vpop.f32.mrf.mxu0
        %v1464 = vadd.f32 0.0, %v1463
        %v1465 = vpop.f32.mrf.mxu0
        %1466 = vdwg.mxu0
        %vm1467 = vcmask 130048
        %v1468 = vsel %vm1467, %v1464, -inf
        %1469 = vmax.xlane.f32.xlu0 %v1468
        %v1470 = vpop.xlane.xlu0 %1469
        %v1471 = vsub.f32 %v1464, %v1470
        %v1472 = vmul.f32 %v1471, 1.442695
        %v1473 = vpow.pop %v1472
        %v1474 = vsel %vm1467, %v1473, 0.0
        %1475 = vadd.xlane.f32.xlu0 %v1474
        %v1476 = vpop.xlane.xlu0 %1475
        %v1477 = vrcp.pop %v1476
        %v1478 = vmul.f32 %v1476, %v1477
        %v1479 = vsub.f32 1.0, %v1478
        %v1480 = vmul.f32 %v1477, %v1479
        %v1481 = vadd.f32 %v1477, %v1480
        %vm1482 = vweird.f32 %v1476
        %vm1483 = vweird.f32 %v1477
        %vm1484 = vmor %vm1482, %vm1483
        %v1485 = vsel %vm1484, %v1477, %v1481
        %v1486 = vand.u32 2147483647, %v1476
        %vm1487 = vcmp.eq.f32.partialorder %v1486, 8.507059e+37
        %v1488 = vand.u32 %v1476, 2147483648
        %v1489 = vor.u32 1.1754944e-38, %v1488
        %v1490 = vsel %vm1487, %v1489, %v1485
        %v1491 = vmul.f32 %v1473, %v1490
        %v1492 = vpack.c.bf16 %v1491, %v1491
        %v1495 = vunpack.c.l.b16 %v1440
        %v1496 = vunpack.c.l.b16 %v1441
        %v1497 = vpack.c.b16 %v1496, %v1495
        %v1500 = vsel %vm1467, %v1492, 0
        %1502 = vmatpush.bf16.msra.mxu0 0
        %1503 = vmatpush.bf16.msra.mxu0 0
        %1504 = vmatpush.bf16.msra.mxu0 0
        %1505 = vmatpush.bf16.msra.mxu0 0
        %1506 = vmatpush.bf16.msra.mxu0 0
        %1507 = vmatpush.bf16.msra.mxu0 0
        %1508 = vmatpush.bf16.msra.mxu0 0
        %1509 = vmatpush.bf16.msra.mxu0 %v1497
        %1510 = vmatmul.bf16.gmra.mxu0 %v1500
        %v1511 = vpop.f32.mrf.mxu0
        %v1512 = vadd.f32 0.0, %v1511
        %v1513 = vpop.f32.mrf.mxu0
        %1514 = vdwg.mxu0
        %1515 = vst.msk [vmem:[#allocation4] sm:$0xff] %vm1447, %v1512
        %v1516 = vld [vmem:[#allocation2] sm:$0xf]
        %v1517 = vld [vmem:[#allocation2 + $0x8] sm:$0xf]
        %v1518 = vld [vmem:[#allocation2 + $0x4] sm:$0xf]
        %v1519 = vld [vmem:[#allocation2 + $0xc] sm:$0xf]
        %1521 = vrot.lane.b32.xlu0 %v1437, 96
        %v1522 = vpop.permute.xlu0 %1521
        %v1525 = vunpack.c.l.b16 %v1516
        %v1526 = vunpack.c.l.b16 %v1517
        %v1527 = vpack.c.b16 %v1526, %v1525
        %1528 = vrot.lane.b32.xlu0 %v1527, 96
        %v1529 = vpop.permute.xlu0 %1528
        %v1531 = vsel %vm1447, %v1522, 0
        %v1534 = vsel %vm1447, %v1529, 0
        %1536 = vmatpush.bf16.xpose.msra.mxu0 0
        %1537 = vmatpush.bf16.xpose.msra.mxu0 0
        %1538 = vmatpush.bf16.xpose.msra.mxu0 0
        %1539 = vmatpush.bf16.xpose.msra.mxu0 0
        %1540 = vmatpush.bf16.xpose.msra.mxu0 0
        %1541 = vmatpush.bf16.xpose.msra.mxu0 0
        %1542 = vmatpush.bf16.xpose.msra.mxu0 0
        %1543 = vmatpush.bf16.xpose.msra.mxu0 %v1534
        %1544 = vmatmul.bf16.gmra.mxu0 %v1531
        %v1545 = vpop.f32.mrf.mxu0
        %v1546 = vadd.f32 0.0, %v1545
        %v1547 = vpop.f32.mrf.mxu0
        %1548 = vdwg.mxu0
        %v1549 = vsel %vm1467, %v1546, -inf
        %1550 = vmax.xlane.f32.xlu0 %v1549
        %v1551 = vpop.xlane.xlu0 %1550
        %v1552 = vsub.f32 %v1546, %v1551
        %v1553 = vmul.f32 %v1552, 1.442695
        %v1554 = vpow.pop %v1553
        %v1555 = vsel %vm1467, %v1554, 0.0
        %1556 = vadd.xlane.f32.xlu0 %v1555
        %v1557 = vpop.xlane.xlu0 %1556
        %v1558 = vrcp.pop %v1557
        %v1559 = vmul.f32 %v1557, %v1558
        %v1560 = vsub.f32 1.0, %v1559
        %v1561 = vmul.f32 %v1558, %v1560
        %v1562 = vadd.f32 %v1558, %v1561
        %vm1563 = vweird.f32 %v1557
        %vm1564 = vweird.f32 %v1558
        %vm1565 = vmor %vm1563, %vm1564
        %v1566 = vsel %vm1565, %v1558, %v1562
        %v1567 = vand.u32 2147483647, %v1557
        %vm1568 = vcmp.eq.f32.partialorder %v1567, 8.507059e+37
        %v1569 = vand.u32 %v1557, 2147483648
        %v1570 = vor.u32 1.1754944e-38, %v1569
        %v1571 = vsel %vm1568, %v1570, %v1566
        %v1572 = vmul.f32 %v1554, %v1571
        %v1573 = vpack.c.bf16 %v1572, %v1572
        %v1576 = vunpack.c.l.b16 %v1518
        %v1577 = vunpack.c.l.b16 %v1519
        %v1578 = vpack.c.b16 %v1577, %v1576
        %1579 = vrot.lane.b32.xlu0 %v1578, 96
        %v1580 = vpop.permute.xlu0 %1579
        %v1583 = vsel %vm1467, %v1573, 0
        %1585 = vmatpush.bf16.msra.mxu0 0
        %1586 = vmatpush.bf16.msra.mxu0 0
        %1587 = vmatpush.bf16.msra.mxu0 0
        %1588 = vmatpush.bf16.msra.mxu0 0
        %1589 = vmatpush.bf16.msra.mxu0 0
        %1590 = vmatpush.bf16.msra.mxu0 0
        %1591 = vmatpush.bf16.msra.mxu0 0
        %1592 = vmatpush.bf16.msra.mxu0 %v1580
        %1593 = vmatmul.bf16.gmra.mxu0 %v1583
        %v1594 = vpop.f32.mrf.mxu0
        %v1595 = vadd.f32 0.0, %v1594
        %v1596 = vpop.f32.mrf.mxu0
        %1597 = vdwg.mxu0
        %1599 = vrot.lane.b32.xlu0 %v1595, 32
        %v1600 = vpop.permute.xlu0 %1599
        %vm1602 = vcmask 523520
        %1603 = vst.msk [vmem:[#allocation4] sm:$0xff] %vm1602, %v1600
        %v1604 = vld [vmem:[#allocation2] sm:$0xf]
        %v1605 = vld [vmem:[#allocation2 + $0x8] sm:$0xf]
        %v1606 = vld [vmem:[#allocation2 + $0x4] sm:$0xf]
        %v1607 = vld [vmem:[#allocation2 + $0xc] sm:$0xf]
        %1608 = vrot.lane.b32.xlu0 %v1437, 64
        %v1609 = vpop.permute.xlu0 %1608
        %v1612 = vunpack.c.l.b16 %v1604
        %v1613 = vunpack.c.l.b16 %v1605
        %v1614 = vpack.c.b16 %v1613, %v1612
        %1615 = vrot.lane.b32.xlu0 %v1614, 64
        %v1616 = vpop.permute.xlu0 %1615
        %v1618 = vsel %vm1447, %v1609, 0
        %v1621 = vsel %vm1447, %v1616, 0
        %1623 = vmatpush.bf16.xpose.msra.mxu0 0
        %1624 = vmatpush.bf16.xpose.msra.mxu0 0
        %1625 = vmatpush.bf16.xpose.msra.mxu0 0
        %1626 = vmatpush.bf16.xpose.msra.mxu0 0
        %1627 = vmatpush.bf16.xpose.msra.mxu0 0
        %1628 = vmatpush.bf16.xpose.msra.mxu0 0
        %1629 = vmatpush.bf16.xpose.msra.mxu0 0
        %1630 = vmatpush.bf16.xpose.msra.mxu0 %v1621
        %1631 = vmatmul.bf16.gmra.mxu0 %v1618
        %v1632 = vpop.f32.mrf.mxu0
        %v1633 = vadd.f32 0.0, %v1632
        %v1634 = vpop.f32.mrf.mxu0
        %1635 = vdwg.mxu0
        %v1636 = vsel %vm1467, %v1633, -inf
        %1637 = vmax.xlane.f32.xlu0 %v1636
        %v1638 = vpop.xlane.xlu0 %1637
        %v1639 = vsub.f32 %v1633, %v1638
        %v1640 = vmul.f32 %v1639, 1.442695
        %v1641 = vpow.pop %v1640
        %v1642 = vsel %vm1467, %v1641, 0.0
        %1643 = vadd.xlane.f32.xlu0 %v1642
        %v1644 = vpop.xlane.xlu0 %1643
        %v1645 = vrcp.pop %v1644
        %v1646 = vmul.f32 %v1644, %v1645
        %v1647 = vsub.f32 1.0, %v1646
        %v1648 = vmul.f32 %v1645, %v1647
        %v1649 = vadd.f32 %v1645, %v1648
        %vm1650 = vweird.f32 %v1644
        %vm1651 = vweird.f32 %v1645
        %vm1652 = vmor %vm1650, %vm1651
        %v1653 = vsel %vm1652, %v1645, %v1649
        %v1654 = vand.u32 2147483647, %v1644
        %vm1655 = vcmp.eq.f32.partialorder %v1654, 8.507059e+37
        %v1656 = vand.u32 %v1644, 2147483648
        %v1657 = vor.u32 1.1754944e-38, %v1656
        %v1658 = vsel %vm1655, %v1657, %v1653
        %v1659 = vmul.f32 %v1641, %v1658
        %v1660 = vpack.c.bf16 %v1659, %v1659
        %v1663 = vunpack.c.l.b16 %v1606
        %v1664 = vunpack.c.l.b16 %v1607
        %v1665 = vpack.c.b16 %v1664, %v1663
        %1666 = vrot.lane.b32.xlu0 %v1665, 64
        %v1667 = vpop.permute.xlu0 %1666
        %v1670 = vsel %vm1467, %v1660, 0
        %1672 = vmatpush.bf16.msra.mxu0 0
        %1673 = vmatpush.bf16.msra.mxu0 0
        %1674 = vmatpush.bf16.msra.mxu0 0
        %1675 = vmatpush.bf16.msra.mxu0 0
        %1676 = vmatpush.bf16.msra.mxu0 0
        %1677 = vmatpush.bf16.msra.mxu0 0
        %1678 = vmatpush.bf16.msra.mxu0 0
        %1679 = vmatpush.bf16.msra.mxu0 %v1667
        %1680 = vmatmul.bf16.gmra.mxu0 %v1670
        %v1681 = vpop.f32.mrf.mxu0
        %v1682 = vadd.f32 0.0, %v1681
        %v1683 = vpop.f32.mrf.mxu0
        %1684 = vdwg.mxu0
        %1686 = vrot.lane.b32.xlu0 %v1682, 64
        %v1687 = vpop.permute.xlu0 %1686
        %vm1689 = vcmask 785920
        %1690 = vst.msk [vmem:[#allocation4] sm:$0xff] %vm1689, %v1687
        %v1691 = vld [vmem:[#allocation2] sm:$0xf]
        %v1692 = vld [vmem:[#allocation2 + $0x8] sm:$0xf]
        %v1693 = vld [vmem:[#allocation2 + $0x4] sm:$0xf]
        %v1694 = vld [vmem:[#allocation2 + $0xc] sm:$0xf]
        %1695 = vrot.lane.b32.xlu0 %v1437, 32
        %v1696 = vpop.permute.xlu0 %1695
        %v1699 = vunpack.c.l.b16 %v1691
        %v1700 = vunpack.c.l.b16 %v1692
        %v1701 = vpack.c.b16 %v1700, %v1699
        %1702 = vrot.lane.b32.xlu0 %v1701, 32
        %v1703 = vpop.permute.xlu0 %1702
        %v1705 = vsel %vm1447, %v1696, 0
        %v1708 = vsel %vm1447, %v1703, 0
        %1710 = vmatpush.bf16.xpose.msra.mxu0 0
        %1711 = vmatpush.bf16.xpose.msra.mxu0 0
        %1712 = vmatpush.bf16.xpose.msra.mxu0 0
        %1713 = vmatpush.bf16.xpose.msra.mxu0 0
        %1714 = vmatpush.bf16.xpose.msra.mxu0 0
        %1715 = vmatpush.bf16.xpose.msra.mxu0 0
        %1716 = vmatpush.bf16.xpose.msra.mxu0 0
        %1717 = vmatpush.bf16.xpose.msra.mxu0 %v1708
        %1718 = vmatmul.bf16.gmra.mxu0 %v1705
        %v1719 = vpop.f32.mrf.mxu0
        %v1720 = vadd.f32 0.0, %v1719
        %v1721 = vpop.f32.mrf.mxu0
        %1722 = vdwg.mxu0
        %v1723 = vsel %vm1467, %v1720, -inf
        %1724 = vmax.xlane.f32.xlu0 %v1723
        %v1725 = vpop.xlane.xlu0 %1724
        %v1726 = vsub.f32 %v1720, %v1725
        %v1727 = vmul.f32 %v1726, 1.442695
        %v1728 = vpow.pop %v1727
        %v1729 = vsel %vm1467, %v1728, 0.0
        %1730 = vadd.xlane.f32.xlu0 %v1729
        %v1731 = vpop.xlane.xlu0 %1730
        %v1732 = vrcp.pop %v1731
        %v1733 = vmul.f32 %v1731, %v1732
        %v1734 = vsub.f32 1.0, %v1733
        %v1735 = vmul.f32 %v1732, %v1734
        %v1736 = vadd.f32 %v1732, %v1735
        %vm1737 = vweird.f32 %v1731
        %vm1738 = vweird.f32 %v1732
        %vm1739 = vmor %vm1737, %vm1738
        %v1740 = vsel %vm1739, %v1732, %v1736
        %v1741 = vand.u32 2147483647, %v1731
        %vm1742 = vcmp.eq.f32.partialorder %v1741, 8.507059e+37
        %v1743 = vand.u32 %v1731, 2147483648
        %v1744 = vor.u32 1.1754944e-38, %v1743
        %v1745 = vsel %vm1742, %v1744, %v1740
        %v1746 = vmul.f32 %v1728, %v1745
        %v1747 = vpack.c.bf16 %v1746, %v1746
        %v1750 = vunpack.c.l.b16 %v1693
        %v1751 = vunpack.c.l.b16 %v1694
        %v1752 = vpack.c.b16 %v1751, %v1750
        %1753 = vrot.lane.b32.xlu0 %v1752, 32
        %v1754 = vpop.permute.xlu0 %1753
        %v1757 = vsel %vm1467, %v1747, 0
        %1759 = vmatpush.bf16.msra.mxu0 0
        %1760 = vmatpush.bf16.msra.mxu0 0
        %1761 = vmatpush.bf16.msra.mxu0 0
        %1762 = vmatpush.bf16.msra.mxu0 0
        %1763 = vmatpush.bf16.msra.mxu0 0
        %1764 = vmatpush.bf16.msra.mxu0 0
        %1765 = vmatpush.bf16.msra.mxu0 0
        %1766 = vmatpush.bf16.msra.mxu0 %v1754
        %1767 = vmatmul.bf16.gmra.mxu0 %v1757
        %v1768 = vpop.f32.mrf.mxu0
        %v1769 = vadd.f32 0.0, %v1768
        %v1770 = vpop.f32.mrf.mxu0
        %1771 = vdwg.mxu0
        %1773 = vrot.lane.b32.xlu0 %v1769, 96
        %v1774 = vpop.permute.xlu0 %1773
        %vm1776 = vcmask 1048320
        %1777 = vst.msk [vmem:[#allocation4] sm:$0xff] %vm1776, %v1774
        %v1778 = vld [vmem:[#allocation4] sm:$0xff]
        %v1779 = vpack.c.bf16 %v1778, %v1778
        %v1780 = vld [vmem:[#allocation16] sm:$0xf]
        %v1781 = vld [vmem:[#allocation16 + $0x4] sm:$0xf]
        %v1782 = vld [vmem:[#allocation16 + $0x8] sm:$0xf]
        %v1783 = vld [vmem:[#allocation16 + $0xc] sm:$0xf]
        %v1784 = vld [vmem:[#allocation16 + $0x10] sm:$0xf]
        %v1785 = vld [vmem:[#allocation16 + $0x14] sm:$0xf]
        %v1786 = vld [vmem:[#allocation16 + $0x18] sm:$0xf]
        %v1787 = vld [vmem:[#allocation16 + $0x1c] sm:$0xf]
        %v1788 = vld [vmem:[#allocation16 + $0x20] sm:$0xf]
        %v1789 = vld [vmem:[#allocation16 + $0x24] sm:$0xf]
        %v1790 = vld [vmem:[#allocation16 + $0x28] sm:$0xf]
        %v1791 = vld [vmem:[#allocation16 + $0x2c] sm:$0xf]
        %v1792 = vld [vmem:[#allocation16 + $0x30] sm:$0xf]
        %v1793 = vld [vmem:[#allocation16 + $0x34] sm:$0xf]
        %v1794 = vld [vmem:[#allocation16 + $0x38] sm:$0xf]
        %v1795 = vld [vmem:[#allocation16 + $0x3c] sm:$0xf]
        %v1796 = vld [vmem:[%s8] sm:$0x1]
        %v1798 = vperm.slane %v1796, 0
        %v1816 = vunpack.c.l.b16 %v1780
        %v1817 = vunpack.c.l.b16 %v1781
        %v1818 = vunpack.c.l.b16 %v1782
        %v1819 = vunpack.c.l.b16 %v1783
        %v1820 = vunpack.c.l.b16 %v1784
        %v1821 = vunpack.c.l.b16 %v1785
        %v1822 = vunpack.c.l.b16 %v1786
        %v1823 = vunpack.c.l.b16 %v1787
        %v1824 = vunpack.c.l.b16 %v1788
        %v1825 = vunpack.c.l.b16 %v1789
        %v1826 = vunpack.c.l.b16 %v1790
        %v1827 = vunpack.c.l.b16 %v1791
        %v1828 = vunpack.c.l.b16 %v1792
        %v1829 = vunpack.c.l.b16 %v1793
        %v1830 = vunpack.c.l.b16 %v1794
        %v1831 = vunpack.c.l.b16 %v1795
        %v1832 = vpack.c.b16 %v1817, %v1816
        %v1833 = vpack.c.b16 %v1819, %v1818
        %v1834 = vpack.c.b16 %v1821, %v1820
        %v1835 = vpack.c.b16 %v1823, %v1822
        %v1836 = vpack.c.b16 %v1825, %v1824
        %v1837 = vpack.c.b16 %v1827, %v1826
        %v1838 = vpack.c.b16 %v1829, %v1828
        %v1839 = vpack.c.b16 %v1831, %v1830
        %1848 = vmatpush.bf16.msra.mxu0 %v1839
        %1849 = vmatpush.bf16.msra.mxu0 %v1838
        %1850 = vmatpush.bf16.msra.mxu0 %v1837
        %1851 = vmatpush.bf16.msra.mxu0 %v1836
        %1852 = vmatpush.bf16.msra.mxu0 %v1835
        %1853 = vmatpush.bf16.msra.mxu0 %v1834
        %1854 = vmatpush.bf16.msra.mxu0 %v1833
        %1855 = vmatpush.bf16.msra.mxu0 %v1832
        %1856 = vmatmul.bf16.gmra.mxu0 %v1779
        %v1857 = vpop.f32.mrf.mxu0
        %v1858 = vadd.f32 %v1798, %v1857
        %v1859 = vpop.f32.mrf.mxu0
        %1860 = vdwg.mxu0
        %v1861 = vadd.f32 %v1353, %v1858
        %v1862 = vld [vmem:[%s19] sm:$0x1]
        %v1863 = vld [vmem:[%s20] sm:$0x1]
        %1864 = vadd.xlane.f32.xlu0 %v1861
        %v1865 = vpop.xlane.xlu0 %1864
        %v1866 = vrcp.pop 128.0
        %v1867 = vmul.f32 128.0, %v1866
        %v1868 = vsub.f32 1.0, %v1867
        %v1869 = vmul.f32 %v1866, %v1868
        %v1870 = vadd.f32 %v1866, %v1869
        %vm1871 = vweird.f32 %v1866
        %v1872 = vsel %vm1871, %v1866, %v1870
        %v1873 = vmul.f32 %v1865, %v1872
        %v1874 = vsub.f32 %v1861, %v1873
        %v1875 = vmul.f32 %v1874, %v1874
        %1876 = vadd.xlane.f32.xlu0 %v1875
        %v1877 = vpop.xlane.xlu0 %1876
        %v1878 = vmul.f32 %v1877, %v1872
        %v1879 = vadd.f32 %v1878, 1e-05
        %v1880 = vrsqrt.pop %v1879
        %v1881 = vmul.f32 %v1880, %v1879
        %v1882 = vmul.f32 %v1881, %v1880
        %v1883 = vmul.f32 0.5, %v1882
        %v1884 = vsub.f32 1.5, %v1883
        %v1885 = vmul.f32 %v1880, %v1884
        %vm1886 = vweird.f32 %v1879
        %vm1887 = vweird.f32 %v1880
        %vm1888 = vmor %vm1886, %vm1887
        %v1889 = vsel %vm1888, %v1880, %v1885
        %v1890 = vmul.f32 %v1874, %v1889
        %v1892 = vperm.slane %v1862, 0
        %v1894 = vmul.f32 %v1890, %v1892
        %v1896 = vperm.slane %v1863, 0
        %v1898 = vadd.f32 %v1894, %v1896
        %v1899 = vpack.c.bf16 %v1898, %v1898
        %v1900 = vld [vmem:[#allocation17] sm:$0xf]
        %v1901 = vld [vmem:[#allocation17 + $0x4] sm:$0xf]
        %v1902 = vld [vmem:[#allocation17 + $0x8] sm:$0xf]
        %v1903 = vld [vmem:[#allocation17 + $0xc] sm:$0xf]
        %v1904 = vld [vmem:[#allocation17 + $0x10] sm:$0xf]
        %v1905 = vld [vmem:[#allocation17 + $0x14] sm:$0xf]
        %v1906 = vld [vmem:[#allocation17 + $0x18] sm:$0xf]
        %v1907 = vld [vmem:[#allocation17 + $0x1c] sm:$0xf]
        %v1908 = vld [vmem:[#allocation17 + $0x20] sm:$0xf]
        %v1909 = vld [vmem:[#allocation17 + $0x24] sm:$0xf]
        %v1910 = vld [vmem:[#allocation17 + $0x28] sm:$0xf]
        %v1911 = vld [vmem:[#allocation17 + $0x2c] sm:$0xf]
        %v1912 = vld [vmem:[#allocation17 + $0x30] sm:$0xf]
        %v1913 = vld [vmem:[#allocation17 + $0x34] sm:$0xf]
        %v1914 = vld [vmem:[#allocation17 + $0x38] sm:$0xf]
        %v1915 = vld [vmem:[#allocation17 + $0x3c] sm:$0xf]
        %v1916 = vld [vmem:[%s10] sm:$0x1]
        %v1918 = vperm.slane %v1916, 0
        %v1936 = vunpack.c.l.b16 %v1900
        %v1937 = vunpack.c.l.b16 %v1901
        %v1938 = vunpack.c.l.b16 %v1902
        %v1939 = vunpack.c.l.b16 %v1903
        %v1940 = vunpack.c.l.b16 %v1904
        %v1941 = vunpack.c.l.b16 %v1905
        %v1942 = vunpack.c.l.b16 %v1906
        %v1943 = vunpack.c.l.b16 %v1907
        %v1944 = vunpack.c.l.b16 %v1908
        %v1945 = vunpack.c.l.b16 %v1909
        %v1946 = vunpack.c.l.b16 %v1910
        %v1947 = vunpack.c.l.b16 %v1911
        %v1948 = vunpack.c.l.b16 %v1912
        %v1949 = vunpack.c.l.b16 %v1913
        %v1950 = vunpack.c.l.b16 %v1914
        %v1951 = vunpack.c.l.b16 %v1915
        %v1952 = vpack.c.b16 %v1937, %v1936
        %v1953 = vpack.c.b16 %v1939, %v1938
        %v1954 = vpack.c.b16 %v1941, %v1940
        %v1955 = vpack.c.b16 %v1943, %v1942
        %v1956 = vpack.c.b16 %v1945, %v1944
        %v1957 = vpack.c.b16 %v1947, %v1946
        %v1958 = vpack.c.b16 %v1949, %v1948
        %v1959 = vpack.c.b16 %v1951, %v1950
        %1968 = vmatpush.bf16.msra.mxu0 %v1959
        %1969 = vmatpush.bf16.msra.mxu0 %v1958
        %1970 = vmatpush.bf16.msra.mxu0 %v1957
        %1971 = vmatpush.bf16.msra.mxu0 %v1956
        %1972 = vmatpush.bf16.msra.mxu0 %v1955
        %1973 = vmatpush.bf16.msra.mxu0 %v1954
        %1974 = vmatpush.bf16.msra.mxu0 %v1953
        %1975 = vmatpush.bf16.msra.mxu0 %v1952
        %1976 = vmatmul.bf16.gmra.mxu0 %v1899
        %v1977 = vpop.f32.mrf.mxu0
        %v1978 = vadd.f32 %v1918, %v1977
        %v1979 = vpop.f32.mrf.mxu0
        %1980 = vdwg.mxu0
        %v1981 = vmul.f32 %v1978, 0.17677669
        %v1982 = vpack.c.bf16 %v1981, %v1981
        %v1983 = vld [vmem:[#allocation3] sm:$0xf]
        %v1984 = vld [vmem:[#allocation3 + $0x4] sm:$0xf]
        %v1986 = vsel %vm1447, %v1982, 0
        %v1989 = vsel %vm1447, %v1983, 0
        %1991 = vmatpush.bf16.xpose.msra.mxu0 0
        %1992 = vmatpush.bf16.xpose.msra.mxu0 0
        %1993 = vmatpush.bf16.xpose.msra.mxu0 0
        %1994 = vmatpush.bf16.xpose.msra.mxu0 0
        %1995 = vmatpush.bf16.xpose.msra.mxu0 0
        %1996 = vmatpush.bf16.xpose.msra.mxu0 0
        %1997 = vmatpush.bf16.xpose.msra.mxu0 0
        %1998 = vmatpush.bf16.xpose.msra.mxu0 %v1989
        %1999 = vmatmul.bf16.gmra.mxu0 %v1986
        %v2000 = vpop.f32.mrf.mxu0
        %v2001 = vadd.f32 0.0, %v2000
        %v2002 = vpop.f32.mrf.mxu0
        %2003 = vdwg.mxu0
        %vm2004 = vcmask 64512
        %v2005 = vsel %vm2004, %v2001, -inf
        %2006 = vmax.xlane.f32.xlu0 %v2005
        %v2007 = vpop.xlane.xlu0 %2006
        %v2008 = vsub.f32 %v2001, %v2007
        %v2009 = vmul.f32 %v2008, 1.442695
        %v2010 = vpow.pop %v2009
        %v2011 = vsel %vm2004, %v2010, 0.0
        %2012 = vadd.xlane.f32.xlu0 %v2011
        %v2013 = vpop.xlane.xlu0 %2012
        %v2014 = vrcp.pop %v2013
        %v2015 = vmul.f32 %v2013, %v2014
        %v2016 = vsub.f32 1.0, %v2015
        %v2017 = vmul.f32 %v2014, %v2016
        %v2018 = vadd.f32 %v2014, %v2017
        %vm2019 = vweird.f32 %v2013
        %vm2020 = vweird.f32 %v2014
        %vm2021 = vmor %vm2019, %vm2020
        %v2022 = vsel %vm2021, %v2014, %v2018
        %v2023 = vand.u32 2147483647, %v2013
        %vm2024 = vcmp.eq.f32.partialorder %v2023, 8.507059e+37
        %v2025 = vand.u32 %v2013, 2147483648
        %v2026 = vor.u32 1.1754944e-38, %v2025
        %v2027 = vsel %vm2024, %v2026, %v2022
        %v2028 = vmul.f32 %v2010, %v2027
        %v2029 = vpack.c.bf16 %v2028, %v2028
        %v2031 = vsel %vm2004, %v2029, 0
        %vm2033 = vcmask 1043456
        %v2035 = vsel %vm2033, %v1984, 0
        %2037 = vmatpush.bf16.msra.mxu0 0
        %2038 = vmatpush.bf16.msra.mxu0 0
        %2039 = vmatpush.bf16.msra.mxu0 0
        %2040 = vmatpush.bf16.msra.mxu0 0
        %2041 = vmatpush.bf16.msra.mxu0 0
        %2042 = vmatpush.bf16.msra.mxu0 0
        %2043 = vmatpush.bf16.msra.mxu0 0
        %2044 = vmatpush.bf16.msra.mxu0 %v2035
        %2045 = vmatmul.bf16.gmra.mxu0 %v2031
        %v2046 = vpop.f32.mrf.mxu0
        %v2047 = vadd.f32 0.0, %v2046
        %v2048 = vpop.f32.mrf.mxu0
        %2049 = vdwg.mxu0
        %2050 = vst.msk [vmem:[#allocation4] sm:$0xff] %vm1447, %v2047
        %v2051 = vld [vmem:[#allocation3] sm:$0xf]
        %v2052 = vld [vmem:[#allocation3 + $0x4] sm:$0xf]
        %2054 = vrot.lane.b32.xlu0 %v1982, 96
        %v2055 = vpop.permute.xlu0 %2054
        %v2057 = vunpack.c.l.b16 %v2051
        %v2058 = vpack.c.b16 %v2057, %v2057
        %2059 = vrot.lane.b32.xlu0 %v2058, 96
        %v2060 = vpop.permute.xlu0 %2059
        %v2062 = vsel %vm1447, %v2055, 0
        %v2065 = vsel %vm1447, %v2060, 0
        %2067 = vmatpush.bf16.xpose.msra.mxu0 0
        %2068 = vmatpush.bf16.xpose.msra.mxu0 0
        %2069 = vmatpush.bf16.xpose.msra.mxu0 0
        %2070 = vmatpush.bf16.xpose.msra.mxu0 0
        %2071 = vmatpush.bf16.xpose.msra.mxu0 0
        %2072 = vmatpush.bf16.xpose.msra.mxu0 0
        %2073 = vmatpush.bf16.xpose.msra.mxu0 0
        %2074 = vmatpush.bf16.xpose.msra.mxu0 %v2065
        %2075 = vmatmul.bf16.gmra.mxu0 %v2062
        %v2076 = vpop.f32.mrf.mxu0
        %v2077 = vadd.f32 0.0, %v2076
        %v2078 = vpop.f32.mrf.mxu0
        %2079 = vdwg.mxu0
        %v2080 = vsel %vm2004, %v2077, -inf
        %2081 = vmax.xlane.f32.xlu0 %v2080
        %v2082 = vpop.xlane.xlu0 %2081
        %v2083 = vsub.f32 %v2077, %v2082
        %v2084 = vmul.f32 %v2083, 1.442695
        %v2085 = vpow.pop %v2084
        %v2086 = vsel %vm2004, %v2085, 0.0
        %2087 = vadd.xlane.f32.xlu0 %v2086
        %v2088 = vpop.xlane.xlu0 %2087
        %v2089 = vrcp.pop %v2088
        %v2090 = vmul.f32 %v2088, %v2089
        %v2091 = vsub.f32 1.0, %v2090
        %v2092 = vmul.f32 %v2089, %v2091
        %v2093 = vadd.f32 %v2089, %v2092
        %vm2094 = vweird.f32 %v2088
        %vm2095 = vweird.f32 %v2089
        %vm2096 = vmor %vm2094, %vm2095
        %v2097 = vsel %vm2096, %v2089, %v2093
        %v2098 = vand.u32 2147483647, %v2088
        %vm2099 = vcmp.eq.f32.partialorder %v2098, 8.507059e+37
        %v2100 = vand.u32 %v2088, 2147483648
        %v2101 = vor.u32 1.1754944e-38, %v2100
        %v2102 = vsel %vm2099, %v2101, %v2097
        %v2103 = vmul.f32 %v2085, %v2102
        %v2104 = vpack.c.bf16 %v2103, %v2103
        %v2106 = vunpack.c.l.b16 %v2052
        %v2107 = vpack.c.b16 %v2106, %v2106
        %2108 = vrot.lane.b32.xlu0 %v2107, 96
        %v2109 = vpop.permute.xlu0 %2108
        %v2111 = vsel %vm2004, %v2104, 0
        %v2114 = vsel %vm2033, %v2109, 0
        %2116 = vmatpush.bf16.msra.mxu0 0
        %2117 = vmatpush.bf16.msra.mxu0 0
        %2118 = vmatpush.bf16.msra.mxu0 0
        %2119 = vmatpush.bf16.msra.mxu0 0
        %2120 = vmatpush.bf16.msra.mxu0 0
        %2121 = vmatpush.bf16.msra.mxu0 0
        %2122 = vmatpush.bf16.msra.mxu0 0
        %2123 = vmatpush.bf16.msra.mxu0 %v2114
        %2124 = vmatmul.bf16.gmra.mxu0 %v2111
        %v2125 = vpop.f32.mrf.mxu0
        %v2126 = vadd.f32 0.0, %v2125
        %v2127 = vpop.f32.mrf.mxu0
        %2128 = vdwg.mxu0
        %2130 = vrot.lane.b32.xlu0 %v2126, 32
        %v2131 = vpop.permute.xlu0 %2130
        %2133 = vst.msk [vmem:[#allocation4] sm:$0xff] %vm1602, %v2131
        %v2134 = vld [vmem:[#allocation3] sm:$0xf]
        %v2135 = vld [vmem:[#allocation3 + $0x4] sm:$0xf]
        %2136 = vrot.lane.b32.xlu0 %v1982, 64
        %v2137 = vpop.permute.xlu0 %2136
        %v2139 = vunpack.c.l.b16 %v2134
        %v2140 = vpack.c.b16 %v2139, %v2139
        %2141 = vrot.lane.b32.xlu0 %v2140, 64
        %v2142 = vpop.permute.xlu0 %2141
        %v2144 = vsel %vm1447, %v2137, 0
        %v2147 = vsel %vm1447, %v2142, 0
        %2149 = vmatpush.bf16.xpose.msra.mxu0 0
        %2150 = vmatpush.bf16.xpose.msra.mxu0 0
        %2151 = vmatpush.bf16.xpose.msra.mxu0 0
        %2152 = vmatpush.bf16.xpose.msra.mxu0 0
        %2153 = vmatpush.bf16.xpose.msra.mxu0 0
        %2154 = vmatpush.bf16.xpose.msra.mxu0 0
        %2155 = vmatpush.bf16.xpose.msra.mxu0 0
        %2156 = vmatpush.bf16.xpose.msra.mxu0 %v2147
        %2157 = vmatmul.bf16.gmra.mxu0 %v2144
        %v2158 = vpop.f32.mrf.mxu0
        %v2159 = vadd.f32 0.0, %v2158
        %v2160 = vpop.f32.mrf.mxu0
        %2161 = vdwg.mxu0
        %v2162 = vsel %vm2004, %v2159, -inf
        %2163 = vmax.xlane.f32.xlu0 %v2162
        %v2164 = vpop.xlane.xlu0 %2163
        %v2165 = vsub.f32 %v2159, %v2164
        %v2166 = vmul.f32 %v2165, 1.442695
        %v2167 = vpow.pop %v2166
        %v2168 = vsel %vm2004, %v2167, 0.0
        %2169 = vadd.xlane.f32.xlu0 %v2168
        %v2170 = vpop.xlane.xlu0 %2169
        %v2171 = vrcp.pop %v2170
        %v2172 = vmul.f32 %v2170, %v2171
        %v2173 = vsub.f32 1.0, %v2172
        %v2174 = vmul.f32 %v2171, %v2173
        %v2175 = vadd.f32 %v2171, %v2174
        %vm2176 = vweird.f32 %v2170
        %vm2177 = vweird.f32 %v2171
        %vm2178 = vmor %vm2176, %vm2177
        %v2179 = vsel %vm2178, %v2171, %v2175
        %v2180 = vand.u32 2147483647, %v2170
        %vm2181 = vcmp.eq.f32.partialorder %v2180, 8.507059e+37
        %v2182 = vand.u32 %v2170, 2147483648
        %v2183 = vor.u32 1.1754944e-38, %v2182
        %v2184 = vsel %vm2181, %v2183, %v2179
        %v2185 = vmul.f32 %v2167, %v2184
        %v2186 = vpack.c.bf16 %v2185, %v2185
        %v2188 = vunpack.c.l.b16 %v2135
        %v2189 = vpack.c.b16 %v2188, %v2188
        %2190 = vrot.lane.b32.xlu0 %v2189, 64
        %v2191 = vpop.permute.xlu0 %2190
        %v2193 = vsel %vm2004, %v2186, 0
        %v2196 = vsel %vm2033, %v2191, 0
        %2198 = vmatpush.bf16.msra.mxu0 0
        %2199 = vmatpush.bf16.msra.mxu0 0
        %2200 = vmatpush.bf16.msra.mxu0 0
        %2201 = vmatpush.bf16.msra.mxu0 0
        %2202 = vmatpush.bf16.msra.mxu0 0
        %2203 = vmatpush.bf16.msra.mxu0 0
        %2204 = vmatpush.bf16.msra.mxu0 0
        %2205 = vmatpush.bf16.msra.mxu0 %v2196
        %2206 = vmatmul.bf16.gmra.mxu0 %v2193
        %v2207 = vpop.f32.mrf.mxu0
        %v2208 = vadd.f32 0.0, %v2207
        %v2209 = vpop.f32.mrf.mxu0
        %2210 = vdwg.mxu0
        %2212 = vrot.lane.b32.xlu0 %v2208, 64
        %v2213 = vpop.permute.xlu0 %2212
        %2215 = vst.msk [vmem:[#allocation4] sm:$0xff] %vm1689, %v2213
        %v2216 = vld [vmem:[#allocation3] sm:$0xf]
        %v2217 = vld [vmem:[#allocation3 + $0x4] sm:$0xf]
        %2218 = vrot.lane.b32.xlu0 %v1982, 32
        %v2219 = vpop.permute.xlu0 %2218
        %v2221 = vunpack.c.l.b16 %v2216
        %v2222 = vpack.c.b16 %v2221, %v2221
        %2223 = vrot.lane.b32.xlu0 %v2222, 32
        %v2224 = vpop.permute.xlu0 %2223
        %v2226 = vsel %vm1447, %v2219, 0
        %v2229 = vsel %vm1447, %v2224, 0
        %2231 = vmatpush.bf16.xpose.msra.mxu0 0
        %2232 = vmatpush.bf16.xpose.msra.mxu0 0
        %2233 = vmatpush.bf16.xpose.msra.mxu0 0
        %2234 = vmatpush.bf16.xpose.msra.mxu0 0
        %2235 = vmatpush.bf16.xpose.msra.mxu0 0
        %2236 = vmatpush.bf16.xpose.msra.mxu0 0
        %2237 = vmatpush.bf16.xpose.msra.mxu0 0
        %2238 = vmatpush.bf16.xpose.msra.mxu0 %v2229
        %2239 = vmatmul.bf16.gmra.mxu0 %v2226
        %v2240 = vpop.f32.mrf.mxu0
        %v2241 = vadd.f32 0.0, %v2240
        %v2242 = vpop.f32.mrf.mxu0
        %2243 = vdwg.mxu0
        %v2244 = vsel %vm2004, %v2241, -inf
        %2245 = vmax.xlane.f32.xlu0 %v2244
        %v2246 = vpop.xlane.xlu0 %2245
        %v2247 = vsub.f32 %v2241, %v2246
        %v2248 = vmul.f32 %v2247, 1.442695
        %v2249 = vpow.pop %v2248
        %v2250 = vsel %vm2004, %v2249, 0.0
        %2251 = vadd.xlane.f32.xlu0 %v2250
        %v2252 = vpop.xlane.xlu0 %2251
        %v2253 = vrcp.pop %v2252
        %v2254 = vmul.f32 %v2252, %v2253
        %v2255 = vsub.f32 1.0, %v2254
        %v2256 = vmul.f32 %v2253, %v2255
        %v2257 = vadd.f32 %v2253, %v2256
        %vm2258 = vweird.f32 %v2252
        %vm2259 = vweird.f32 %v2253
        %vm2260 = vmor %vm2258, %vm2259
        %v2261 = vsel %vm2260, %v2253, %v2257
        %v2262 = vand.u32 2147483647, %v2252
        %vm2263 = vcmp.eq.f32.partialorder %v2262, 8.507059e+37
        %v2264 = vand.u32 %v2252, 2147483648
        %v2265 = vor.u32 1.1754944e-38, %v2264
        %v2266 = vsel %vm2263, %v2265, %v2261
        %v2267 = vmul.f32 %v2249, %v2266
        %v2268 = vpack.c.bf16 %v2267, %v2267
        %v2270 = vunpack.c.l.b16 %v2217
        %v2271 = vpack.c.b16 %v2270, %v2270
        %2272 = vrot.lane.b32.xlu0 %v2271, 32
        %v2273 = vpop.permute.xlu0 %2272
        %v2275 = vsel %vm2004, %v2268, 0
        %v2278 = vsel %vm2033, %v2273, 0
        %2280 = vmatpush.bf16.msra.mxu0 0
        %2281 = vmatpush.bf16.msra.mxu0 0
        %2282 = vmatpush.bf16.msra.mxu0 0
        %2283 = vmatpush.bf16.msra.mxu0 0
        %2284 = vmatpush.bf16.msra.mxu0 0
        %2285 = vmatpush.bf16.msra.mxu0 0
        %2286 = vmatpush.bf16.msra.mxu0 0
        %2287 = vmatpush.bf16.msra.mxu0 %v2278
        %2288 = vmatmul.bf16.gmra.mxu0 %v2275
        %v2289 = vpop.f32.mrf.mxu0
        %v2290 = vadd.f32 0.0, %v2289
        %v2291 = vpop.f32.mrf.mxu0
        %2292 = vdwg.mxu0
        %2294 = vrot.lane.b32.xlu0 %v2290, 96
        %v2295 = vpop.permute.xlu0 %2294
        %2297 = vst.msk [vmem:[#allocation4] sm:$0xff] %vm1776, %v2295
        %v2298 = vld [vmem:[#allocation4] sm:$0xff]
        %v2299 = vpack.c.bf16 %v2298, %v2298
        %v2300 = vld [vmem:[#allocation20] sm:$0xf]
        %v2301 = vld [vmem:[#allocation20 + $0x4] sm:$0xf]
        %v2302 = vld [vmem:[#allocation20 + $0x8] sm:$0xf]
        %v2303 = vld [vmem:[#allocation20 + $0xc] sm:$0xf]
        %v2304 = vld [vmem:[#allocation20 + $0x10] sm:$0xf]
        %v2305 = vld [vmem:[#allocation20 + $0x14] sm:$0xf]
        %v2306 = vld [vmem:[#allocation20 + $0x18] sm:$0xf]
        %v2307 = vld [vmem:[#allocation20 + $0x1c] sm:$0xf]
        %v2308 = vld [vmem:[#allocation20 + $0x20] sm:$0xf]
        %v2309 = vld [vmem:[#allocation20 + $0x24] sm:$0xf]
        %v2310 = vld [vmem:[#allocation20 + $0x28] sm:$0xf]
        %v2311 = vld [vmem:[#allocation20 + $0x2c] sm:$0xf]
        %v2312 = vld [vmem:[#allocation20 + $0x30] sm:$0xf]
        %v2313 = vld [vmem:[#allocation20 + $0x34] sm:$0xf]
        %v2314 = vld [vmem:[#allocation20 + $0x38] sm:$0xf]
        %v2315 = vld [vmem:[#allocation20 + $0x3c] sm:$0xf]
        %v2316 = vld [vmem:[%s14] sm:$0x1]
        %v2318 = vperm.slane %v2316, 0
        %v2336 = vunpack.c.l.b16 %v2300
        %v2337 = vunpack.c.l.b16 %v2301
        %v2338 = vunpack.c.l.b16 %v2302
        %v2339 = vunpack.c.l.b16 %v2303
        %v2340 = vunpack.c.l.b16 %v2304
        %v2341 = vunpack.c.l.b16 %v2305
        %v2342 = vunpack.c.l.b16 %v2306
        %v2343 = vunpack.c.l.b16 %v2307
        %v2344 = vunpack.c.l.b16 %v2308
        %v2345 = vunpack.c.l.b16 %v2309
        %v2346 = vunpack.c.l.b16 %v2310
        %v2347 = vunpack.c.l.b16 %v2311
        %v2348 = vunpack.c.l.b16 %v2312
        %v2349 = vunpack.c.l.b16 %v2313
        %v2350 = vunpack.c.l.b16 %v2314
        %v2351 = vunpack.c.l.b16 %v2315
        %v2352 = vpack.c.b16 %v2337, %v2336
        %v2353 = vpack.c.b16 %v2339, %v2338
        %v2354 = vpack.c.b16 %v2341, %v2340
        %v2355 = vpack.c.b16 %v2343, %v2342
        %v2356 = vpack.c.b16 %v2345, %v2344
        %v2357 = vpack.c.b16 %v2347, %v2346
        %v2358 = vpack.c.b16 %v2349, %v2348
        %v2359 = vpack.c.b16 %v2351, %v2350
        %2368 = vmatpush.bf16.msra.mxu0 %v2359
        %2369 = vmatpush.bf16.msra.mxu0 %v2358
        %2370 = vmatpush.bf16.msra.mxu0 %v2357
        %2371 = vmatpush.bf16.msra.mxu0 %v2356
        %2372 = vmatpush.bf16.msra.mxu0 %v2355
        %2373 = vmatpush.bf16.msra.mxu0 %v2354
        %2374 = vmatpush.bf16.msra.mxu0 %v2353
        %2375 = vmatpush.bf16.msra.mxu0 %v2352
        %2376 = vmatmul.bf16.gmra.mxu0 %v2299
        %v2377 = vpop.f32.mrf.mxu0
        %v2378 = vadd.f32 %v2318, %v2377
        %v2379 = vpop.f32.mrf.mxu0
        %2380 = vdwg.mxu0
        %v2381 = vadd.f32 %v1898, %v2378
        %v2382 = vld [vmem:[%s21] sm:$0x1]
        %v2383 = vld [vmem:[%s22] sm:$0x1]
        %2384 = vadd.xlane.f32.xlu0 %v2381
        %v2385 = vpop.xlane.xlu0 %2384
        %v2386 = vmul.f32 %v2385, %v1872
        %v2387 = vsub.f32 %v2381, %v2386
        %v2388 = vmul.f32 %v2387, %v2387
        %2389 = vadd.xlane.f32.xlu0 %v2388
        %v2390 = vpop.xlane.xlu0 %2389
        %v2391 = vmul.f32 %v2390, %v1872
        %v2392 = vadd.f32 %v2391, 1e-05
        %v2393 = vrsqrt.pop %v2392
        %v2394 = vmul.f32 %v2393, %v2392
        %v2395 = vmul.f32 %v2394, %v2393
        %v2396 = vmul.f32 0.5, %v2395
        %v2397 = vsub.f32 1.5, %v2396
        %v2398 = vmul.f32 %v2393, %v2397
        %vm2399 = vweird.f32 %v2392
        %vm2400 = vweird.f32 %v2393
        %vm2401 = vmor %vm2399, %vm2400
        %v2402 = vsel %vm2401, %v2393, %v2398
        %v2403 = vmul.f32 %v2387, %v2402
        %v2405 = vperm.slane %v2382, 0
        %v2407 = vmul.f32 %v2403, %v2405
        %v2409 = vperm.slane %v2383, 0
        %v2411 = vadd.f32 %v2407, %v2409
        %v2412 = vpack.c.bf16 %v2411, %v2411
        %v2413 = vld [vmem:[#allocation22] sm:$0xff]
        %v2414 = vld [vmem:[#allocation22 + $0x8] sm:$0xff]
        %v2415 = vld [vmem:[#allocation22 + $0x10] sm:$0xff]
        %v2416 = vld [vmem:[#allocation22 + $0x18] sm:$0xff]
        %v2417 = vld [vmem:[#allocation22 + $0x20] sm:$0xff]
        %v2418 = vld [vmem:[#allocation22 + $0x28] sm:$0xff]
        %v2419 = vld [vmem:[#allocation22 + $0x30] sm:$0xff]
        %v2420 = vld [vmem:[#allocation22 + $0x38] sm:$0xff]
        %v2421 = vld [vmem:[#allocation22 + $0x40] sm:$0xff]
        %v2422 = vld [vmem:[#allocation22 + $0x48] sm:$0xff]
        %v2423 = vld [vmem:[#allocation22 + $0x50] sm:$0xff]
        %v2424 = vld [vmem:[#allocation22 + $0x58] sm:$0xff]
        %v2425 = vld [vmem:[#allocation22 + $0x60] sm:$0xff]
        %v2426 = vld [vmem:[#allocation22 + $0x68] sm:$0xff]
        %v2427 = vld [vmem:[#allocation22 + $0x70] sm:$0xff]
        %v2428 = vld [vmem:[#allocation22 + $0x78] sm:$0xff]
        %v2429 = vld [vmem:[%s16] sm:$0x3]
        %v2431 = vperm.slane %v2429, 0
        %v2432 = vperm.slane %v2429, 1
        %v2451 = vunpack.c.l.b16 %v2413
        %v2452 = vunpack.c.h.b16 %v2413
        %v2453 = vunpack.c.l.b16 %v2414
        %v2454 = vunpack.c.h.b16 %v2414
        %v2455 = vunpack.c.l.b16 %v2415
        %v2456 = vunpack.c.h.b16 %v2415
        %v2457 = vunpack.c.l.b16 %v2416
        %v2458 = vunpack.c.h.b16 %v2416
        %v2459 = vunpack.c.l.b16 %v2417
        %v2460 = vunpack.c.h.b16 %v2417
        %v2461 = vunpack.c.l.b16 %v2418
        %v2462 = vunpack.c.h.b16 %v2418
        %v2463 = vunpack.c.l.b16 %v2419
        %v2464 = vunpack.c.h.b16 %v2419
        %v2465 = vunpack.c.l.b16 %v2420
        %v2466 = vunpack.c.h.b16 %v2420
        %v2467 = vunpack.c.l.b16 %v2421
        %v2468 = vunpack.c.h.b16 %v2421
        %v2469 = vunpack.c.l.b16 %v2422
        %v2470 = vunpack.c.h.b16 %v2422
        %v2471 = vunpack.c.l.b16 %v2423
        %v2472 = vunpack.c.h.b16 %v2423
        %v2473 = vunpack.c.l.b16 %v2424
        %v2474 = vunpack.c.h.b16 %v2424
        %v2475 = vunpack.c.l.b16 %v2425
        %v2476 = vunpack.c.h.b16 %v2425
        %v2477 = vunpack.c.l.b16 %v2426
        %v2478 = vunpack.c.h.b16 %v2426
        %v2479 = vunpack.c.l.b16 %v2427
        %v2480 = vunpack.c.h.b16 %v2427
        %v2481 = vunpack.c.l.b16 %v2428
        %v2482 = vunpack.c.h.b16 %v2428
        %v2483 = vpack.c.b16 %v2453, %v2451
        %v2484 = vpack.c.b16 %v2454, %v2452
        %v2485 = vpack.c.b16 %v2457, %v2455
        %v2486 = vpack.c.b16 %v2458, %v2456
        %v2487 = vpack.c.b16 %v2461, %v2459
        %v2488 = vpack.c.b16 %v2462, %v2460
        %v2489 = vpack.c.b16 %v2465, %v2463
        %v2490 = vpack.c.b16 %v2466, %v2464
        %v2491 = vpack.c.b16 %v2469, %v2467
        %v2492 = vpack.c.b16 %v2470, %v2468
        %v2493 = vpack.c.b16 %v2473, %v2471
        %v2494 = vpack.c.b16 %v2474, %v2472
        %v2495 = vpack.c.b16 %v2477, %v2475
        %v2496 = vpack.c.b16 %v2478, %v2476
        %v2497 = vpack.c.b16 %v2481, %v2479
        %v2498 = vpack.c.b16 %v2482, %v2480
        %2515 = vmatpush.bf16.msra.mxu0 %v2497
        %2516 = vmatpush.bf16.msra.mxu0 %v2495
        %2517 = vmatpush.bf16.msra.mxu0 %v2493
        %2518 = vmatpush.bf16.msra.mxu0 %v2491
        %2519 = vmatpush.bf16.msra.mxu0 %v2489
        %2520 = vmatpush.bf16.msra.mxu0 %v2487
        %2521 = vmatpush.bf16.msra.mxu0 %v2485
        %2522 = vmatpush.bf16.msra.mxu0 %v2483
        %2523 = vmatmul.bf16.gmra.mxu0 %v2412
        %v2524 = vpop.f32.mrf.mxu0
        %v2525 = vadd.f32 %v2431, %v2524
        %v2526 = vpop.f32.mrf.mxu0
        %2527 = vdwg.mxu0
        %2528 = vmatpush.bf16.msra.mxu0 %v2498
        %2529 = vmatpush.bf16.msra.mxu0 %v2496
        %2530 = vmatpush.bf16.msra.mxu0 %v2494
        %2531 = vmatpush.bf16.msra.mxu0 %v2492
        %2532 = vmatpush.bf16.msra.mxu0 %v2490
        %2533 = vmatpush.bf16.msra.mxu0 %v2488
        %2534 = vmatpush.bf16.msra.mxu0 %v2486
        %2535 = vmatpush.bf16.msra.mxu0 %v2484
        %2536 = vmatmul.bf16.gmra.mxu0 %v2412
        %v2537 = vpop.f32.mrf.mxu0
        %v2538 = vadd.f32 %v2432, %v2537
        %v2539 = vpop.f32.mrf.mxu0
        %2540 = vdwg.mxu0
        %v2541 = vmax.f32 %v2525, 0.0
        %v2542 = vmax.f32 %v2538, 0.0
        %v2543 = vpack.c.bf16 %v2541, %v2541
        %v2544 = vpack.c.bf16 %v2542, %v2542
        %v2545 = vld [vmem:[#allocation23] sm:$0xf]
        %v2546 = vld [vmem:[#allocation23 + $0x4] sm:$0xf]
        %v2547 = vld [vmem:[#allocation23 + $0x8] sm:$0xf]
        %v2548 = vld [vmem:[#allocation23 + $0xc] sm:$0xf]
        %v2549 = vld [vmem:[#allocation23 + $0x10] sm:$0xf]
        %v2550 = vld [vmem:[#allocation23 + $0x14] sm:$0xf]
        %v2551 = vld [vmem:[#allocation23 + $0x18] sm:$0xf]
        %v2552 = vld [vmem:[#allocation23 + $0x1c] sm:$0xf]
        %v2553 = vld [vmem:[#allocation23 + $0x20] sm:$0xf]
        %v2554 = vld [vmem:[#allocation23 + $0x24] sm:$0xf]
        %v2555 = vld [vmem:[#allocation23 + $0x28] sm:$0xf]
        %v2556 = vld [vmem:[#allocation23 + $0x2c] sm:$0xf]
        %v2557 = vld [vmem:[#allocation23 + $0x30] sm:$0xf]
        %v2558 = vld [vmem:[#allocation23 + $0x34] sm:$0xf]
        %v2559 = vld [vmem:[#allocation23 + $0x38] sm:$0xf]
        %v2560 = vld [vmem:[#allocation23 + $0x3c] sm:$0xf]
        %v2561 = vld [vmem:[#allocation23 + $0x40] sm:$0xf]
        %v2562 = vld [vmem:[#allocation23 + $0x44] sm:$0xf]
        %v2563 = vld [vmem:[#allocation23 + $0x48] sm:$0xf]
        %v2564 = vld [vmem:[#allocation23 + $0x4c] sm:$0xf]
        %v2565 = vld [vmem:[#allocation23 + $0x50] sm:$0xf]
        %v2566 = vld [vmem:[#allocation23 + $0x54] sm:$0xf]
        %v2567 = vld [vmem:[#allocation23 + $0x58] sm:$0xf]
        %v2568 = vld [vmem:[#allocation23 + $0x5c] sm:$0xf]
        %v2569 = vld [vmem:[#allocation23 + $0x60] sm:$0xf]
        %v2570 = vld [vmem:[#allocation23 + $0x64] sm:$0xf]
        %v2571 = vld [vmem:[#allocation23 + $0x68] sm:$0xf]
        %v2572 = vld [vmem:[#allocation23 + $0x6c] sm:$0xf]
        %v2573 = vld [vmem:[#allocation23 + $0x70] sm:$0xf]
        %v2574 = vld [vmem:[#allocation23 + $0x74] sm:$0xf]
        %v2575 = vld [vmem:[#allocation23 + $0x78] sm:$0xf]
        %v2576 = vld [vmem:[#allocation23 + $0x7c] sm:$0xf]
        %v2577 = vld [vmem:[%s18] sm:$0x1]
        %v2579 = vperm.slane %v2577, 0
        %v2613 = vunpack.c.l.b16 %v2545
        %v2614 = vunpack.c.l.b16 %v2546
        %v2615 = vunpack.c.l.b16 %v2547
        %v2616 = vunpack.c.l.b16 %v2548
        %v2617 = vunpack.c.l.b16 %v2549
        %v2618 = vunpack.c.l.b16 %v2550
        %v2619 = vunpack.c.l.b16 %v2551
        %v2620 = vunpack.c.l.b16 %v2552
        %v2621 = vunpack.c.l.b16 %v2553
        %v2622 = vunpack.c.l.b16 %v2554
        %v2623 = vunpack.c.l.b16 %v2555
        %v2624 = vunpack.c.l.b16 %v2556
        %v2625 = vunpack.c.l.b16 %v2557
        %v2626 = vunpack.c.l.b16 %v2558
        %v2627 = vunpack.c.l.b16 %v2559
        %v2628 = vunpack.c.l.b16 %v2560
        %v2629 = vunpack.c.l.b16 %v2561
        %v2630 = vunpack.c.l.b16 %v2562
        %v2631 = vunpack.c.l.b16 %v2563
        %v2632 = vunpack.c.l.b16 %v2564
        %v2633 = vunpack.c.l.b16 %v2565
        %v2634 = vunpack.c.l.b16 %v2566
        %v2635 = vunpack.c.l.b16 %v2567
        %v2636 = vunpack.c.l.b16 %v2568
        %v2637 = vunpack.c.l.b16 %v2569
        %v2638 = vunpack.c.l.b16 %v2570
        %v2639 = vunpack.c.l.b16 %v2571
        %v2640 = vunpack.c.l.b16 %v2572
        %v2641 = vunpack.c.l.b16 %v2573
        %v2642 = vunpack.c.l.b16 %v2574
        %v2643 = vunpack.c.l.b16 %v2575
        %v2644 = vunpack.c.l.b16 %v2576
        %v2645 = vpack.c.b16 %v2614, %v2613
        %v2646 = vpack.c.b16 %v2616, %v2615
        %v2647 = vpack.c.b16 %v2618, %v2617
        %v2648 = vpack.c.b16 %v2620, %v2619
        %v2649 = vpack.c.b16 %v2622, %v2621
        %v2650 = vpack.c.b16 %v2624, %v2623
        %v2651 = vpack.c.b16 %v2626, %v2625
        %v2652 = vpack.c.b16 %v2628, %v2627
        %v2653 = vpack.c.b16 %v2630, %v2629
        %v2654 = vpack.c.b16 %v2632, %v2631
        %v2655 = vpack.c.b16 %v2634, %v2633
        %v2656 = vpack.c.b16 %v2636, %v2635
        %v2657 = vpack.c.b16 %v2638, %v2637
        %v2658 = vpack.c.b16 %v2640, %v2639
        %v2659 = vpack.c.b16 %v2642, %v2641
        %v2660 = vpack.c.b16 %v2644, %v2643
        %2677 = vmatpush.bf16.msra.mxu0 %v2652
        %2678 = vmatpush.bf16.msra.mxu0 %v2651
        %2679 = vmatpush.bf16.msra.mxu0 %v2650
        %2680 = vmatpush.bf16.msra.mxu0 %v2649
        %2681 = vmatpush.bf16.msra.mxu0 %v2648
        %2682 = vmatpush.bf16.msra.mxu0 %v2647
        %2683 = vmatpush.bf16.msra.mxu0 %v2646
        %2684 = vmatpush.bf16.msra.mxu0 %v2645
        %2685 = vmatmul.bf16.gmra.mxu0 %v2543
        %v2686 = vpop.f32.mrf.mxu0
        %v2687 = vadd.f32 %v2579, %v2686
        %v2688 = vpop.f32.mrf.mxu0
        %2689 = vdwg.mxu0
        %2690 = vmatpush.bf16.msra.mxu0 %v2660
        %2691 = vmatpush.bf16.msra.mxu0 %v2659
        %2692 = vmatpush.bf16.msra.mxu0 %v2658
        %2693 = vmatpush.bf16.msra.mxu0 %v2657
        %2694 = vmatpush.bf16.msra.mxu0 %v2656
        %2695 = vmatpush.bf16.msra.mxu0 %v2655
        %2696 = vmatpush.bf16.msra.mxu0 %v2654
        %2697 = vmatpush.bf16.msra.mxu0 %v2653
        %2698 = vmatmul.bf16.gmra.mxu0 %v2544
        %v2699 = vpop.f32.mrf.mxu0
        %v2700 = vadd.f32 %v2687, %v2699
        %v2701 = vpop.f32.mrf.mxu0
        %2702 = vdwg.mxu0
        %v2703 = vadd.f32 %v2411, %v2700
        %v2704 = vld [vmem:[%s23] sm:$0x1]
        %v2705 = vld [vmem:[%s24] sm:$0x1]
        %2706 = vadd.xlane.f32.xlu0 %v2703
        %v2707 = vpop.xlane.xlu0 %2706
        %v2708 = vmul.f32 %v2707, %v1872
        %v2709 = vsub.f32 %v2703, %v2708
        %v2710 = vmul.f32 %v2709, %v2709
        %2711 = vadd.xlane.f32.xlu0 %v2710
        %v2712 = vpop.xlane.xlu0 %2711
        %v2713 = vmul.f32 %v2712, %v1872
        %v2714 = vadd.f32 %v2713, 1e-05
        %v2715 = vrsqrt.pop %v2714
        %v2716 = vmul.f32 %v2715, %v2714
        %v2717 = vmul.f32 %v2716, %v2715
        %v2718 = vmul.f32 0.5, %v2717
        %v2719 = vsub.f32 1.5, %v2718
        %v2720 = vmul.f32 %v2715, %v2719
        %vm2721 = vweird.f32 %v2714
        %vm2722 = vweird.f32 %v2715
        %vm2723 = vmor %vm2721, %vm2722
        %v2724 = vsel %vm2723, %v2715, %v2720
        %v2725 = vmul.f32 %v2709, %v2724
        %v2727 = vperm.slane %v2704, 0
        %v2729 = vmul.f32 %v2725, %v2727
        %v2731 = vperm.slane %v2705, 0
        %v2733 = vadd.f32 %v2729, %v2731
        %2734 = vst [vmem:[%s1078] sm:$0xff] %v2733
        %s2735 = sand.u32 %s658, 1
        %s2736 = scalar_lea.sflag [#allocation7], %s2735
        %s2737 = sand.u32 %s658, 1
        %s2738 = smul.addr %s2737, 8
        %s2739 = scalar_lea.vmem [#allocation25], %s2738
        // Predicated region
        $region181: #{tpu_custom_call.1} parent=127 // pred_check
          %p2740 = pneg %p668
        $region182: #{tpu_custom_call.1} parent=127 // pred_check_branch
          %2742 = sbr.rel (%p2740) target = $region184
        $region183: #{tpu_custom_call.1} parent=127 // pred_region
          %2744 = vsyncadd %s2736, 0
          %s2745 = smul.addr %s56, 2
          %s2746 = sadd.s32 %s57, %s2745
          %s2747 = smul.addr %s2746, 8
          %s2748 = scalar_lea.hbm %s27, %s2747
          %s2750 = sshll.u32 %s2739, 4
          %s2751 = int_to_ptr.vmem [resolvable:$true] %s2750
          %s2752 = sshll.u32 %s2748, 4
          %s2753 = int_to_ptr.hbm [resolvable:$true] %s2752
          %2755 = dma.vmem_to_hbm [thread:$0]  %s2751, 128, %s2753, %s2736
        $region184: #{tpu_custom_call.1} parent=127 // pred_fallthru
          _
      $region128: #{tpu_custom_call.1} parent=5 // pred_fallthru
        _
      %p2756 = scmp.le.s32.totalorder 2, %s47
      // Predicated region
      $region185: #{tpu_custom_call.1} parent=5 // pred_check
        %p2757 = pneg %p2756
      $region186: #{tpu_custom_call.1} parent=5 // pred_check_branch
        %2759 = sbr.rel (%p2757) target = $region188
      $region187: #{tpu_custom_call.1} parent=5 // pred_region
        %s2760 = ssub.s32 %s47, 2
        // Predicated region
        $region189: #{tpu_custom_call.1} parent=187 // pred_check
          %p2761 = pneg %p674
        $region190: #{tpu_custom_call.1} parent=187 // pred_check_branch
          %2763 = sbr.rel (%p2761) target = $region192
        $region191: #{tpu_custom_call.1} parent=187 // pred_region
          %s2764 = sand.u32 %s659, 1
          %s2765 = scalar_lea.sflag [#allocation7], %s2764
          %s2766 = sand.u32 %s659, 1
          %s2767 = smul.addr %s2766, 8
          %s2768 = scalar_lea.vmem [#allocation25], %s2767
          %2770 = dma.done %s2765, 128
        $region192: #{tpu_custom_call.1} parent=187 // pred_fallthru
          _
      $region188: #{tpu_custom_call.1} parent=5 // pred_fallthru
        _
    $region6: #{tpu_custom_call.1} parent=1 // loop_footer
      %s51 = sadd.s32 1, %s47
    $region7: #{tpu_custom_call.1} parent=1 // loop_footer_branch
      %46 = sbr.rel target = $region3
    $region8: #{tpu_custom_call.1} parent=1 // loop_exit
      _
    %2771 = vsyncpa [#allocation6], 1
    %s2772 = scalar_lea.sflag [#allocation6], 1
    %2773 = vsyncpa %s2772, 1
    %2774 = vsyncpa [#allocation9], 1
    %s2775 = scalar_lea.sflag [#allocation9], 1
    %2776 = vsyncpa %s2775, 1
    %2777 = vsyncpa [#allocation12], 1
    %2778 = vsyncpa [#allocation15], 1
    %2779 = vsyncpa [#allocation18], 1
    %2780 = vsyncpa [#allocation21], 1
    %2781 = vsyncpa [#allocation24], 1
    %2782 = vsyncpa [#allocation7], 1
    %s2783 = scalar_lea.sflag [#allocation7], 1
    %2784 = vsyncpa %s2783, 1

</llo_original>
